<compile_context>
chip_gen: v6e
topology: v6e:2x2x1
jax: 0.10.0
libtpu: 0.0.40
codegen_flags: <defaults>
</compile_context>

<pallas_src>
import jax
import jax.numpy as jnp
from jax.experimental import pallas as pl
from jax.experimental.pallas import tpu as pltpu


# ----------------------------- Pallas kernels ------------------------------ #

def _conv1_pool_kernel(a_ref, w_ref, b_ref, alpha_ref, o_ref):
    """One sample: conv1 im2col GEMM + bias + PReLU + 2x2/s2 max-pool.

    a_ref : (576, 32) bf16  im2col rows ordered (pool-tap[4], io[12], jo[12]);
                            K padded 25 -> 32 with zeros.
    w_ref : (32, 32)  bf16  conv1 weight (K rows 25..31 zero).
    b_ref : (1, 32)   f32   conv1 bias.
    alpha_ref : (4,)  f32   PReLU slopes in SMEM ([0] used here).
    o_ref : (144, 32) bf16  pooled output, rows (io, jo).
    """
    h = jnp.dot(a_ref[...], w_ref[...], preferred_element_type=jnp.float32)
    h = h + b_ref[...]
    h = jnp.where(h >= 0.0, h, alpha_ref[0] * h)
    # The four 2x2 pool-window taps are contiguous 144-row slabs -> max tree.
    p = jnp.maximum(jnp.maximum(h[0:144], h[144:288]),
                    jnp.maximum(h[288:432], h[432:576]))
    o_ref[...] = p.astype(o_ref.dtype)


def _conv2_fc_kernel(a_ref, w2_ref, b2_ref, wf1_ref, bf1_ref, wf2_ref, bf2_ref,
                     wf3_ref, bf3_ref, alpha_ref, o_ref):
    """One sample: conv2 GEMM + PReLU + pool2 + flatten + fc head + L2 norm.

    a_ref : (64, 800) bf16  conv2 im2col, rows (pool-tap[4], io[4], jo[4]),
                            cols (di, dj, cin).
    w2_ref: (800, 64) bf16 ; b2_ref: (1, 64) f32.
    wf1_ref: (1024, 256) bf16, rows permuted to (spatial q, channel c) so the
             PyTorch NCHW flatten order is absorbed into the weight.
    wf3_ref: (256, 128) bf16 (output padded 2 -> 128 with zeros); bf3 padded too.
    o_ref : (8, 128) f32, every row holds the normalized embedding (padded).
    """
    h = jnp.dot(a_ref[...], w2_ref[...], preferred_element_type=jnp.float32)
    h = h + b2_ref[...]
    h = jnp.where(h >= 0.0, h, alpha_ref[1] * h)
    # pool2: the four taps are contiguous 16-row slabs.
    p = jnp.maximum(jnp.maximum(h[0:16], h[16:32]),
                    jnp.maximum(h[32:48], h[48:64]))
    p = p.astype(jnp.bfloat16)                      # (16, 64): rows=q, cols=channel
    # fc1: flatten folded into the (q, c)-permuted weight -> 16 row-block dots,
    # no in-kernel reshape/transpose of the pooled feature map.
    acc = bf1_ref[...]                              # (1, 256) f32
    for q in range(16):
        acc = acc + jnp.dot(p[q:q + 1, :], wf1_ref[64 * q:64 * (q + 1), :],
                            preferred_element_type=jnp.float32)
    h1 = jnp.where(acc >= 0.0, acc, alpha_ref[2] * acc)
    h2 = jnp.dot(h1.astype(jnp.bfloat16), wf2_ref[...],
                 preferred_element_type=jnp.float32) + bf2_ref[...]
    h2 = jnp.where(h2 >= 0.0, h2, alpha_ref[3] * h2)
    y = jnp.dot(h2.astype(jnp.bfloat16), wf3_ref[...],
                preferred_element_type=jnp.float32) + bf3_ref[...]   # (1, 128)
    # L2 normalize in f32; padded cols are exactly zero so they don't change
    # the norm.  eps matches F.normalize and avoids Inf on an all-zero row.
    inv = jax.lax.rsqrt(jnp.sum(y * y, axis=1, keepdims=True) + 1e-12)
    o_ref[...] = jnp.broadcast_to(y * inv, o_ref.shape).astype(o_ref.dtype)


# ------------------------------- JAX glue ----------------------------------- #

def _conv1_im2col(x):
    """x: (N,1,28,28) f32 -> (N*576, 32) bf16, rows (n, tap, io, jo), K 25->32."""
    n = x.shape[0]
    xs = x[:, 0]                                                  # (N, 28, 28)
    pats = jnp.stack([xs[:, di:di + 24, dj:dj + 24]
                      for di in range(5) for dj in range(5)], axis=-1)  # (N,24,24,25)
    pats = pats.reshape(n, 12, 2, 12, 2, 25)                      # (n, io, wi, jo, wj, t)
    a1 = pats.transpose(0, 2, 4, 1, 3, 5).reshape(n * 576, 25)    # rows (n, tap, io, jo)
    a1 = jnp.pad(a1, ((0, 0), (0, 7)))                            # K: 25 -> 32
    return a1.astype(jnp.bfloat16)


def _conv2_im2col(p1, n):
    """p1: (N*144, 32) bf16 rows (n, a, b) -> (N*64, 800) bf16, rows
    (n, tap, io, jo), cols (di, dj, cin)."""
    p1m = p1.reshape(n, 12, 12, 32)
    cols = jnp.concatenate([p1m[:, di:di + 8, dj:dj + 8, :]
                            for di in range(5) for dj in range(5)],
                           axis=-1)                               # (N, 8, 8, 800)
    cols = cols.reshape(n, 4, 2, 4, 2, 800)                       # (n, io, wi, jo, wj, col)
    return cols.transpose(0, 2, 4, 1, 3, 5).reshape(n * 64, 800)


def embedding_net_l2(x, params):
    n = x.shape[0]
    alphas = params["alphas"]
    par = pltpu.CompilerParams(dimension_semantics=("parallel",))

    # ---- kernel 1: conv1 + PReLU + pool1, one sample per grid step -------- #
    a1 = _conv1_im2col(x)
    p1 = pl.pallas_call(
        _conv1_pool_kernel,
        out_shape=jax.ShapeDtypeStruct((n * 144, 32), jnp.bfloat16),
        grid=(n,),
        in_specs=[
            pl.BlockSpec((576, 32), lambda i: (i, 0)),
            pl.BlockSpec((32, 32), lambda i: (0, 0)),
            pl.BlockSpec((1, 32), lambda i: (0, 0)),
            pl.BlockSpec(memory_space=pltpu.MemorySpace.SMEM),
        ],
        out_specs=pl.BlockSpec((144, 32), lambda i: (i, 0)),
        compiler_params=par,
    )(a1, params["conv1_w"], params["conv1_b"], alphas)

    # ---- kernel 2: conv2 + PReLU + pool2 + flatten + fc head + L2 --------- #
    a2 = _conv2_im2col(p1, n)
    out = pl.pallas_call(
        _conv2_fc_kernel,
        out_shape=jax.ShapeDtypeStruct((n * 8, 128), jnp.float32),
        grid=(n,),
        in_specs=[
            pl.BlockSpec((64, 800), lambda i: (i, 0)),
            pl.BlockSpec((800, 64), lambda i: (0, 0)),
            pl.BlockSpec((1, 64), lambda i: (0, 0)),
            pl.BlockSpec((1024, 256), lambda i: (0, 0)),
            pl.BlockSpec((1, 256), lambda i: (0, 0)),
            pl.BlockSpec((256, 256), lambda i: (0, 0)),
            pl.BlockSpec((1, 256), lambda i: (0, 0)),
            pl.BlockSpec((256, 128), lambda i: (0, 0)),
            pl.BlockSpec((1, 128), lambda i: (0, 0)),
            pl.BlockSpec(memory_space=pltpu.MemorySpace.SMEM),
        ],
        out_specs=pl.BlockSpec((8, 128), lambda i: (i, 0)),
        compiler_params=par,
    )(a2, params["conv2_w"], params["conv2_b"],
      params["fc1_w"], params["fc1_b"], params["fc2_w"], params["fc2_b"],
      params["fc3_w"], params["fc3_b"], alphas)

    return out.reshape(n, 8, 128)[:, 0, :2]                       # (N, 2) L2-normalized


# ---------------------------- parameter setup ------------------------------- #

def make_torch_like_params(key):
    """Parameters in PyTorch layouts (conv: (O,C,kh,kw); linear: (out,in))."""
    ks = jax.random.split(key, 10)

    def u(k, shape, fan_in):
        bound = 1.0 / jnp.sqrt(float(fan_in))
        return jax.random.uniform(k, shape, jnp.float32, -bound, bound)

    return {
        "conv1_w": u(ks[0], (32, 1, 5, 5), 25),
        "conv1_b": u(ks[1], (32,), 25),
        "conv2_w": u(ks[2], (64, 32, 5, 5), 800),
        "conv2_b": u(ks[3], (64,), 800),
        "fc1_w": u(ks[4], (256, 1024), 1024),
        "fc1_b": u(ks[5], (256,), 1024),
        "fc2_w": u(ks[6], (256, 256), 256),
        "fc2_b": u(ks[7], (256,), 256),
        "fc3_w": u(ks[8], (2, 256), 256),
        "fc3_b": u(ks[9], (2,), 256),
        # nn.PReLU() single-parameter default init
        "prelu1": jnp.float32(0.25),
        "prelu2": jnp.float32(0.25),
        "prelu3": jnp.float32(0.25),
        "prelu4": jnp.float32(0.25),
    }


def prepare_params(tp):
    """One-time transform to kernel-friendly layouts (pads/permutes/casts)."""
    # conv1: (32,1,5,5) -> (32, 32) bf16; row = di*5+dj, rows 25..31 zero.
    w1 = jnp.pad(tp["conv1_w"].reshape(32, 25).T, ((0, 7), (0, 0)))
    # conv2: (64,32,5,5) -> (800, 64) bf16; row = (di*5+dj)*32 + cin.
    w2 = tp["conv2_w"].transpose(2, 3, 1, 0).reshape(800, 64)
    # fc1: (256,1024) torch input order (c, io, jo) -> rows (q=io*4+jo, c).
    q = jnp.arange(16)
    c = jnp.arange(64)
    perm = (c[None, :] * 16 + q[:, None]).reshape(-1)     # new row q*64+c <- old c*16+q
    wf1 = tp["fc1_w"].T[perm, :]
    wf2 = tp["fc2_w"].T
    # fc3: (2,256) -> (256, 128) bf16 with zero-padded output columns.
    wf3 = jnp.pad(tp["fc3_w"].T, ((0, 0), (0, 126)))
    bf3 = jnp.pad(tp["fc3_b"].reshape(1, 2), ((0, 0), (0, 126)))
    return {
        "conv1_w": w1.astype(jnp.bfloat16),
        "conv1_b": tp["conv1_b"].reshape(1, 32),
        "conv2_w": w2.astype(jnp.bfloat16),
        "conv2_b": tp["conv2_b"].reshape(1, 64),
        "fc1_w": wf1.astype(jnp.bfloat16),
        "fc1_b": tp["fc1_b"].reshape(1, 256),
        "fc2_w": wf2.astype(jnp.bfloat16),
        "fc2_b": tp["fc2_b"].reshape(1, 256),
        "fc3_w": wf3.astype(jnp.bfloat16),
        "fc3_b": bf3,
        "alphas": jnp.stack([tp["prelu1"], tp["prelu2"],
                             tp["prelu3"], tp["prelu4"]]).astype(jnp.float32),
    }


# ---------------------------------- main ------------------------------------ #

if __name__ == "__main__":
    root = jax.random.PRNGKey(0)
    pkey, xkey = jax.random.split(root)
    params = prepare_params(make_torch_like_params(pkey))

    # fc head expects 64*4*4 features => the module implies 1x28x28 input.
    x = jax.random.normal(xkey, (2, 1, 28, 28), jnp.float32)

    fwd = jax.jit(embedding_net_l2)
    emb = jax.block_until_ready(fwd(x, params))

    assert emb.shape == (2, 2), emb.shape
    assert bool(jnp.all(jnp.isfinite(emb)))
    norms = jnp.sqrt(jnp.sum(emb * emb, axis=1))
    assert bool(jnp.all(jnp.abs(norms - 1.0) < 1e-3)), norms
    print("KERNEL_OK")
</pallas_src>

<mosaic_0001>
module attributes {stable_mosaic.version = 11 : i64} {
  func.func @_conv1_pool_kernel(%arg0: i32, %arg1: memref<576x32xbf16, #tpu.memory_space<vmem>>, %arg2: memref<32x32xbf16, #tpu.memory_space<vmem>>, %arg3: memref<1x32xf32, #tpu.memory_space<vmem>>, %arg4: memref<4xf32, #tpu.memory_space<smem>>, %arg5: memref<144x32xbf16, #tpu.memory_space<vmem>>) attributes {dimension_semantics = [#tpu.dimension_semantics<parallel>], iteration_bounds = array<i64: 2>, scalar_prefetch = 0 : i64, scratch_operands = 0 : i64, tpu.core_type = #tpu.core_type<tc>, window_params = [{transform_indices = @transform_0, window_bounds = array<i64: 576, 32>}, {pipeline_mode = #tpu.pipeline_mode<synchronous>, transform_indices = @transform_1, window_bounds = array<i64: 32, 32>}, {pipeline_mode = #tpu.pipeline_mode<synchronous>, transform_indices = @transform_2, window_bounds = array<i64: 1, 32>}, {transform_indices = @transform_3, window_bounds = array<i64: 4>}, {transform_indices = @transform_4, window_bounds = array<i64: 144, 32>}]} {
    %c0 = arith.constant 0 : index
    %c0_0 = arith.constant 0 : index
    %0 = vector.load %arg1[%c0, %c0_0] : memref<576x32xbf16, #tpu.memory_space<vmem>>, vector<576x32xbf16>
    %c0_1 = arith.constant 0 : index
    %c0_2 = arith.constant 0 : index
    %1 = vector.load %arg2[%c0_1, %c0_2] : memref<32x32xbf16, #tpu.memory_space<vmem>>, vector<32x32xbf16>
    %cst = arith.constant dense<0.000000e+00> : vector<576x32xf32>
    %2 = tpu.matmul %0, %1, %cst {dimension_numbers = #tpu.dot_dimension_numbers<[1], [0], [0], [1], [0, 0, 1, 1], [], []>} : vector<576x32xbf16>, vector<32x32xbf16>, vector<576x32xf32> -> vector<576x32xf32>
    %c0_3 = arith.constant 0 : index
    %c0_4 = arith.constant 0 : index
    %3 = vector.load %arg3[%c0_3, %c0_4] : memref<1x32xf32, #tpu.memory_space<vmem>>, vector<1x32xf32>
    %4 = vector.broadcast %3 : vector<1x32xf32> to vector<576x32xf32>
    %5 = arith.addf %2, %4 : vector<576x32xf32>
    %cst_5 = arith.constant 0.000000e+00 : f32
    %6 = vector.broadcast %cst_5 : f32 to vector<576x32xf32>
    %7 = arith.cmpf oge, %5, %6 : vector<576x32xf32>
    %c0_6 = arith.constant 0 : index
    %8 = memref.load %arg4[%c0_6] : memref<4xf32, #tpu.memory_space<smem>>
    %9 = vector.broadcast %8 : f32 to vector<576x32xf32>
    %10 = arith.mulf %9, %5 : vector<576x32xf32>
    %11 = arith.select %7, %5, %10 : vector<576x32xi1>, vector<576x32xf32>
    %12 = vector.extract_strided_slice %11 {offsets = [0, 0], sizes = [144, 32], strides = [1, 1]} : vector<576x32xf32> to vector<144x32xf32>
    %13 = vector.extract_strided_slice %11 {offsets = [144, 0], sizes = [144, 32], strides = [1, 1]} : vector<576x32xf32> to vector<144x32xf32>
    %14 = arith.maximumf %12, %13 : vector<144x32xf32>
    %15 = vector.extract_strided_slice %11 {offsets = [288, 0], sizes = [144, 32], strides = [1, 1]} : vector<576x32xf32> to vector<144x32xf32>
    %16 = vector.extract_strided_slice %11 {offsets = [432, 0], sizes = [144, 32], strides = [1, 1]} : vector<576x32xf32> to vector<144x32xf32>
    %17 = arith.maximumf %15, %16 : vector<144x32xf32>
    %18 = arith.maximumf %14, %17 : vector<144x32xf32>
    %19 = arith.truncf %18 : vector<144x32xf32> to vector<144x32xbf16>
    %c0_7 = arith.constant 0 : index
    %c0_8 = arith.constant 0 : index
    %20 = vector.load %arg5[%c0_7, %c0_8] : memref<144x32xbf16, #tpu.memory_space<vmem>>, vector<144x32xbf16>
    tpu.vector_store %arg5[%c0_7, %c0_8], %19 {strides = array<i32>} : memref<144x32xbf16, #tpu.memory_space<vmem>>, vector<144x32xbf16>,
    return
  }
  func.func @transform_0(%arg0: i32) -> (i32, i32) {
    %c0_i32 = arith.constant 0 : i32
    %c0_i32_0 = arith.constant 0 : i32
    return %arg0, %c0_i32 : i32, i32
  }
  func.func @transform_1(%arg0: i32) -> (i32, i32) {
    %c0_i32 = arith.constant 0 : i32
    %c0_i32_0 = arith.constant 0 : i32
    %c0_i32_1 = arith.constant 0 : i32
    return %c0_i32, %c0_i32_0 : i32, i32
  }
  func.func @transform_2(%arg0: i32) -> (i32, i32) {
    %c0_i32 = arith.constant 0 : i32
    %c0_i32_0 = arith.constant 0 : i32
    %c0_i32_1 = arith.constant 0 : i32
    return %c0_i32, %c0_i32_0 : i32, i32
  }
  func.func @transform_3(%arg0: i32) -> i32 {
    %c0_i32 = arith.constant 0 : i32
    %c0_i32_0 = arith.constant 0 : i32
    return %c0_i32 : i32
  }
  func.func @transform_4(%arg0: i32) -> (i32, i32) {
    %c0_i32 = arith.constant 0 : i32
    %c0_i32_0 = arith.constant 0 : i32
    return %arg0, %c0_i32 : i32, i32
  }
}

module attributes {stable_mosaic.version = 11 : i64} {
  func.func @_conv2_fc_kernel(%arg0: i32, %arg1: memref<64x800xbf16, #tpu.memory_space<vmem>>, %arg2: memref<800x64xbf16, #tpu.memory_space<vmem>>, %arg3: memref<1x64xf32, #tpu.memory_space<vmem>>, %arg4: memref<1024x256xbf16, #tpu.memory_space<vmem>>, %arg5: memref<1x256xf32, #tpu.memory_space<vmem>>, %arg6: memref<256x256xbf16, #tpu.memory_space<vmem>>, %arg7: memref<1x256xf32, #tpu.memory_space<vmem>>, %arg8: memref<256x128xbf16, #tpu.memory_space<vmem>>, %arg9: memref<1x128xf32, #tpu.memory_space<vmem>>, %arg10: memref<4xf32, #tpu.memory_space<smem>>, %arg11: memref<8x128xf32, #tpu.memory_space<vmem>>) attributes {dimension_semantics = [#tpu.dimension_semantics<parallel>], iteration_bounds = array<i64: 2>, scalar_prefetch = 0 : i64, scratch_operands = 0 : i64, tpu.core_type = #tpu.core_type<tc>, window_params = [{transform_indices = @transform_0, window_bounds = array<i64: 64, 800>}, {pipeline_mode = #tpu.pipeline_mode<synchronous>, transform_indices = @transform_1, window_bounds = array<i64: 800, 64>}, {pipeline_mode = #tpu.pipeline_mode<synchronous>, transform_indices = @transform_2, window_bounds = array<i64: 1, 64>}, {pipeline_mode = #tpu.pipeline_mode<synchronous>, transform_indices = @transform_3, window_bounds = array<i64: 1024, 256>}, {pipeline_mode = #tpu.pipeline_mode<synchronous>, transform_indices = @transform_4, window_bounds = array<i64: 1, 256>}, {pipeline_mode = #tpu.pipeline_mode<synchronous>, transform_indices = @transform_5, window_bounds = array<i64: 256, 256>}, {pipeline_mode = #tpu.pipeline_mode<synchronous>, transform_indices = @transform_6, window_bounds = array<i64: 1, 256>}, {pipeline_mode = #tpu.pipeline_mode<synchronous>, transform_indices = @transform_7, window_bounds = array<i64: 256, 128>}, {pipeline_mode = #tpu.pipeline_mode<synchronous>, transform_indices = @transform_8, window_bounds = array<i64: 1, 128>}, {transform_indices = @transform_9, window_bounds = array<i64: 4>}, {transform_indices = @transform_10, window_bounds = array<i64: 8, 128>}]} {
    %c0 = arith.constant 0 : index
    %c0_0 = arith.constant 0 : index
    %0 = vector.load %arg1[%c0, %c0_0] : memref<64x800xbf16, #tpu.memory_space<vmem>>, vector<64x800xbf16>
    %c0_1 = arith.constant 0 : index
    %c0_2 = arith.constant 0 : index
    %1 = vector.load %arg2[%c0_1, %c0_2] : memref<800x64xbf16, #tpu.memory_space<vmem>>, vector<800x64xbf16>
    %cst = arith.constant dense<0.000000e+00> : vector<64x64xf32>
    %2 = tpu.matmul %0, %1, %cst {dimension_numbers = #tpu.dot_dimension_numbers<[1], [0], [0], [1], [0, 0, 1, 1], [], []>} : vector<64x800xbf16>, vector<800x64xbf16>, vector<64x64xf32> -> vector<64x64xf32>
    %c0_3 = arith.constant 0 : index
    %c0_4 = arith.constant 0 : index
    %3 = vector.load %arg3[%c0_3, %c0_4] : memref<1x64xf32, #tpu.memory_space<vmem>>, vector<1x64xf32>
    %4 = vector.broadcast %3 : vector<1x64xf32> to vector<64x64xf32>
    %5 = arith.addf %2, %4 : vector<64x64xf32>
    %cst_5 = arith.constant 0.000000e+00 : f32
    %6 = vector.broadcast %cst_5 : f32 to vector<64x64xf32>
    %7 = arith.cmpf oge, %5, %6 : vector<64x64xf32>
    %c1 = arith.constant 1 : index
    %8 = memref.load %arg10[%c1] : memref<4xf32, #tpu.memory_space<smem>>
    %9 = vector.broadcast %8 : f32 to vector<64x64xf32>
    %10 = arith.mulf %9, %5 : vector<64x64xf32>
    %11 = arith.select %7, %5, %10 : vector<64x64xi1>, vector<64x64xf32>
    %12 = vector.extract_strided_slice %11 {offsets = [0, 0], sizes = [16, 64], strides = [1, 1]} : vector<64x64xf32> to vector<16x64xf32>
    %13 = vector.extract_strided_slice %11 {offsets = [16, 0], sizes = [16, 64], strides = [1, 1]} : vector<64x64xf32> to vector<16x64xf32>
    %14 = arith.maximumf %12, %13 : vector<16x64xf32>
    %15 = vector.extract_strided_slice %11 {offsets = [32, 0], sizes = [16, 64], strides = [1, 1]} : vector<64x64xf32> to vector<16x64xf32>
    %16 = vector.extract_strided_slice %11 {offsets = [48, 0], sizes = [16, 64], strides = [1, 1]} : vector<64x64xf32> to vector<16x64xf32>
    %17 = arith.maximumf %15, %16 : vector<16x64xf32>
    %18 = arith.maximumf %14, %17 : vector<16x64xf32>
    %19 = arith.truncf %18 : vector<16x64xf32> to vector<16x64xbf16>
    %c0_6 = arith.constant 0 : index
    %c0_7 = arith.constant 0 : index
    %20 = vector.load %arg5[%c0_6, %c0_7] : memref<1x256xf32, #tpu.memory_space<vmem>>, vector<1x256xf32>
    %21 = vector.extract_strided_slice %19 {offsets = [0, 0], sizes = [1, 64], strides = [1, 1]} : vector<16x64xbf16> to vector<1x64xbf16>
    %c0_8 = arith.constant 0 : index
    %c0_9 = arith.constant 0 : index
    %22 = vector.load %arg4[%c0_8, %c0_9] : memref<1024x256xbf16, #tpu.memory_space<vmem>>, vector<64x256xbf16>
    %cst_10 = arith.constant dense<0.000000e+00> : vector<1x256xf32>
    %23 = tpu.matmul %21, %22, %cst_10 {dimension_numbers = #tpu.dot_dimension_numbers<[1], [0], [0], [1], [0, 0, 1, 1], [], []>} : vector<1x64xbf16>, vector<64x256xbf16>, vector<1x256xf32> -> vector<1x256xf32>
    %24 = arith.addf %20, %23 : vector<1x256xf32>
    %25 = vector.extract_strided_slice %19 {offsets = [1, 0], sizes = [1, 64], strides = [1, 1]} : vector<16x64xbf16> to vector<1x64xbf16>
    %c64 = arith.constant 64 : index
    %c0_11 = arith.constant 0 : index
    %26 = vector.load %arg4[%c64, %c0_11] : memref<1024x256xbf16, #tpu.memory_space<vmem>>, vector<64x256xbf16>
    %cst_12 = arith.constant dense<0.000000e+00> : vector<1x256xf32>
    %27 = tpu.matmul %25, %26, %cst_12 {dimension_numbers = #tpu.dot_dimension_numbers<[1], [0], [0], [1], [0, 0, 1, 1], [], []>} : vector<1x64xbf16>, vector<64x256xbf16>, vector<1x256xf32> -> vector<1x256xf32>
    %28 = arith.addf %24, %27 : vector<1x256xf32>
    %29 = vector.extract_strided_slice %19 {offsets = [2, 0], sizes = [1, 64], strides = [1, 1]} : vector<16x64xbf16> to vector<1x64xbf16>
    %c128 = arith.constant 128 : index
    %c0_13 = arith.constant 0 : index
    %30 = vector.load %arg4[%c128, %c0_13] : memref<1024x256xbf16, #tpu.memory_space<vmem>>, vector<64x256xbf16>
    %cst_14 = arith.constant dense<0.000000e+00> : vector<1x256xf32>
    %31 = tpu.matmul %29, %30, %cst_14 {dimension_numbers = #tpu.dot_dimension_numbers<[1], [0], [0], [1], [0, 0, 1, 1], [], []>} : vector<1x64xbf16>, vector<64x256xbf16>, vector<1x256xf32> -> vector<1x256xf32>
    %32 = arith.addf %28, %31 : vector<1x256xf32>
    %33 = vector.extract_strided_slice %19 {offsets = [3, 0], sizes = [1, 64], strides = [1, 1]} : vector<16x64xbf16> to vector<1x64xbf16>
    %c192 = arith.constant 192 : index
    %c0_15 = arith.constant 0 : index
    %34 = vector.load %arg4[%c192, %c0_15] : memref<1024x256xbf16, #tpu.memory_space<vmem>>, vector<64x256xbf16>
    %cst_16 = arith.constant dense<0.000000e+00> : vector<1x256xf32>
    %35 = tpu.matmul %33, %34, %cst_16 {dimension_numbers = #tpu.dot_dimension_numbers<[1], [0], [0], [1], [0, 0, 1, 1], [], []>} : vector<1x64xbf16>, vector<64x256xbf16>, vector<1x256xf32> -> vector<1x256xf32>
    %36 = arith.addf %32, %35 : vector<1x256xf32>
    %37 = vector.extract_strided_slice %19 {offsets = [4, 0], sizes = [1, 64], strides = [1, 1]} : vector<16x64xbf16> to vector<1x64xbf16>
    %c256 = arith.constant 256 : index
    %c0_17 = arith.constant 0 : index
    %38 = vector.load %arg4[%c256, %c0_17] : memref<1024x256xbf16, #tpu.memory_space<vmem>>, vector<64x256xbf16>
    %cst_18 = arith.constant dense<0.000000e+00> : vector<1x256xf32>
    %39 = tpu.matmul %37, %38, %cst_18 {dimension_numbers = #tpu.dot_dimension_numbers<[1], [0], [0], [1], [0, 0, 1, 1], [], []>} : vector<1x64xbf16>, vector<64x256xbf16>, vector<1x256xf32> -> vector<1x256xf32>
    %40 = arith.addf %36, %39 : vector<1x256xf32>
    %41 = vector.extract_strided_slice %19 {offsets = [5, 0], sizes = [1, 64], strides = [1, 1]} : vector<16x64xbf16> to vector<1x64xbf16>
    %c320 = arith.constant 320 : index
    %c0_19 = arith.constant 0 : index
    %42 = vector.load %arg4[%c320, %c0_19] : memref<1024x256xbf16, #tpu.memory_space<vmem>>, vector<64x256xbf16>
    %cst_20 = arith.constant dense<0.000000e+00> : vector<1x256xf32>
    %43 = tpu.matmul %41, %42, %cst_20 {dimension_numbers = #tpu.dot_dimension_numbers<[1], [0], [0], [1], [0, 0, 1, 1], [], []>} : vector<1x64xbf16>, vector<64x256xbf16>, vector<1x256xf32> -> vector<1x256xf32>
    %44 = arith.addf %40, %43 : vector<1x256xf32>
    %45 = vector.extract_strided_slice %19 {offsets = [6, 0], sizes = [1, 64], strides = [1, 1]} : vector<16x64xbf16> to vector<1x64xbf16>
    %c384 = arith.constant 384 : index
    %c0_21 = arith.constant 0 : index
    %46 = vector.load %arg4[%c384, %c0_21] : memref<1024x256xbf16, #tpu.memory_space<vmem>>, vector<64x256xbf16>
    %cst_22 = arith.constant dense<0.000000e+00> : vector<1x256xf32>
    %47 = tpu.matmul %45, %46, %cst_22 {dimension_numbers = #tpu.dot_dimension_numbers<[1], [0], [0], [1], [0, 0, 1, 1], [], []>} : vector<1x64xbf16>, vector<64x256xbf16>, vector<1x256xf32> -> vector<1x256xf32>
    %48 = arith.addf %44, %47 : vector<1x256xf32>
    %49 = vector.extract_strided_slice %19 {offsets = [7, 0], sizes = [1, 64], strides = [1, 1]} : vector<16x64xbf16> to vector<1x64xbf16>
    %c448 = arith.constant 448 : index
    %c0_23 = arith.constant 0 : index
    %50 = vector.load %arg4[%c448, %c0_23] : memref<1024x256xbf16, #tpu.memory_space<vmem>>, vector<64x256xbf16>
    %cst_24 = arith.constant dense<0.000000e+00> : vector<1x256xf32>
    %51 = tpu.matmul %49, %50, %cst_24 {dimension_numbers = #tpu.dot_dimension_numbers<[1], [0], [0], [1], [0, 0, 1, 1], [], []>} : vector<1x64xbf16>, vector<64x256xbf16>, vector<1x256xf32> -> vector<1x256xf32>
    %52 = arith.addf %48, %51 : vector<1x256xf32>
    %53 = vector.extract_strided_slice %19 {offsets = [8, 0], sizes = [1, 64], strides = [1, 1]} : vector<16x64xbf16> to vector<1x64xbf16>
    %c512 = arith.constant 512 : index
    %c0_25 = arith.constant 0 : index
    %54 = vector.load %arg4[%c512, %c0_25] : memref<1024x256xbf16, #tpu.memory_space<vmem>>, vector<64x256xbf16>
    %cst_26 = arith.constant dense<0.000000e+00> : vector<1x256xf32>
    %55 = tpu.matmul %53, %54, %cst_26 {dimension_numbers = #tpu.dot_dimension_numbers<[1], [0], [0], [1], [0, 0, 1, 1], [], []>} : vector<1x64xbf16>, vector<64x256xbf16>, vector<1x256xf32> -> vector<1x256xf32>
    %56 = arith.addf %52, %55 : vector<1x256xf32>
    %57 = vector.extract_strided_slice %19 {offsets = [9, 0], sizes = [1, 64], strides = [1, 1]} : vector<16x64xbf16> to vector<1x64xbf16>
    %c576 = arith.constant 576 : index
    %c0_27 = arith.constant 0 : index
    %58 = vector.load %arg4[%c576, %c0_27] : memref<1024x256xbf16, #tpu.memory_space<vmem>>, vector<64x256xbf16>
    %cst_28 = arith.constant dense<0.000000e+00> : vector<1x256xf32>
    %59 = tpu.matmul %57, %58, %cst_28 {dimension_numbers = #tpu.dot_dimension_numbers<[1], [0], [0], [1], [0, 0, 1, 1], [], []>} : vector<1x64xbf16>, vector<64x256xbf16>, vector<1x256xf32> -> vector<1x256xf32>
    %60 = arith.addf %56, %59 : vector<1x256xf32>
    %61 = vector.extract_strided_slice %19 {offsets = [10, 0], sizes = [1, 64], strides = [1, 1]} : vector<16x64xbf16> to vector<1x64xbf16>
    %c640 = arith.constant 640 : index
    %c0_29 = arith.constant 0 : index
    %62 = vector.load %arg4[%c640, %c0_29] : memref<1024x256xbf16, #tpu.memory_space<vmem>>, vector<64x256xbf16>
    %cst_30 = arith.constant dense<0.000000e+00> : vector<1x256xf32>
    %63 = tpu.matmul %61, %62, %cst_30 {dimension_numbers = #tpu.dot_dimension_numbers<[1], [0], [0], [1], [0, 0, 1, 1], [], []>} : vector<1x64xbf16>, vector<64x256xbf16>, vector<1x256xf32> -> vector<1x256xf32>
    %64 = arith.addf %60, %63 : vector<1x256xf32>
    %65 = vector.extract_strided_slice %19 {offsets = [11, 0], sizes = [1, 64], strides = [1, 1]} : vector<16x64xbf16> to vector<1x64xbf16>
    %c704 = arith.constant 704 : index
    %c0_31 = arith.constant 0 : index
    %66 = vector.load %arg4[%c704, %c0_31] : memref<1024x256xbf16, #tpu.memory_space<vmem>>, vector<64x256xbf16>
    %cst_32 = arith.constant dense<0.000000e+00> : vector<1x256xf32>
    %67 = tpu.matmul %65, %66, %cst_32 {dimension_numbers = #tpu.dot_dimension_numbers<[1], [0], [0], [1], [0, 0, 1, 1], [], []>} : vector<1x64xbf16>, vector<64x256xbf16>, vector<1x256xf32> -> vector<1x256xf32>
    %68 = arith.addf %64, %67 : vector<1x256xf32>
    %69 = vector.extract_strided_slice %19 {offsets = [12, 0], sizes = [1, 64], strides = [1, 1]} : vector<16x64xbf16> to vector<1x64xbf16>
    %c768 = arith.constant 768 : index
    %c0_33 = arith.constant 0 : index
    %70 = vector.load %arg4[%c768, %c0_33] : memref<1024x256xbf16, #tpu.memory_space<vmem>>, vector<64x256xbf16>
    %cst_34 = arith.constant dense<0.000000e+00> : vector<1x256xf32>
    %71 = tpu.matmul %69, %70, %cst_34 {dimension_numbers = #tpu.dot_dimension_numbers<[1], [0], [0], [1], [0, 0, 1, 1], [], []>} : vector<1x64xbf16>, vector<64x256xbf16>, vector<1x256xf32> -> vector<1x256xf32>
    %72 = arith.addf %68, %71 : vector<1x256xf32>
    %73 = vector.extract_strided_slice %19 {offsets = [13, 0], sizes = [1, 64], strides = [1, 1]} : vector<16x64xbf16> to vector<1x64xbf16>
    %c832 = arith.constant 832 : index
    %c0_35 = arith.constant 0 : index
    %74 = vector.load %arg4[%c832, %c0_35] : memref<1024x256xbf16, #tpu.memory_space<vmem>>, vector<64x256xbf16>
    %cst_36 = arith.constant dense<0.000000e+00> : vector<1x256xf32>
    %75 = tpu.matmul %73, %74, %cst_36 {dimension_numbers = #tpu.dot_dimension_numbers<[1], [0], [0], [1], [0, 0, 1, 1], [], []>} : vector<1x64xbf16>, vector<64x256xbf16>, vector<1x256xf32> -> vector<1x256xf32>
    %76 = arith.addf %72, %75 : vector<1x256xf32>
    %77 = vector.extract_strided_slice %19 {offsets = [14, 0], sizes = [1, 64], strides = [1, 1]} : vector<16x64xbf16> to vector<1x64xbf16>
    %c896 = arith.constant 896 : index
    %c0_37 = arith.constant 0 : index
    %78 = vector.load %arg4[%c896, %c0_37] : memref<1024x256xbf16, #tpu.memory_space<vmem>>, vector<64x256xbf16>
    %cst_38 = arith.constant dense<0.000000e+00> : vector<1x256xf32>
    %79 = tpu.matmul %77, %78, %cst_38 {dimension_numbers = #tpu.dot_dimension_numbers<[1], [0], [0], [1], [0, 0, 1, 1], [], []>} : vector<1x64xbf16>, vector<64x256xbf16>, vector<1x256xf32> -> vector<1x256xf32>
    %80 = arith.addf %76, %79 : vector<1x256xf32>
    %81 = vector.extract_strided_slice %19 {offsets = [15, 0], sizes = [1, 64], strides = [1, 1]} : vector<16x64xbf16> to vector<1x64xbf16>
    %c960 = arith.constant 960 : index
    %c0_39 = arith.constant 0 : index
    %82 = vector.load %arg4[%c960, %c0_39] : memref<1024x256xbf16, #tpu.memory_space<vmem>>, vector<64x256xbf16>
    %cst_40 = arith.constant dense<0.000000e+00> : vector<1x256xf32>
    %83 = tpu.matmul %81, %82, %cst_40 {dimension_numbers = #tpu.dot_dimension_numbers<[1], [0], [0], [1], [0, 0, 1, 1], [], []>} : vector<1x64xbf16>, vector<64x256xbf16>, vector<1x256xf32> -> vector<1x256xf32>
    %84 = arith.addf %80, %83 : vector<1x256xf32>
    %cst_41 = arith.constant 0.000000e+00 : f32
    %85 = vector.broadcast %cst_41 : f32 to vector<1x256xf32>
    %86 = arith.cmpf oge, %84, %85 : vector<1x256xf32>
    %c2 = arith.constant 2 : index
    %87 = memref.load %arg10[%c2] : memref<4xf32, #tpu.memory_space<smem>>
    %88 = vector.broadcast %87 : f32 to vector<1x256xf32>
    %89 = arith.mulf %88, %84 : vector<1x256xf32>
    %90 = arith.select %86, %84, %89 : vector<1x256xi1>, vector<1x256xf32>
    %91 = arith.truncf %90 : vector<1x256xf32> to vector<1x256xbf16>
    %c0_42 = arith.constant 0 : index
    %c0_43 = arith.constant 0 : index
    %92 = vector.load %arg6[%c0_42, %c0_43] : memref<256x256xbf16, #tpu.memory_space<vmem>>, vector<256x256xbf16>
    %cst_44 = arith.constant dense<0.000000e+00> : vector<1x256xf32>
    %93 = tpu.matmul %91, %92, %cst_44 {dimension_numbers = #tpu.dot_dimension_numbers<[1], [0], [0], [1], [0, 0, 1, 1], [], []>} : vector<1x256xbf16>, vector<256x256xbf16>, vector<1x256xf32> -> vector<1x256xf32>
    %c0_45 = arith.constant 0 : index
    %c0_46 = arith.constant 0 : index
    %94 = vector.load %arg7[%c0_45, %c0_46] : memref<1x256xf32, #tpu.memory_space<vmem>>, vector<1x256xf32>
    %95 = arith.addf %93, %94 : vector<1x256xf32>
    %cst_47 = arith.constant 0.000000e+00 : f32
    %96 = vector.broadcast %cst_47 : f32 to vector<1x256xf32>
    %97 = arith.cmpf oge, %95, %96 : vector<1x256xf32>
    %c3 = arith.constant 3 : index
    %98 = memref.load %arg10[%c3] : memref<4xf32, #tpu.memory_space<smem>>
    %99 = vector.broadcast %98 : f32 to vector<1x256xf32>
    %100 = arith.mulf %99, %95 : vector<1x256xf32>
    %101 = arith.select %97, %95, %100 : vector<1x256xi1>, vector<1x256xf32>
    %102 = arith.truncf %101 : vector<1x256xf32> to vector<1x256xbf16>
    %c0_48 = arith.constant 0 : index
    %c0_49 = arith.constant 0 : index
    %103 = vector.load %arg8[%c0_48, %c0_49] : memref<256x128xbf16, #tpu.memory_space<vmem>>, vector<256x128xbf16>
    %cst_50 = arith.constant dense<0.000000e+00> : vector<1x128xf32>
    %104 = tpu.matmul %102, %103, %cst_50 {dimension_numbers = #tpu.dot_dimension_numbers<[1], [0], [0], [1], [0, 0, 1, 1], [], []>} : vector<1x256xbf16>, vector<256x128xbf16>, vector<1x128xf32> -> vector<1x128xf32>
    %c0_51 = arith.constant 0 : index
    %c0_52 = arith.constant 0 : index
    %105 = vector.load %arg9[%c0_51, %c0_52] : memref<1x128xf32, #tpu.memory_space<vmem>>, vector<1x128xf32>
    %106 = arith.addf %104, %105 : vector<1x128xf32>
    %107 = arith.mulf %106, %106 : vector<1x128xf32>
    %cst_53 = arith.constant dense<0.000000e+00> : vector<1xf32>
    %108 = vector.multi_reduction <add>, %107, %cst_53 [1] : vector<1x128xf32> to vector<1xf32>
    %109 = vector.shape_cast %108 : vector<1xf32> to vector<1x1xf32>
    %cst_54 = arith.constant 9.99999996E-13 : f32
    %110 = vector.broadcast %cst_54 : f32 to vector<1x1xf32>
    %111 = arith.addf %109, %110 : vector<1x1xf32>
    %112 = math.rsqrt %111 : vector<1x1xf32>
    %113 = vector.broadcast %112 : vector<1x1xf32> to vector<1x128xf32>
    %114 = arith.mulf %106, %113 : vector<1x128xf32>
    %115 = vector.shape_cast %114 : vector<1x128xf32> to vector<1x128xf32>
    %116 = vector.broadcast %115 : vector<1x128xf32> to vector<8x128xf32>
    %c0_55 = arith.constant 0 : index
    %c0_56 = arith.constant 0 : index
    %117 = vector.load %arg11[%c0_55, %c0_56] : memref<8x128xf32, #tpu.memory_space<vmem>>, vector<8x128xf32>
    tpu.vector_store %arg11[%c0_55, %c0_56], %116 {strides = array<i32>} : memref<8x128xf32, #tpu.memory_space<vmem>>, vector<8x128xf32>,
    return
  }
  func.func @transform_0(%arg0: i32) -> (i32, i32) {
    %c0_i32 = arith.constant 0 : i32
    %c0_i32_0 = arith.constant 0 : i32
    return %arg0, %c0_i32 : i32, i32
  }
  func.func @transform_1(%arg0: i32) -> (i32, i32) {
    %c0_i32 = arith.constant 0 : i32
    %c0_i32_0 = arith.constant 0 : i32
    %c0_i32_1 = arith.constant 0 : i32
    return %c0_i32, %c0_i32_0 : i32, i32
  }
  func.func @transform_2(%arg0: i32) -> (i32, i32) {
    %c0_i32 = arith.constant 0 : i32
    %c0_i32_0 = arith.constant 0 : i32
    %c0_i32_1 = arith.constant 0 : i32
    return %c0_i32, %c0_i32_0 : i32, i32
  }
  func.func @transform_3(%arg0: i32) -> (i32, i32) {
    %c0_i32 = arith.constant 0 : i32
    %c0_i32_0 = arith.constant 0 : i32
    %c0_i32_1 = arith.constant 0 : i32
    return %c0_i32, %c0_i32_0 : i32, i32
  }
  func.func @transform_4(%arg0: i32) -> (i32, i32) {
    %c0_i32 = arith.constant 0 : i32
    %c0_i32_0 = arith.constant 0 : i32
    %c0_i32_1 = arith.constant 0 : i32
    return %c0_i32, %c0_i32_0 : i32, i32
  }
  func.func @transform_5(%arg0: i32) -> (i32, i32) {
    %c0_i32 = arith.constant 0 : i32
    %c0_i32_0 = arith.constant 0 : i32
    %c0_i32_1 = arith.constant 0 : i32
    return %c0_i32, %c0_i32_0 : i32, i32
  }
  func.func @transform_6(%arg0: i32) -> (i32, i32) {
    %c0_i32 = arith.constant 0 : i32
    %c0_i32_0 = arith.constant 0 : i32
    %c0_i32_1 = arith.constant 0 : i32
    return %c0_i32, %c0_i32_0 : i32, i32
  }
  func.func @transform_7(%arg0: i32) -> (i32, i32) {
    %c0_i32 = arith.constant 0 : i32
    %c0_i32_0 = arith.constant 0 : i32
    %c0_i32_1 = arith.constant 0 : i32
    return %c0_i32, %c0_i32_0 : i32, i32
  }
  func.func @transform_8(%arg0: i32) -> (i32, i32) {
    %c0_i32 = arith.constant 0 : i32
    %c0_i32_0 = arith.constant 0 : i32
    %c0_i32_1 = arith.constant 0 : i32
    return %c0_i32, %c0_i32_0 : i32, i32
  }
  func.func @transform_9(%arg0: i32) -> i32 {
    %c0_i32 = arith.constant 0 : i32
    %c0_i32_0 = arith.constant 0 : i32
    return %c0_i32 : i32
  }
  func.func @transform_10(%arg0: i32) -> (i32, i32) {
    %c0_i32 = arith.constant 0 : i32
    %c0_i32_0 = arith.constant 0 : i32
    return %arg0, %c0_i32 : i32, i32
  }
}

</mosaic_0001>

<llo_original>
// kernel: embedding_net_l2.2
$region0: #{embedding_net_l2.2}
  #allocation0 [shape = 'u32[]', space=smem, size = 0x4, offset = 0x4, fixed_abs, tag = 'smem constant byte address 0x4 - core index']
  #allocation1 [shape = 'u32[144,128]{1,0:T(1,128)}', space=vmem, size = 0x12000, scoped, tag = 'internal scratch']
  %s0 = inlined_call_operand.vmem [shape: bf16[1152,32], index: 0, kind: input, shape index: {}]
  %s1 = inlined_call_operand.vmem [shape: bf16[32,32], index: 1, kind: input, shape index: {}]
  %s2 = inlined_call_operand.vmem [shape: f32[1,32], index: 2, kind: input, shape index: {}]
  %s3 = inlined_call_operand.vmem [shape: f32[4], index: 3, kind: input, shape index: {}]
  %s4 = inlined_call_operand.vmem [shape: bf16[288,32], index: 4, kind: output, shape index: {}]
  %s5 = sld [smem:[#allocation0]]
  $region53: #{embedding_net_l2.2} parent=0
    _
  %s7 = ssub.s32 1, %s5
  %s8 = scalar_select 0, %s7, %s5
  $region1: #{embedding_net_l2.2} parent=0
    #allocation2 [shape = 'u8[512]{0}', space=smem, size = 0x200, scoped, tag = 'input window, operand 3, single buffered']
    #allocation3 [shape = 's32[2]{0}', space=sflag, size = 0x8, scoped, tag = 'scoped memory for embedding_net_l2.2']
    %9 = vsyncpa [#allocation3], 0
    loop: start=0, step=1, limit=4
    $region2: #{embedding_net_l2.2} parent=1 // loop_pre_header
      _
    $region3: #{embedding_net_l2.2} parent=1 // loop_header
      %s11 = sphi 0, %s15
      %p12 = scmp.ge.s32.totalorder %s11, 4
      %s21 = sphi 0, %s23
      %s24 = sphi 0, %s21
      %s25 = sphi 0, %s24
      %s41 = sphi 0, %s25
      %s45 = sphi 0, %s45
      %s47 = sphi 0, %s45
      %s48 = sphi 0, %s47
      %s62 = sphi 0, %s48
      %s66 = sphi 0, %s66
      %s68 = sphi 0, %s66
      %s69 = sphi 0, %s68
      %s83 = sphi 0, %s69
      %s87 = sphi 0, %s87
      %s89 = sphi 0, %s87
      %s90 = sphi 0, %s89
      %s104 = sphi 0, %s90
      %s110 = sphi 0, %s112
      %s113 = sphi 0, %s110
      %s114 = sphi 0, %s113
      %s130 = sphi 0, %s114
    $region4: #{embedding_net_l2.2} parent=1 // loop_header_branch
      %14 = sbr.rel (%p12) target = $region8
    $region5: #{embedding_net_l2.2} parent=1 // loop_body
      %s16 = ssub.s32 %s11, 1
      %s17 = ssub.s32 %s11, 2
      %s18 = sadd.s32 %s11, 1
      %s19 = ssub.s32 %s11, %s18
      %p20 = scmp.eq.s32.totalorder %s19, 0
      %s22 = sadd.s32 %s21, 1
      %s23 = scalar_select %p20, %s21, %s22
      %p26 = pneg %p20
      %p27 = scmp.eq.s32.totalorder %s11, 1
      %p28 = por %p26, %p27
      %p29 = scmp.ne.s32.totalorder %s21, %s24
      %p30 = scmp.eq.s32.totalorder %s11, 0
      %p31 = por %p29, %p30
      %p32 = scmp.ne.s32.totalorder %s21, %s24
      %p33 = scmp.eq.s32.totalorder %s16, 1
      %p34 = por %p32, %p33
      %p35 = scmp.ne.s32.totalorder %s24, %s25
      %p36 = scmp.eq.s32.totalorder %s16, 0
      %p37 = por %p35, %p36
      %p38 = scmp.ne.s32.totalorder %s24, %s25
      %p39 = scmp.eq.s32.totalorder %s17, 1
      %p40 = por %p38, %p39
      %p42 = scmp.ne.s32.totalorder %s25, %s41
      %p43 = scmp.eq.s32.totalorder %s17, 0
      %p44 = por %p42, %p43
      %s46 = sadd.s32 %s45, 1
      %p49 = scmp.eq.s32.totalorder %s11, 1
      %p50 = scmp.ne.s32.totalorder %s45, %s47
      %p51 = scmp.eq.s32.totalorder %s11, 0
      %p52 = por %p50, %p51
      %p53 = scmp.ne.s32.totalorder %s45, %s47
      %p54 = scmp.eq.s32.totalorder %s16, 1
      %p55 = por %p53, %p54
      %p56 = scmp.ne.s32.totalorder %s47, %s48
      %p57 = scmp.eq.s32.totalorder %s16, 0
      %p58 = por %p56, %p57
      %p59 = scmp.ne.s32.totalorder %s47, %s48
      %p60 = scmp.eq.s32.totalorder %s17, 1
      %p61 = por %p59, %p60
      %p63 = scmp.ne.s32.totalorder %s48, %s62
      %p64 = scmp.eq.s32.totalorder %s17, 0
      %p65 = por %p63, %p64
      %s67 = sadd.s32 %s66, 1
      %p70 = scmp.eq.s32.totalorder %s11, 1
      %p71 = scmp.ne.s32.totalorder %s66, %s68
      %p72 = scmp.eq.s32.totalorder %s11, 0
      %p73 = por %p71, %p72
      %p74 = scmp.ne.s32.totalorder %s66, %s68
      %p75 = scmp.eq.s32.totalorder %s16, 1
      %p76 = por %p74, %p75
      %p77 = scmp.ne.s32.totalorder %s68, %s69
      %p78 = scmp.eq.s32.totalorder %s16, 0
      %p79 = por %p77, %p78
      %p80 = scmp.ne.s32.totalorder %s68, %s69
      %p81 = scmp.eq.s32.totalorder %s17, 1
      %p82 = por %p80, %p81
      %p84 = scmp.ne.s32.totalorder %s69, %s83
      %p85 = scmp.eq.s32.totalorder %s17, 0
      %p86 = por %p84, %p85
      %s88 = sadd.s32 %s87, 1
      %p91 = scmp.eq.s32.totalorder %s11, 1
      %p92 = scmp.ne.s32.totalorder %s87, %s89
      %p93 = scmp.eq.s32.totalorder %s11, 0
      %p94 = por %p92, %p93
      %p95 = scmp.ne.s32.totalorder %s87, %s89
      %p96 = scmp.eq.s32.totalorder %s16, 1
      %p97 = por %p95, %p96
      %p98 = scmp.ne.s32.totalorder %s89, %s90
      %p99 = scmp.eq.s32.totalorder %s16, 0
      %p100 = por %p98, %p99
      %p101 = scmp.ne.s32.totalorder %s89, %s90
      %p102 = scmp.eq.s32.totalorder %s17, 1
      %p103 = por %p101, %p102
      %p105 = scmp.ne.s32.totalorder %s90, %s104
      %p106 = scmp.eq.s32.totalorder %s17, 0
      %p107 = por %p105, %p106
      %s108 = ssub.s32 %s11, %s18
      %p109 = scmp.eq.s32.totalorder %s108, 0
      %s111 = sadd.s32 %s110, 1
      %s112 = scalar_select %p109, %s110, %s111
      %p115 = pneg %p109
      %p116 = scmp.eq.s32.totalorder %s11, 1
      %p117 = por %p115, %p116
      %p118 = scmp.ne.s32.totalorder %s110, %s113
      %p119 = scmp.eq.s32.totalorder %s11, 0
      %p120 = por %p118, %p119
      %p121 = scmp.ne.s32.totalorder %s110, %s113
      %p122 = scmp.eq.s32.totalorder %s16, 1
      %p123 = por %p121, %p122
      %p124 = scmp.ne.s32.totalorder %s113, %s114
      %p125 = scmp.eq.s32.totalorder %s16, 0
      %p126 = por %p124, %p125
      %p127 = scmp.ne.s32.totalorder %s113, %s114
      %p128 = scmp.eq.s32.totalorder %s17, 1
      %p129 = por %p127, %p128
      %p131 = scmp.ne.s32.totalorder %s114, %s130
      %p132 = scmp.eq.s32.totalorder %s17, 0
      %p133 = por %p131, %p132
      %p134 = scmp.le.s32.totalorder 1, %s11
      %p135 = scmp.lt.s32.totalorder %s11, 3
      %p136 = pnand %p134, %p135
      %p137 = pneg %p136
      // Predicated region
      $region9: #{embedding_net_l2.2} parent=5 // pred_check
        _
      $region10: #{embedding_net_l2.2} parent=5 // pred_check_branch
        %139 = sbr.rel (%p136) target = $region12
      $region11: #{embedding_net_l2.2} parent=5 // pred_region
        %s140 = ssub.s32 %s11, 1
        // Predicated region
        $region13: #{embedding_net_l2.2} parent=11 // pred_check
          %p141 = pneg %p58
        $region14: #{embedding_net_l2.2} parent=11 // pred_check_branch
          %143 = sbr.rel (%p141) target = $region16
        $region15: #{embedding_net_l2.2} parent=11 // pred_region
          _
        $region16: #{embedding_net_l2.2} parent=11 // pred_fallthru
          _
        // Predicated region
        $region17: #{embedding_net_l2.2} parent=11 // pred_check
          %p144 = pneg %p79
        $region18: #{embedding_net_l2.2} parent=11 // pred_check_branch
          %146 = sbr.rel (%p144) target = $region20
        $region19: #{embedding_net_l2.2} parent=11 // pred_region
          _
        $region20: #{embedding_net_l2.2} parent=11 // pred_fallthru
          _
        // Predicated region
        $region21: #{embedding_net_l2.2} parent=11 // pred_check
          %p147 = pneg %p100
        $region22: #{embedding_net_l2.2} parent=11 // pred_check_branch
          %149 = sbr.rel (%p147) target = $region24
        $region23: #{embedding_net_l2.2} parent=11 // pred_region
          %s151 = ssub.s32 16, 16
          %152 = vsyncadd [#allocation3], %s151
          %s154 = sshll.u32 %s3, 4
          %s155 = int_to_ptr.vmem [resolvable:$true] %s154
          %157 = dma.vmem_to_smem %s155, 16, [#allocation2], [#allocation3]
        $region24: #{embedding_net_l2.2} parent=11 // pred_fallthru
          _
      $region12: #{embedding_net_l2.2} parent=5 // pred_fallthru
        _
      %p158 = scmp.lt.s32.totalorder %s11, 2
      // Predicated region
      $region25: #{embedding_net_l2.2} parent=5 // pred_check
        %p159 = pneg %p158
      $region26: #{embedding_net_l2.2} parent=5 // pred_check_branch
        %161 = sbr.rel (%p159) target = $region28
      $region27: #{embedding_net_l2.2} parent=5 // pred_region
        // Predicated region
        $region29: #{embedding_net_l2.2} parent=27 // pred_check
          %p162 = pneg %p31
        $region30: #{embedding_net_l2.2} parent=27 // pred_check_branch
          %164 = sbr.rel (%p162) target = $region32
        $region31: #{embedding_net_l2.2} parent=27 // pred_region
          %s165 = smul.u32 72, %s11
          %p166 = scmp.lt.s32.totalorder %s165, 143
          %s167 = scalar_select %p166, %s165, 143
          %s168 = smul.addr %s167, 4
          %s169 = scalar_lea.vmem %s0, %s168
          %s170 = smul.u32 72, %s11
        $region32: #{embedding_net_l2.2} parent=27 // pred_fallthru
          _
      $region28: #{embedding_net_l2.2} parent=5 // pred_fallthru
        _
      %p171 = scmp.le.s32.totalorder 1, %s11
      %p172 = scmp.lt.s32.totalorder %s11, 3
      %p173 = pnand %p171, %p172
      %p174 = pneg %p173
      // Predicated region
      $region33: #{embedding_net_l2.2} parent=5 // pred_check
        _
      $region34: #{embedding_net_l2.2} parent=5 // pred_check_branch
        %176 = sbr.rel (%p173) target = $region36
      $region35: #{embedding_net_l2.2} parent=5 // pred_region
        %s177 = ssub.s32 %s11, 1
        // Predicated region
        $region37: #{embedding_net_l2.2} parent=35 // pred_check
          %p178 = pneg %p100
        $region38: #{embedding_net_l2.2} parent=35 // pred_check_branch
          %180 = sbr.rel (%p178) target = $region40
        $region39: #{embedding_net_l2.2} parent=35 // pred_region
          %181 = dma.done [#allocation3], 16
        $region40: #{embedding_net_l2.2} parent=35 // pred_fallthru
          _
        %182 = sfence
        %s183 = smul.u32 72, %s16
        %p184 = scmp.lt.s32.totalorder %s183, 143
        %s185 = scalar_select %p184, %s183, 143
        %s186 = smul.addr %s185, 4
        %s187 = scalar_lea.vmem %s0, %s186
        %p188 = pneg %p37
        %p189 = pneg %p34
        %p190 = pneg %p58
        %p191 = pneg %p55
        %p192 = pneg %p79
        %p193 = pneg %p76
        %p194 = pneg %p100
        %p195 = pneg %p97
        %p196 = pneg %p126
        %p197 = pneg %p123
        %s198 = smul.u32 18, %s16
        %p199 = scmp.lt.s32.totalorder %s198, 35
        %s200 = scalar_select %p199, %s198, 35
        %s201 = smul.addr %s200, 4
        %s202 = scalar_lea.vmem %s4, %s201
        %s203 = smul.u32 72, %s16
        %p204 = scmp.lt.s32.totalorder %s203, 143
        %s205 = scalar_select %p204, %s203, 143
        %s206 = smul.addr %s205, 4
        %s207 = scalar_lea.vmem %s0, %s206
        %s208 = smul.u32 72, %s16
        %s209 = smul.u32 18, %s16
        %p210 = scmp.lt.s32.totalorder %s209, 35
        %s211 = scalar_select %p210, %s209, 35
        %s212 = smul.addr %s211, 4
        %s213 = scalar_lea.vmem %s4, %s212
        %s214 = smul.u32 18, %s16
        %v216 = vld [vmem:[%s207] sm:$0xf]
        %v217 = vld [vmem:[%s207 + $0x4] sm:$0xf]
        %v218 = vld [vmem:[%s207 + $0x8] sm:$0xf]
        %v219 = vld [vmem:[%s207 + $0xc] sm:$0xf]
        %v220 = vld [vmem:[%s207 + $0x10] sm:$0xf]
        %v221 = vld [vmem:[%s207 + $0x14] sm:$0xf]
        %v222 = vld [vmem:[%s207 + $0x18] sm:$0xf]
        %v223 = vld [vmem:[%s207 + $0x1c] sm:$0xf]
        %v224 = vld [vmem:[%s207 + $0x20] sm:$0xf]
        %v225 = vld [vmem:[%s207 + $0x24] sm:$0xf]
        %v226 = vld [vmem:[%s207 + $0x28] sm:$0xf]
        %v227 = vld [vmem:[%s207 + $0x2c] sm:$0xf]
        %v228 = vld [vmem:[%s207 + $0x30] sm:$0xf]
        %v229 = vld [vmem:[%s207 + $0x34] sm:$0xf]
        %v230 = vld [vmem:[%s207 + $0x38] sm:$0xf]
        %v231 = vld [vmem:[%s207 + $0x3c] sm:$0xf]
        %v232 = vld [vmem:[%s207 + $0x40] sm:$0xf]
        %v233 = vld [vmem:[%s207 + $0x44] sm:$0xf]
        %v234 = vld [vmem:[%s207 + $0x48] sm:$0xf]
        %v235 = vld [vmem:[%s207 + $0x4c] sm:$0xf]
        %v236 = vld [vmem:[%s207 + $0x50] sm:$0xf]
        %v237 = vld [vmem:[%s207 + $0x54] sm:$0xf]
        %v238 = vld [vmem:[%s207 + $0x58] sm:$0xf]
        %v239 = vld [vmem:[%s207 + $0x5c] sm:$0xf]
        %v240 = vld [vmem:[%s207 + $0x60] sm:$0xf]
        %v241 = vld [vmem:[%s207 + $0x64] sm:$0xf]
        %v242 = vld [vmem:[%s207 + $0x68] sm:$0xf]
        %v243 = vld [vmem:[%s207 + $0x6c] sm:$0xf]
        %v244 = vld [vmem:[%s207 + $0x70] sm:$0xf]
        %v245 = vld [vmem:[%s207 + $0x74] sm:$0xf]
        %v246 = vld [vmem:[%s207 + $0x78] sm:$0xf]
        %v247 = vld [vmem:[%s207 + $0x7c] sm:$0xf]
        %v248 = vld [vmem:[%s207 + $0x80] sm:$0xf]
        %v249 = vld [vmem:[%s207 + $0x84] sm:$0xf]
        %v250 = vld [vmem:[%s207 + $0x88] sm:$0xf]
        %v251 = vld [vmem:[%s207 + $0x8c] sm:$0xf]
        %v252 = vld [vmem:[%s207 + $0x90] sm:$0xf]
        %v253 = vld [vmem:[%s207 + $0x94] sm:$0xf]
        %v254 = vld [vmem:[%s207 + $0x98] sm:$0xf]
        %v255 = vld [vmem:[%s207 + $0x9c] sm:$0xf]
        %v256 = vld [vmem:[%s207 + $0xa0] sm:$0xf]
        %v257 = vld [vmem:[%s207 + $0xa4] sm:$0xf]
        %v258 = vld [vmem:[%s207 + $0xa8] sm:$0xf]
        %v259 = vld [vmem:[%s207 + $0xac] sm:$0xf]
        %v260 = vld [vmem:[%s207 + $0xb0] sm:$0xf]
        %v261 = vld [vmem:[%s207 + $0xb4] sm:$0xf]
        %v262 = vld [vmem:[%s207 + $0xb8] sm:$0xf]
        %v263 = vld [vmem:[%s207 + $0xbc] sm:$0xf]
        %v264 = vld [vmem:[%s207 + $0xc0] sm:$0xf]
        %v265 = vld [vmem:[%s207 + $0xc4] sm:$0xf]
        %v266 = vld [vmem:[%s207 + $0xc8] sm:$0xf]
        %v267 = vld [vmem:[%s207 + $0xcc] sm:$0xf]
        %v268 = vld [vmem:[%s207 + $0xd0] sm:$0xf]
        %v269 = vld [vmem:[%s207 + $0xd4] sm:$0xf]
        %v270 = vld [vmem:[%s207 + $0xd8] sm:$0xf]
        %v271 = vld [vmem:[%s207 + $0xdc] sm:$0xf]
        %v272 = vld [vmem:[%s207 + $0xe0] sm:$0xf]
        %v273 = vld [vmem:[%s207 + $0xe4] sm:$0xf]
        %v274 = vld [vmem:[%s207 + $0xe8] sm:$0xf]
        %v275 = vld [vmem:[%s207 + $0xec] sm:$0xf]
        %v276 = vld [vmem:[%s207 + $0xf0] sm:$0xf]
        %v277 = vld [vmem:[%s207 + $0xf4] sm:$0xf]
        %v278 = vld [vmem:[%s207 + $0xf8] sm:$0xf]
        %v279 = vld [vmem:[%s207 + $0xfc] sm:$0xf]
        %v280 = vld [vmem:[%s207 + $0x100] sm:$0xf]
        %v281 = vld [vmem:[%s207 + $0x104] sm:$0xf]
        %v282 = vld [vmem:[%s207 + $0x108] sm:$0xf]
        %v283 = vld [vmem:[%s207 + $0x10c] sm:$0xf]
        %v284 = vld [vmem:[%s207 + $0x110] sm:$0xf]
        %v285 = vld [vmem:[%s207 + $0x114] sm:$0xf]
        %v286 = vld [vmem:[%s207 + $0x118] sm:$0xf]
        %v287 = vld [vmem:[%s207 + $0x11c] sm:$0xf]
        %v288 = vld [vmem:[%s1] sm:$0xf]
        %v289 = vld [vmem:[%s1 + $0x4] sm:$0xf]
        %v290 = vld [vmem:[%s1 + $0x8] sm:$0xf]
        %v291 = vld [vmem:[%s1 + $0xc] sm:$0xf]
        %v292 = vld [vmem:[%s2] sm:$0x1]
        %v294 = vlaneseq
        %v295 = vshrl.u32 %v294, 7
        %v296 = vsub.s32 0, %v295
        %v297 = vrot.slane %v292, %v296
        %v371 = vunpack.c.l.b16 %v216
        %v372 = vunpack.c.l.b16 %v217
        %v373 = vunpack.c.l.b16 %v218
        %v374 = vunpack.c.l.b16 %v219
        %v375 = vunpack.c.l.b16 %v220
        %v376 = vunpack.c.l.b16 %v221
        %v377 = vunpack.c.l.b16 %v222
        %v378 = vunpack.c.l.b16 %v223
        %v379 = vunpack.c.l.b16 %v224
        %v380 = vunpack.c.l.b16 %v225
        %v381 = vunpack.c.l.b16 %v226
        %v382 = vunpack.c.l.b16 %v227
        %v383 = vunpack.c.l.b16 %v228
        %v384 = vunpack.c.l.b16 %v229
        %v385 = vunpack.c.l.b16 %v230
        %v386 = vunpack.c.l.b16 %v231
        %v387 = vunpack.c.l.b16 %v232
        %v388 = vunpack.c.l.b16 %v233
        %v389 = vunpack.c.l.b16 %v234
        %v390 = vunpack.c.l.b16 %v235
        %v391 = vunpack.c.l.b16 %v236
        %v392 = vunpack.c.l.b16 %v237
        %v393 = vunpack.c.l.b16 %v238
        %v394 = vunpack.c.l.b16 %v239
        %v395 = vunpack.c.l.b16 %v240
        %v396 = vunpack.c.l.b16 %v241
        %v397 = vunpack.c.l.b16 %v242
        %v398 = vunpack.c.l.b16 %v243
        %v399 = vunpack.c.l.b16 %v244
        %v400 = vunpack.c.l.b16 %v245
        %v401 = vunpack.c.l.b16 %v246
        %v402 = vunpack.c.l.b16 %v247
        %v403 = vunpack.c.l.b16 %v248
        %v404 = vunpack.c.l.b16 %v249
        %v405 = vunpack.c.l.b16 %v250
        %v406 = vunpack.c.l.b16 %v251
        %v407 = vunpack.c.l.b16 %v252
        %v408 = vunpack.c.l.b16 %v253
        %v409 = vunpack.c.l.b16 %v254
        %v410 = vunpack.c.l.b16 %v255
        %v411 = vunpack.c.l.b16 %v256
        %v412 = vunpack.c.l.b16 %v257
        %v413 = vunpack.c.l.b16 %v258
        %v414 = vunpack.c.l.b16 %v259
        %v415 = vunpack.c.l.b16 %v260
        %v416 = vunpack.c.l.b16 %v261
        %v417 = vunpack.c.l.b16 %v262
        %v418 = vunpack.c.l.b16 %v263
        %v419 = vunpack.c.l.b16 %v264
        %v420 = vunpack.c.l.b16 %v265
        %v421 = vunpack.c.l.b16 %v266
        %v422 = vunpack.c.l.b16 %v267
        %v423 = vunpack.c.l.b16 %v268
        %v424 = vunpack.c.l.b16 %v269
        %v425 = vunpack.c.l.b16 %v270
        %v426 = vunpack.c.l.b16 %v271
        %v427 = vunpack.c.l.b16 %v272
        %v428 = vunpack.c.l.b16 %v273
        %v429 = vunpack.c.l.b16 %v274
        %v430 = vunpack.c.l.b16 %v275
        %v431 = vunpack.c.l.b16 %v276
        %v432 = vunpack.c.l.b16 %v277
        %v433 = vunpack.c.l.b16 %v278
        %v434 = vunpack.c.l.b16 %v279
        %v435 = vunpack.c.l.b16 %v280
        %v436 = vunpack.c.l.b16 %v281
        %v437 = vunpack.c.l.b16 %v282
        %v438 = vunpack.c.l.b16 %v283
        %v439 = vunpack.c.l.b16 %v284
        %v440 = vunpack.c.l.b16 %v285
        %v441 = vunpack.c.l.b16 %v286
        %v442 = vunpack.c.l.b16 %v287
        %v443 = vpack.c.b16 %v372, %v371
        %v444 = vpack.c.b16 %v374, %v373
        %v445 = vpack.c.b16 %v376, %v375
        %v446 = vpack.c.b16 %v378, %v377
        %v447 = vpack.c.b16 %v380, %v379
        %v448 = vpack.c.b16 %v382, %v381
        %v449 = vpack.c.b16 %v384, %v383
        %v450 = vpack.c.b16 %v386, %v385
        %v451 = vpack.c.b16 %v388, %v387
        %v452 = vpack.c.b16 %v390, %v389
        %v453 = vpack.c.b16 %v392, %v391
        %v454 = vpack.c.b16 %v394, %v393
        %v455 = vpack.c.b16 %v396, %v395
        %v456 = vpack.c.b16 %v398, %v397
        %v457 = vpack.c.b16 %v400, %v399
        %v458 = vpack.c.b16 %v402, %v401
        %v459 = vpack.c.b16 %v404, %v403
        %v460 = vpack.c.b16 %v406, %v405
        %v461 = vpack.c.b16 %v408, %v407
        %v462 = vpack.c.b16 %v410, %v409
        %v463 = vpack.c.b16 %v412, %v411
        %v464 = vpack.c.b16 %v414, %v413
        %v465 = vpack.c.b16 %v416, %v415
        %v466 = vpack.c.b16 %v418, %v417
        %v467 = vpack.c.b16 %v420, %v419
        %v468 = vpack.c.b16 %v422, %v421
        %v469 = vpack.c.b16 %v424, %v423
        %v470 = vpack.c.b16 %v426, %v425
        %v471 = vpack.c.b16 %v428, %v427
        %v472 = vpack.c.b16 %v430, %v429
        %v473 = vpack.c.b16 %v432, %v431
        %v474 = vpack.c.b16 %v434, %v433
        %v475 = vpack.c.b16 %v436, %v435
        %v476 = vpack.c.b16 %v438, %v437
        %v477 = vpack.c.b16 %v440, %v439
        %v478 = vpack.c.b16 %v442, %v441
        %v483 = vunpack.c.l.b16 %v288
        %v484 = vunpack.c.l.b16 %v289
        %v485 = vunpack.c.l.b16 %v290
        %v486 = vunpack.c.l.b16 %v291
        %v487 = vpack.c.b16 %v484, %v483
        %v488 = vpack.c.b16 %v486, %v485
        %vm491 = vcmask 261120
        %v493 = vsel %vm491, %v443, 0
        %v496 = vsel %vm491, %v444, 0
        %v499 = vsel %vm491, %v445, 0
        %v502 = vsel %vm491, %v446, 0
        %v505 = vsel %vm491, %v447, 0
        %v508 = vsel %vm491, %v448, 0
        %v511 = vsel %vm491, %v449, 0
        %v514 = vsel %vm491, %v450, 0
        %v517 = vsel %vm491, %v451, 0
        %v520 = vsel %vm491, %v452, 0
        %v523 = vsel %vm491, %v453, 0
        %v526 = vsel %vm491, %v454, 0
        %v529 = vsel %vm491, %v455, 0
        %v532 = vsel %vm491, %v456, 0
        %v535 = vsel %vm491, %v457, 0
        %v538 = vsel %vm491, %v458, 0
        %v541 = vsel %vm491, %v459, 0
        %v544 = vsel %vm491, %v460, 0
        %v547 = vsel %vm491, %v461, 0
        %v550 = vsel %vm491, %v462, 0
        %v553 = vsel %vm491, %v463, 0
        %v556 = vsel %vm491, %v464, 0
        %v559 = vsel %vm491, %v465, 0
        %v562 = vsel %vm491, %v466, 0
        %v565 = vsel %vm491, %v467, 0
        %v568 = vsel %vm491, %v468, 0
        %v571 = vsel %vm491, %v469, 0
        %v574 = vsel %vm491, %v470, 0
        %v577 = vsel %vm491, %v471, 0
        %v580 = vsel %vm491, %v472, 0
        %v583 = vsel %vm491, %v473, 0
        %v586 = vsel %vm491, %v474, 0
        %v589 = vsel %vm491, %v475, 0
        %v592 = vsel %vm491, %v476, 0
        %v595 = vsel %vm491, %v477, 0
        %v598 = vsel %vm491, %v478, 0
        %600 = vmatprep.subr.bf16.mxu0 0
        %601 = vmatpush1.bf16.msra.mxu0 0
        %602 = vmatprep.subr.bf16.mxu0 0
        %603 = vmatpush1.bf16.msra.mxu0 0
        %604 = vmatprep.subr.bf16.mxu0 0
        %605 = vmatpush1.bf16.msra.mxu0 0
        %606 = vmatprep.subr.bf16.mxu0 0
        %607 = vmatpush1.bf16.msra.mxu0 0
        %608 = vmatprep.subr.bf16.mxu0 0
        %609 = vmatpush1.bf16.msra.mxu0 0
        %610 = vmatprep.subr.bf16.mxu0 0
        %611 = vmatpush1.bf16.msra.mxu0 0
        %612 = vmatprep.subr.bf16.mxu0 0
        %613 = vmatpush1.bf16.msra.mxu0 %v488
        %614 = vmatprep.subr.bf16.mxu0 0
        %615 = vmatpush1.bf16.msra.mxu0 %v487
        %616 = vmatprep.subr.bf16.mxu0 0
        %617 = vmatpush2.bf16.msra.mxu0 0
        %618 = vmatprep.subr.bf16.mxu0 0
        %619 = vmatpush2.bf16.msra.mxu0 0
        %620 = vmatprep.subr.bf16.mxu0 0
        %621 = vmatpush2.bf16.msra.mxu0 0
        %622 = vmatprep.subr.bf16.mxu0 0
        %623 = vmatpush2.bf16.msra.mxu0 0
        %624 = vmatprep.subr.bf16.mxu0 0
        %625 = vmatpush2.bf16.msra.mxu0 0
        %626 = vmatprep.subr.bf16.mxu0 0
        %627 = vmatpush2.bf16.msra.mxu0 0
        %628 = vmatprep.subr.bf16.mxu0 0
        %629 = vmatpush2.bf16.msra.mxu0 0
        %630 = vmatprep.subr.bf16.mxu0 0
        %631 = vmatpush2.bf16.msra.mxu0 0
        %632 = vmatprep.mubr.bf16.mxu0 0
        %633 = vmatmul.mubr.bf16.gmra.mxu0 %v493
        %v634 = vpop.f32.mrf.mxu0
        %v635 = vadd.f32 %v297, %v634
        %v636 = vpop.f32.mrf.mxu0
        %v637 = vpop.f32.mrf.mxu0
        %v638 = vadd.f32 %v297, %v637
        %v639 = vpop.f32.mrf.mxu0
        %640 = vmatprep.mubr.bf16.mxu0 0
        %641 = vmatmul.mubr.bf16.gmra.mxu0 %v496
        %v642 = vpop.f32.mrf.mxu0
        %v643 = vadd.f32 %v297, %v642
        %v644 = vpop.f32.mrf.mxu0
        %v645 = vpop.f32.mrf.mxu0
        %v646 = vadd.f32 %v297, %v645
        %v647 = vpop.f32.mrf.mxu0
        %648 = vmatprep.mubr.bf16.mxu0 0
        %649 = vmatmul.mubr.bf16.gmra.mxu0 %v499
        %v650 = vpop.f32.mrf.mxu0
        %v651 = vadd.f32 %v297, %v650
        %v652 = vpop.f32.mrf.mxu0
        %v653 = vpop.f32.mrf.mxu0
        %v654 = vadd.f32 %v297, %v653
        %v655 = vpop.f32.mrf.mxu0
        %656 = vmatprep.mubr.bf16.mxu0 0
        %657 = vmatmul.mubr.bf16.gmra.mxu0 %v502
        %v658 = vpop.f32.mrf.mxu0
        %v659 = vadd.f32 %v297, %v658
        %v660 = vpop.f32.mrf.mxu0
        %v661 = vpop.f32.mrf.mxu0
        %v662 = vadd.f32 %v297, %v661
        %v663 = vpop.f32.mrf.mxu0
        %664 = vmatprep.mubr.bf16.mxu0 0
        %665 = vmatmul.mubr.bf16.gmra.mxu0 %v505
        %v666 = vpop.f32.mrf.mxu0
        %v667 = vadd.f32 %v297, %v666
        %v668 = vpop.f32.mrf.mxu0
        %v669 = vpop.f32.mrf.mxu0
        %v670 = vadd.f32 %v297, %v669
        %v671 = vpop.f32.mrf.mxu0
        %672 = vmatprep.mubr.bf16.mxu0 0
        %673 = vmatmul.mubr.bf16.gmra.mxu0 %v508
        %v674 = vpop.f32.mrf.mxu0
        %v675 = vadd.f32 %v297, %v674
        %v676 = vpop.f32.mrf.mxu0
        %v677 = vpop.f32.mrf.mxu0
        %v678 = vadd.f32 %v297, %v677
        %v679 = vpop.f32.mrf.mxu0
        %680 = vmatprep.mubr.bf16.mxu0 0
        %681 = vmatmul.mubr.bf16.gmra.mxu0 %v511
        %v682 = vpop.f32.mrf.mxu0
        %v683 = vadd.f32 %v297, %v682
        %v684 = vpop.f32.mrf.mxu0
        %v685 = vpop.f32.mrf.mxu0
        %v686 = vadd.f32 %v297, %v685
        %v687 = vpop.f32.mrf.mxu0
        %688 = vmatprep.mubr.bf16.mxu0 0
        %689 = vmatmul.mubr.bf16.gmra.mxu0 %v514
        %v690 = vpop.f32.mrf.mxu0
        %v691 = vadd.f32 %v297, %v690
        %v692 = vpop.f32.mrf.mxu0
        %v693 = vpop.f32.mrf.mxu0
        %v694 = vadd.f32 %v297, %v693
        %v695 = vpop.f32.mrf.mxu0
        %696 = vmatprep.mubr.bf16.mxu0 0
        %697 = vmatmul.mubr.bf16.gmra.mxu0 %v517
        %v698 = vpop.f32.mrf.mxu0
        %v699 = vadd.f32 %v297, %v698
        %v700 = vpop.f32.mrf.mxu0
        %v701 = vpop.f32.mrf.mxu0
        %v702 = vadd.f32 %v297, %v701
        %v703 = vpop.f32.mrf.mxu0
        %704 = vmatprep.mubr.bf16.mxu0 0
        %705 = vmatmul.mubr.bf16.gmra.mxu0 %v520
        %v706 = vpop.f32.mrf.mxu0
        %v707 = vadd.f32 %v297, %v706
        %v708 = vpop.f32.mrf.mxu0
        %v709 = vpop.f32.mrf.mxu0
        %v710 = vadd.f32 %v297, %v709
        %v711 = vpop.f32.mrf.mxu0
        %712 = vmatprep.mubr.bf16.mxu0 0
        %713 = vmatmul.mubr.bf16.gmra.mxu0 %v523
        %v714 = vpop.f32.mrf.mxu0
        %v715 = vadd.f32 %v297, %v714
        %v716 = vpop.f32.mrf.mxu0
        %v717 = vpop.f32.mrf.mxu0
        %v718 = vadd.f32 %v297, %v717
        %v719 = vpop.f32.mrf.mxu0
        %720 = vmatprep.mubr.bf16.mxu0 0
        %721 = vmatmul.mubr.bf16.gmra.mxu0 %v526
        %v722 = vpop.f32.mrf.mxu0
        %v723 = vadd.f32 %v297, %v722
        %v724 = vpop.f32.mrf.mxu0
        %v725 = vpop.f32.mrf.mxu0
        %v726 = vadd.f32 %v297, %v725
        %v727 = vpop.f32.mrf.mxu0
        %728 = vmatprep.mubr.bf16.mxu0 0
        %729 = vmatmul.mubr.bf16.gmra.mxu0 %v529
        %v730 = vpop.f32.mrf.mxu0
        %v731 = vadd.f32 %v297, %v730
        %v732 = vpop.f32.mrf.mxu0
        %v733 = vpop.f32.mrf.mxu0
        %v734 = vadd.f32 %v297, %v733
        %v735 = vpop.f32.mrf.mxu0
        %736 = vmatprep.mubr.bf16.mxu0 0
        %737 = vmatmul.mubr.bf16.gmra.mxu0 %v532
        %v738 = vpop.f32.mrf.mxu0
        %v739 = vadd.f32 %v297, %v738
        %v740 = vpop.f32.mrf.mxu0
        %v741 = vpop.f32.mrf.mxu0
        %v742 = vadd.f32 %v297, %v741
        %v743 = vpop.f32.mrf.mxu0
        %744 = vmatprep.mubr.bf16.mxu0 0
        %745 = vmatmul.mubr.bf16.gmra.mxu0 %v535
        %v746 = vpop.f32.mrf.mxu0
        %v747 = vadd.f32 %v297, %v746
        %v748 = vpop.f32.mrf.mxu0
        %v749 = vpop.f32.mrf.mxu0
        %v750 = vadd.f32 %v297, %v749
        %v751 = vpop.f32.mrf.mxu0
        %752 = vmatprep.mubr.bf16.mxu0 0
        %753 = vmatmul.mubr.bf16.gmra.mxu0 %v538
        %v754 = vpop.f32.mrf.mxu0
        %v755 = vadd.f32 %v297, %v754
        %v756 = vpop.f32.mrf.mxu0
        %v757 = vpop.f32.mrf.mxu0
        %v758 = vadd.f32 %v297, %v757
        %v759 = vpop.f32.mrf.mxu0
        %760 = vmatprep.mubr.bf16.mxu0 0
        %761 = vmatmul.mubr.bf16.gmra.mxu0 %v541
        %v762 = vpop.f32.mrf.mxu0
        %v763 = vadd.f32 %v297, %v762
        %v764 = vpop.f32.mrf.mxu0
        %v765 = vpop.f32.mrf.mxu0
        %v766 = vadd.f32 %v297, %v765
        %v767 = vpop.f32.mrf.mxu0
        %768 = vmatprep.mubr.bf16.mxu0 0
        %769 = vmatmul.mubr.bf16.gmra.mxu0 %v544
        %v770 = vpop.f32.mrf.mxu0
        %v771 = vadd.f32 %v297, %v770
        %v772 = vpop.f32.mrf.mxu0
        %v773 = vpop.f32.mrf.mxu0
        %v774 = vadd.f32 %v297, %v773
        %v775 = vpop.f32.mrf.mxu0
        %776 = vmatprep.mubr.bf16.mxu0 0
        %777 = vmatmul.mubr.bf16.gmra.mxu0 %v547
        %v778 = vpop.f32.mrf.mxu0
        %v779 = vadd.f32 %v297, %v778
        %v780 = vpop.f32.mrf.mxu0
        %v781 = vpop.f32.mrf.mxu0
        %v782 = vadd.f32 %v297, %v781
        %v783 = vpop.f32.mrf.mxu0
        %784 = vmatprep.mubr.bf16.mxu0 0
        %785 = vmatmul.mubr.bf16.gmra.mxu0 %v550
        %v786 = vpop.f32.mrf.mxu0
        %v787 = vadd.f32 %v297, %v786
        %v788 = vpop.f32.mrf.mxu0
        %v789 = vpop.f32.mrf.mxu0
        %v790 = vadd.f32 %v297, %v789
        %v791 = vpop.f32.mrf.mxu0
        %792 = vmatprep.mubr.bf16.mxu0 0
        %793 = vmatmul.mubr.bf16.gmra.mxu0 %v553
        %v794 = vpop.f32.mrf.mxu0
        %v795 = vadd.f32 %v297, %v794
        %v796 = vpop.f32.mrf.mxu0
        %v797 = vpop.f32.mrf.mxu0
        %v798 = vadd.f32 %v297, %v797
        %v799 = vpop.f32.mrf.mxu0
        %800 = vmatprep.mubr.bf16.mxu0 0
        %801 = vmatmul.mubr.bf16.gmra.mxu0 %v556
        %v802 = vpop.f32.mrf.mxu0
        %v803 = vadd.f32 %v297, %v802
        %v804 = vpop.f32.mrf.mxu0
        %v805 = vpop.f32.mrf.mxu0
        %v806 = vadd.f32 %v297, %v805
        %v807 = vpop.f32.mrf.mxu0
        %808 = vmatprep.mubr.bf16.mxu0 0
        %809 = vmatmul.mubr.bf16.gmra.mxu0 %v559
        %v810 = vpop.f32.mrf.mxu0
        %v811 = vadd.f32 %v297, %v810
        %v812 = vpop.f32.mrf.mxu0
        %v813 = vpop.f32.mrf.mxu0
        %v814 = vadd.f32 %v297, %v813
        %v815 = vpop.f32.mrf.mxu0
        %816 = vmatprep.mubr.bf16.mxu0 0
        %817 = vmatmul.mubr.bf16.gmra.mxu0 %v562
        %v818 = vpop.f32.mrf.mxu0
        %v819 = vadd.f32 %v297, %v818
        %v820 = vpop.f32.mrf.mxu0
        %v821 = vpop.f32.mrf.mxu0
        %v822 = vadd.f32 %v297, %v821
        %v823 = vpop.f32.mrf.mxu0
        %824 = vmatprep.mubr.bf16.mxu0 0
        %825 = vmatmul.mubr.bf16.gmra.mxu0 %v565
        %v826 = vpop.f32.mrf.mxu0
        %v827 = vadd.f32 %v297, %v826
        %v828 = vpop.f32.mrf.mxu0
        %v829 = vpop.f32.mrf.mxu0
        %v830 = vadd.f32 %v297, %v829
        %v831 = vpop.f32.mrf.mxu0
        %832 = vmatprep.mubr.bf16.mxu0 0
        %833 = vmatmul.mubr.bf16.gmra.mxu0 %v568
        %v834 = vpop.f32.mrf.mxu0
        %v835 = vadd.f32 %v297, %v834
        %v836 = vpop.f32.mrf.mxu0
        %v837 = vpop.f32.mrf.mxu0
        %v838 = vadd.f32 %v297, %v837
        %v839 = vpop.f32.mrf.mxu0
        %840 = vmatprep.mubr.bf16.mxu0 0
        %841 = vmatmul.mubr.bf16.gmra.mxu0 %v571
        %v842 = vpop.f32.mrf.mxu0
        %v843 = vadd.f32 %v297, %v842
        %v844 = vpop.f32.mrf.mxu0
        %v845 = vpop.f32.mrf.mxu0
        %v846 = vadd.f32 %v297, %v845
        %v847 = vpop.f32.mrf.mxu0
        %848 = vmatprep.mubr.bf16.mxu0 0
        %849 = vmatmul.mubr.bf16.gmra.mxu0 %v574
        %v850 = vpop.f32.mrf.mxu0
        %v851 = vadd.f32 %v297, %v850
        %v852 = vpop.f32.mrf.mxu0
        %v853 = vpop.f32.mrf.mxu0
        %v854 = vadd.f32 %v297, %v853
        %v855 = vpop.f32.mrf.mxu0
        %856 = vmatprep.mubr.bf16.mxu0 0
        %857 = vmatmul.mubr.bf16.gmra.mxu0 %v577
        %v858 = vpop.f32.mrf.mxu0
        %v859 = vadd.f32 %v297, %v858
        %v860 = vpop.f32.mrf.mxu0
        %v861 = vpop.f32.mrf.mxu0
        %v862 = vadd.f32 %v297, %v861
        %v863 = vpop.f32.mrf.mxu0
        %864 = vmatprep.mubr.bf16.mxu0 0
        %865 = vmatmul.mubr.bf16.gmra.mxu0 %v580
        %v866 = vpop.f32.mrf.mxu0
        %v867 = vadd.f32 %v297, %v866
        %v868 = vpop.f32.mrf.mxu0
        %v869 = vpop.f32.mrf.mxu0
        %v870 = vadd.f32 %v297, %v869
        %v871 = vpop.f32.mrf.mxu0
        %872 = vmatprep.mubr.bf16.mxu0 0
        %873 = vmatmul.mubr.bf16.gmra.mxu0 %v583
        %v874 = vpop.f32.mrf.mxu0
        %v875 = vadd.f32 %v297, %v874
        %v876 = vpop.f32.mrf.mxu0
        %v877 = vpop.f32.mrf.mxu0
        %v878 = vadd.f32 %v297, %v877
        %v879 = vpop.f32.mrf.mxu0
        %880 = vmatprep.mubr.bf16.mxu0 0
        %881 = vmatmul.mubr.bf16.gmra.mxu0 %v586
        %v882 = vpop.f32.mrf.mxu0
        %v883 = vadd.f32 %v297, %v882
        %v884 = vpop.f32.mrf.mxu0
        %v885 = vpop.f32.mrf.mxu0
        %v886 = vadd.f32 %v297, %v885
        %v887 = vpop.f32.mrf.mxu0
        %888 = vmatprep.mubr.bf16.mxu0 0
        %889 = vmatmul.mubr.bf16.gmra.mxu0 %v589
        %v890 = vpop.f32.mrf.mxu0
        %v891 = vadd.f32 %v297, %v890
        %v892 = vpop.f32.mrf.mxu0
        %v893 = vpop.f32.mrf.mxu0
        %v894 = vadd.f32 %v297, %v893
        %v895 = vpop.f32.mrf.mxu0
        %896 = vmatprep.mubr.bf16.mxu0 0
        %897 = vmatmul.mubr.bf16.gmra.mxu0 %v592
        %v898 = vpop.f32.mrf.mxu0
        %v899 = vadd.f32 %v297, %v898
        %v900 = vpop.f32.mrf.mxu0
        %v901 = vpop.f32.mrf.mxu0
        %v902 = vadd.f32 %v297, %v901
        %v903 = vpop.f32.mrf.mxu0
        %904 = vmatprep.mubr.bf16.mxu0 0
        %905 = vmatmul.mubr.bf16.gmra.mxu0 %v595
        %v906 = vpop.f32.mrf.mxu0
        %v907 = vadd.f32 %v297, %v906
        %v908 = vpop.f32.mrf.mxu0
        %v909 = vpop.f32.mrf.mxu0
        %v910 = vadd.f32 %v297, %v909
        %v911 = vpop.f32.mrf.mxu0
        %912 = vmatprep.mubr.bf16.mxu0 0
        %913 = vmatmul.mubr.bf16.gmra.mxu0 %v598
        %v914 = vpop.f32.mrf.mxu0
        %v915 = vadd.f32 %v297, %v914
        %v916 = vpop.f32.mrf.mxu0
        %v917 = vpop.f32.mrf.mxu0
        %v918 = vadd.f32 %v297, %v917
        %v919 = vpop.f32.mrf.mxu0
        %920 = vdwg.mxu0
        %vm921 = vcmp.ge.f32.partialorder %v635, 0.0
        %vm922 = vcmp.ge.f32.partialorder %v638, 0.0
        %vm923 = vcmp.ge.f32.partialorder %v643, 0.0
        %vm924 = vcmp.ge.f32.partialorder %v646, 0.0
        %vm925 = vcmp.ge.f32.partialorder %v651, 0.0
        %vm926 = vcmp.ge.f32.partialorder %v654, 0.0
        %vm927 = vcmp.ge.f32.partialorder %v659, 0.0
        %vm928 = vcmp.ge.f32.partialorder %v662, 0.0
        %vm929 = vcmp.ge.f32.partialorder %v667, 0.0
        %vm930 = vcmp.ge.f32.partialorder %v670, 0.0
        %vm931 = vcmp.ge.f32.partialorder %v675, 0.0
        %vm932 = vcmp.ge.f32.partialorder %v678, 0.0
        %vm933 = vcmp.ge.f32.partialorder %v683, 0.0
        %vm934 = vcmp.ge.f32.partialorder %v686, 0.0
        %vm935 = vcmp.ge.f32.partialorder %v691, 0.0
        %vm936 = vcmp.ge.f32.partialorder %v694, 0.0
        %vm937 = vcmp.ge.f32.partialorder %v699, 0.0
        %vm938 = vcmp.ge.f32.partialorder %v702, 0.0
        %vm939 = vcmp.ge.f32.partialorder %v707, 0.0
        %vm940 = vcmp.ge.f32.partialorder %v710, 0.0
        %vm941 = vcmp.ge.f32.partialorder %v715, 0.0
        %vm942 = vcmp.ge.f32.partialorder %v718, 0.0
        %vm943 = vcmp.ge.f32.partialorder %v723, 0.0
        %vm944 = vcmp.ge.f32.partialorder %v726, 0.0
        %vm945 = vcmp.ge.f32.partialorder %v731, 0.0
        %vm946 = vcmp.ge.f32.partialorder %v734, 0.0
        %vm947 = vcmp.ge.f32.partialorder %v739, 0.0
        %vm948 = vcmp.ge.f32.partialorder %v742, 0.0
        %vm949 = vcmp.ge.f32.partialorder %v747, 0.0
        %vm950 = vcmp.ge.f32.partialorder %v750, 0.0
        %vm951 = vcmp.ge.f32.partialorder %v755, 0.0
        %vm952 = vcmp.ge.f32.partialorder %v758, 0.0
        %vm953 = vcmp.ge.f32.partialorder %v763, 0.0
        %vm954 = vcmp.ge.f32.partialorder %v766, 0.0
        %vm955 = vcmp.ge.f32.partialorder %v771, 0.0
        %vm956 = vcmp.ge.f32.partialorder %v774, 0.0
        %vm957 = vcmp.ge.f32.partialorder %v779, 0.0
        %vm958 = vcmp.ge.f32.partialorder %v782, 0.0
        %vm959 = vcmp.ge.f32.partialorder %v787, 0.0
        %vm960 = vcmp.ge.f32.partialorder %v790, 0.0
        %vm961 = vcmp.ge.f32.partialorder %v795, 0.0
        %vm962 = vcmp.ge.f32.partialorder %v798, 0.0
        %vm963 = vcmp.ge.f32.partialorder %v803, 0.0
        %vm964 = vcmp.ge.f32.partialorder %v806, 0.0
        %vm965 = vcmp.ge.f32.partialorder %v811, 0.0
        %vm966 = vcmp.ge.f32.partialorder %v814, 0.0
        %vm967 = vcmp.ge.f32.partialorder %v819, 0.0
        %vm968 = vcmp.ge.f32.partialorder %v822, 0.0
        %vm969 = vcmp.ge.f32.partialorder %v827, 0.0
        %vm970 = vcmp.ge.f32.partialorder %v830, 0.0
        %vm971 = vcmp.ge.f32.partialorder %v835, 0.0
        %vm972 = vcmp.ge.f32.partialorder %v838, 0.0
        %vm973 = vcmp.ge.f32.partialorder %v843, 0.0
        %vm974 = vcmp.ge.f32.partialorder %v846, 0.0
        %vm975 = vcmp.ge.f32.partialorder %v851, 0.0
        %vm976 = vcmp.ge.f32.partialorder %v854, 0.0
        %vm977 = vcmp.ge.f32.partialorder %v859, 0.0
        %vm978 = vcmp.ge.f32.partialorder %v862, 0.0
        %vm979 = vcmp.ge.f32.partialorder %v867, 0.0
        %vm980 = vcmp.ge.f32.partialorder %v870, 0.0
        %vm981 = vcmp.ge.f32.partialorder %v875, 0.0
        %vm982 = vcmp.ge.f32.partialorder %v878, 0.0
        %vm983 = vcmp.ge.f32.partialorder %v883, 0.0
        %vm984 = vcmp.ge.f32.partialorder %v886, 0.0
        %vm985 = vcmp.ge.f32.partialorder %v891, 0.0
        %vm986 = vcmp.ge.f32.partialorder %v894, 0.0
        %vm987 = vcmp.ge.f32.partialorder %v899, 0.0
        %vm988 = vcmp.ge.f32.partialorder %v902, 0.0
        %vm989 = vcmp.ge.f32.partialorder %v907, 0.0
        %vm990 = vcmp.ge.f32.partialorder %v910, 0.0
        %vm991 = vcmp.ge.f32.partialorder %v915, 0.0
        %vm992 = vcmp.ge.f32.partialorder %v918, 0.0
        %s993 = sld [smem:[#allocation2]]
        %v994 = vstv %s993
        %v995 = vmul.f32 %v994, %v635
        %v996 = vmul.f32 %v994, %v638
        %v997 = vmul.f32 %v994, %v643
        %v998 = vmul.f32 %v994, %v646
        %v999 = vmul.f32 %v994, %v651
        %v1000 = vmul.f32 %v994, %v654
        %v1001 = vmul.f32 %v994, %v659
        %v1002 = vmul.f32 %v994, %v662
        %v1003 = vmul.f32 %v994, %v667
        %v1004 = vmul.f32 %v994, %v670
        %v1005 = vmul.f32 %v994, %v675
        %v1006 = vmul.f32 %v994, %v678
        %v1007 = vmul.f32 %v994, %v683
        %v1008 = vmul.f32 %v994, %v686
        %v1009 = vmul.f32 %v994, %v691
        %v1010 = vmul.f32 %v994, %v694
        %v1011 = vmul.f32 %v994, %v699
        %v1012 = vmul.f32 %v994, %v702
        %v1013 = vmul.f32 %v994, %v707
        %v1014 = vmul.f32 %v994, %v710
        %v1015 = vmul.f32 %v994, %v715
        %v1016 = vmul.f32 %v994, %v718
        %v1017 = vmul.f32 %v994, %v723
        %v1018 = vmul.f32 %v994, %v726
        %v1019 = vmul.f32 %v994, %v731
        %v1020 = vmul.f32 %v994, %v734
        %v1021 = vmul.f32 %v994, %v739
        %v1022 = vmul.f32 %v994, %v742
        %v1023 = vmul.f32 %v994, %v747
        %v1024 = vmul.f32 %v994, %v750
        %v1025 = vmul.f32 %v994, %v755
        %v1026 = vmul.f32 %v994, %v758
        %v1027 = vmul.f32 %v994, %v763
        %v1028 = vmul.f32 %v994, %v766
        %v1029 = vmul.f32 %v994, %v771
        %v1030 = vmul.f32 %v994, %v774
        %v1031 = vmul.f32 %v994, %v779
        %v1032 = vmul.f32 %v994, %v782
        %v1033 = vmul.f32 %v994, %v787
        %v1034 = vmul.f32 %v994, %v790
        %v1035 = vmul.f32 %v994, %v795
        %v1036 = vmul.f32 %v994, %v798
        %v1037 = vmul.f32 %v994, %v803
        %v1038 = vmul.f32 %v994, %v806
        %v1039 = vmul.f32 %v994, %v811
        %v1040 = vmul.f32 %v994, %v814
        %v1041 = vmul.f32 %v994, %v819
        %v1042 = vmul.f32 %v994, %v822
        %v1043 = vmul.f32 %v994, %v827
        %v1044 = vmul.f32 %v994, %v830
        %v1045 = vmul.f32 %v994, %v835
        %v1046 = vmul.f32 %v994, %v838
        %v1047 = vmul.f32 %v994, %v843
        %v1048 = vmul.f32 %v994, %v846
        %v1049 = vmul.f32 %v994, %v851
        %v1050 = vmul.f32 %v994, %v854
        %v1051 = vmul.f32 %v994, %v859
        %v1052 = vmul.f32 %v994, %v862
        %v1053 = vmul.f32 %v994, %v867
        %v1054 = vmul.f32 %v994, %v870
        %v1055 = vmul.f32 %v994, %v875
        %v1056 = vmul.f32 %v994, %v878
        %v1057 = vmul.f32 %v994, %v883
        %v1058 = vmul.f32 %v994, %v886
        %v1059 = vmul.f32 %v994, %v891
        %v1060 = vmul.f32 %v994, %v894
        %v1061 = vmul.f32 %v994, %v899
        %v1062 = vmul.f32 %v994, %v902
        %v1063 = vmul.f32 %v994, %v907
        %v1064 = vmul.f32 %v994, %v910
        %v1065 = vmul.f32 %v994, %v915
        %v1066 = vmul.f32 %v994, %v918
        %v1067 = vsel %vm921, %v635, %v995
        %v1068 = vsel %vm922, %v638, %v996
        %v1069 = vsel %vm923, %v643, %v997
        %v1070 = vsel %vm924, %v646, %v998
        %v1071 = vsel %vm925, %v651, %v999
        %v1072 = vsel %vm926, %v654, %v1000
        %v1073 = vsel %vm927, %v659, %v1001
        %v1074 = vsel %vm928, %v662, %v1002
        %v1075 = vsel %vm929, %v667, %v1003
        %v1076 = vsel %vm930, %v670, %v1004
        %v1077 = vsel %vm931, %v675, %v1005
        %v1078 = vsel %vm932, %v678, %v1006
        %v1079 = vsel %vm933, %v683, %v1007
        %v1080 = vsel %vm934, %v686, %v1008
        %v1081 = vsel %vm935, %v691, %v1009
        %v1082 = vsel %vm936, %v694, %v1010
        %v1083 = vsel %vm937, %v699, %v1011
        %v1084 = vsel %vm938, %v702, %v1012
        %v1085 = vsel %vm939, %v707, %v1013
        %v1086 = vsel %vm940, %v710, %v1014
        %v1087 = vsel %vm941, %v715, %v1015
        %v1088 = vsel %vm942, %v718, %v1016
        %v1089 = vsel %vm943, %v723, %v1017
        %v1090 = vsel %vm944, %v726, %v1018
        %v1091 = vsel %vm945, %v731, %v1019
        %v1092 = vsel %vm946, %v734, %v1020
        %v1093 = vsel %vm947, %v739, %v1021
        %v1094 = vsel %vm948, %v742, %v1022
        %v1095 = vsel %vm949, %v747, %v1023
        %v1096 = vsel %vm950, %v750, %v1024
        %v1097 = vsel %vm951, %v755, %v1025
        %v1098 = vsel %vm952, %v758, %v1026
        %v1099 = vsel %vm953, %v763, %v1027
        %v1100 = vsel %vm954, %v766, %v1028
        %v1101 = vsel %vm955, %v771, %v1029
        %v1102 = vsel %vm956, %v774, %v1030
        %v1103 = vsel %vm957, %v779, %v1031
        %v1104 = vsel %vm958, %v782, %v1032
        %v1105 = vsel %vm959, %v787, %v1033
        %v1106 = vsel %vm960, %v790, %v1034
        %v1107 = vsel %vm961, %v795, %v1035
        %v1108 = vsel %vm962, %v798, %v1036
        %v1109 = vsel %vm963, %v803, %v1037
        %v1110 = vsel %vm964, %v806, %v1038
        %v1111 = vsel %vm965, %v811, %v1039
        %v1112 = vsel %vm966, %v814, %v1040
        %v1113 = vsel %vm967, %v819, %v1041
        %v1114 = vsel %vm968, %v822, %v1042
        %v1115 = vsel %vm969, %v827, %v1043
        %v1116 = vsel %vm970, %v830, %v1044
        %v1117 = vsel %vm971, %v835, %v1045
        %v1118 = vsel %vm972, %v838, %v1046
        %v1119 = vsel %vm973, %v843, %v1047
        %v1120 = vsel %vm974, %v846, %v1048
        %v1121 = vsel %vm975, %v851, %v1049
        %v1122 = vsel %vm976, %v854, %v1050
        %v1123 = vsel %vm977, %v859, %v1051
        %v1124 = vsel %vm978, %v862, %v1052
        %v1125 = vsel %vm979, %v867, %v1053
        %v1126 = vsel %vm980, %v870, %v1054
        %v1127 = vsel %vm981, %v875, %v1055
        %v1128 = vsel %vm982, %v878, %v1056
        %v1129 = vsel %vm983, %v883, %v1057
        %v1130 = vsel %vm984, %v886, %v1058
        %v1131 = vsel %vm985, %v891, %v1059
        %v1132 = vsel %vm986, %v894, %v1060
        %v1133 = vsel %vm987, %v899, %v1061
        %v1134 = vsel %vm988, %v902, %v1062
        %v1135 = vsel %vm989, %v907, %v1063
        %v1136 = vsel %vm990, %v910, %v1064
        %v1137 = vsel %vm991, %v915, %v1065
        %v1138 = vsel %vm992, %v918, %v1066
        %v1139 = vmax.f32 %v1067, %v1085
        %v1140 = vmax.f32 %v1068, %v1086
        %v1141 = vmax.f32 %v1069, %v1087
        %v1142 = vmax.f32 %v1070, %v1088
        %v1143 = vmax.f32 %v1071, %v1089
        %v1144 = vmax.f32 %v1072, %v1090
        %v1145 = vmax.f32 %v1073, %v1091
        %v1146 = vmax.f32 %v1074, %v1092
        %v1147 = vmax.f32 %v1075, %v1093
        %v1148 = vmax.f32 %v1076, %v1094
        %v1149 = vmax.f32 %v1077, %v1095
        %v1150 = vmax.f32 %v1078, %v1096
        %v1151 = vmax.f32 %v1079, %v1097
        %v1152 = vmax.f32 %v1080, %v1098
        %v1153 = vmax.f32 %v1081, %v1099
        %v1154 = vmax.f32 %v1082, %v1100
        %v1155 = vmax.f32 %v1083, %v1101
        %v1156 = vmax.f32 %v1084, %v1102
        %v1157 = vmax.f32 %v1103, %v1121
        %v1158 = vmax.f32 %v1104, %v1122
        %v1159 = vmax.f32 %v1105, %v1123
        %v1160 = vmax.f32 %v1106, %v1124
        %v1161 = vmax.f32 %v1107, %v1125
        %v1162 = vmax.f32 %v1108, %v1126
        %v1163 = vmax.f32 %v1109, %v1127
        %v1164 = vmax.f32 %v1110, %v1128
        %v1165 = vmax.f32 %v1111, %v1129
        %v1166 = vmax.f32 %v1112, %v1130
        %v1167 = vmax.f32 %v1113, %v1131
        %v1168 = vmax.f32 %v1114, %v1132
        %v1169 = vmax.f32 %v1115, %v1133
        %v1170 = vmax.f32 %v1116, %v1134
        %v1171 = vmax.f32 %v1117, %v1135
        %v1172 = vmax.f32 %v1118, %v1136
        %v1173 = vmax.f32 %v1119, %v1137
        %v1174 = vmax.f32 %v1120, %v1138
        %v1175 = vmax.f32 %v1139, %v1157
        %v1176 = vmax.f32 %v1140, %v1158
        %v1177 = vmax.f32 %v1141, %v1159
        %v1178 = vmax.f32 %v1142, %v1160
        %v1179 = vmax.f32 %v1143, %v1161
        %v1180 = vmax.f32 %v1144, %v1162
        %v1181 = vmax.f32 %v1145, %v1163
        %v1182 = vmax.f32 %v1146, %v1164
        %v1183 = vmax.f32 %v1147, %v1165
        %v1184 = vmax.f32 %v1148, %v1166
        %v1185 = vmax.f32 %v1149, %v1167
        %v1186 = vmax.f32 %v1150, %v1168
        %v1187 = vmax.f32 %v1151, %v1169
        %v1188 = vmax.f32 %v1152, %v1170
        %v1189 = vmax.f32 %v1153, %v1171
        %v1190 = vmax.f32 %v1154, %v1172
        %v1191 = vmax.f32 %v1155, %v1173
        %v1192 = vmax.f32 %v1156, %v1174
        %v1193 = vpack.c.bf16 %v1176, %v1175
        %v1194 = vpack.c.bf16 %v1178, %v1177
        %v1195 = vpack.c.bf16 %v1180, %v1179
        %v1196 = vpack.c.bf16 %v1182, %v1181
        %v1197 = vpack.c.bf16 %v1184, %v1183
        %v1198 = vpack.c.bf16 %v1186, %v1185
        %v1199 = vpack.c.bf16 %v1188, %v1187
        %v1200 = vpack.c.bf16 %v1190, %v1189
        %v1201 = vpack.c.bf16 %v1192, %v1191
        %v1211 = vunpack.c.l.b16 %v1193
        %v1212 = vunpack.c.h.b16 %v1193
        %v1213 = vunpack.c.l.b16 %v1194
        %v1214 = vunpack.c.h.b16 %v1194
        %v1215 = vunpack.c.l.b16 %v1195
        %v1216 = vunpack.c.h.b16 %v1195
        %v1217 = vunpack.c.l.b16 %v1196
        %v1218 = vunpack.c.h.b16 %v1196
        %v1219 = vunpack.c.l.b16 %v1197
        %v1220 = vunpack.c.h.b16 %v1197
        %v1221 = vunpack.c.l.b16 %v1198
        %v1222 = vunpack.c.h.b16 %v1198
        %v1223 = vunpack.c.l.b16 %v1199
        %v1224 = vunpack.c.h.b16 %v1199
        %v1225 = vunpack.c.l.b16 %v1200
        %v1226 = vunpack.c.h.b16 %v1200
        %v1227 = vunpack.c.l.b16 %v1201
        %v1228 = vunpack.c.h.b16 %v1201
        %v1229 = vpack.c.b16 %v1211, %v1211
        %v1230 = vpack.c.b16 %v1212, %v1212
        %v1231 = vpack.c.b16 %v1213, %v1213
        %v1232 = vpack.c.b16 %v1214, %v1214
        %v1233 = vpack.c.b16 %v1215, %v1215
        %v1234 = vpack.c.b16 %v1216, %v1216
        %v1235 = vpack.c.b16 %v1217, %v1217
        %v1236 = vpack.c.b16 %v1218, %v1218
        %v1237 = vpack.c.b16 %v1219, %v1219
        %v1238 = vpack.c.b16 %v1220, %v1220
        %v1239 = vpack.c.b16 %v1221, %v1221
        %v1240 = vpack.c.b16 %v1222, %v1222
        %v1241 = vpack.c.b16 %v1223, %v1223
        %v1242 = vpack.c.b16 %v1224, %v1224
        %v1243 = vpack.c.b16 %v1225, %v1225
        %v1244 = vpack.c.b16 %v1226, %v1226
        %v1245 = vpack.c.b16 %v1227, %v1227
        %v1246 = vpack.c.b16 %v1228, %v1228
        %vm1265 = vcmask 257024
        %1266 = vst.msk [vmem:[%s213] sm:$0xf] %vm1265, %v1229
        %1267 = vst.msk [vmem:[%s213 + $0x4] sm:$0xf] %vm1265, %v1230
        %1268 = vst.msk [vmem:[%s213 + $0x8] sm:$0xf] %vm1265, %v1231
        %1269 = vst.msk [vmem:[%s213 + $0xc] sm:$0xf] %vm1265, %v1232
        %1270 = vst.msk [vmem:[%s213 + $0x10] sm:$0xf] %vm1265, %v1233
        %1271 = vst.msk [vmem:[%s213 + $0x14] sm:$0xf] %vm1265, %v1234
        %1272 = vst.msk [vmem:[%s213 + $0x18] sm:$0xf] %vm1265, %v1235
        %1273 = vst.msk [vmem:[%s213 + $0x1c] sm:$0xf] %vm1265, %v1236
        %1274 = vst.msk [vmem:[%s213 + $0x20] sm:$0xf] %vm1265, %v1237
        %1275 = vst.msk [vmem:[%s213 + $0x24] sm:$0xf] %vm1265, %v1238
        %1276 = vst.msk [vmem:[%s213 + $0x28] sm:$0xf] %vm1265, %v1239
        %1277 = vst.msk [vmem:[%s213 + $0x2c] sm:$0xf] %vm1265, %v1240
        %1278 = vst.msk [vmem:[%s213 + $0x30] sm:$0xf] %vm1265, %v1241
        %1279 = vst.msk [vmem:[%s213 + $0x34] sm:$0xf] %vm1265, %v1242
        %1280 = vst.msk [vmem:[%s213 + $0x38] sm:$0xf] %vm1265, %v1243
        %1281 = vst.msk [vmem:[%s213 + $0x3c] sm:$0xf] %vm1265, %v1244
        %1282 = vst.msk [vmem:[%s213 + $0x40] sm:$0xf] %vm1265, %v1245
        %1283 = vst.msk [vmem:[%s213 + $0x44] sm:$0xf] %vm1265, %v1246
        %s1284 = smul.u32 18, %s16
        %p1285 = scmp.lt.s32.totalorder %s1284, 35
        %s1286 = scalar_select %p1285, %s1284, 35
        %s1287 = smul.addr %s1286, 4
        %s1288 = scalar_lea.vmem %s4, %s1287
        // Predicated region
        $region41: #{embedding_net_l2.2} parent=35 // pred_check
          %p1289 = pneg %p123
        $region42: #{embedding_net_l2.2} parent=35 // pred_check_branch
          %1291 = sbr.rel (%p1289) target = $region44
        $region43: #{embedding_net_l2.2} parent=35 // pred_region
          %s1292 = smul.u32 18, %s16
        $region44: #{embedding_net_l2.2} parent=35 // pred_fallthru
          _
      $region36: #{embedding_net_l2.2} parent=5 // pred_fallthru
        _
      %p1293 = scmp.le.s32.totalorder 2, %s11
      // Predicated region
      $region45: #{embedding_net_l2.2} parent=5 // pred_check
        %p1294 = pneg %p1293
      $region46: #{embedding_net_l2.2} parent=5 // pred_check_branch
        %1296 = sbr.rel (%p1294) target = $region48
      $region47: #{embedding_net_l2.2} parent=5 // pred_region
        %s1297 = ssub.s32 %s11, 2
        // Predicated region
        $region49: #{embedding_net_l2.2} parent=47 // pred_check
          %p1298 = pneg %p129
        $region50: #{embedding_net_l2.2} parent=47 // pred_check_branch
          %1300 = sbr.rel (%p1298) target = $region52
        $region51: #{embedding_net_l2.2} parent=47 // pred_region
          %s1301 = smul.u32 18, %s17
          %p1302 = scmp.lt.s32.totalorder %s1301, 35
          %s1303 = scalar_select %p1302, %s1301, 35
          %s1304 = smul.addr %s1303, 4
          %s1305 = scalar_lea.vmem %s4, %s1304
        $region52: #{embedding_net_l2.2} parent=47 // pred_fallthru
          _
      $region48: #{embedding_net_l2.2} parent=5 // pred_fallthru
        _
    $region6: #{embedding_net_l2.2} parent=1 // loop_footer
      %s15 = sadd.s32 1, %s11
    $region7: #{embedding_net_l2.2} parent=1 // loop_footer_branch
      %10 = sbr.rel target = $region3
    $region8: #{embedding_net_l2.2} parent=1 // loop_exit
      _
    %1306 = vsyncpa [#allocation3], 1
    %s1307 = scalar_lea.sflag [#allocation3], 1
    %1308 = vsyncpa %s1307, 1

// kernel: embedding_net_l2.3
$region0: #{embedding_net_l2.3}
  #allocation0 [shape = 'u32[]', space=smem, size = 0x4, offset = 0x4, fixed_abs, tag = 'smem constant byte address 0x4 - core index']
  #allocation1 [shape = 'u32[144,128]{1,0:T(1,128)}', space=vmem, size = 0x12000, scoped, tag = 'internal scratch']
  %s0 = inlined_call_operand.vmem [shape: bf16[128,800], index: 0, kind: input, shape index: {}]
  %s1 = inlined_call_operand.vmem [shape: bf16[800,64], index: 1, kind: input, shape index: {}]
  %s2 = inlined_call_operand.vmem [shape: f32[1,64], index: 2, kind: input, shape index: {}]
  %s3 = inlined_call_operand.vmem [shape: bf16[1024,256], index: 3, kind: input, shape index: {}]
  %s4 = inlined_call_operand.vmem [shape: f32[1,256], index: 4, kind: input, shape index: {}]
  %s5 = inlined_call_operand.vmem [shape: bf16[256,256], index: 5, kind: input, shape index: {}]
  %s6 = inlined_call_operand.vmem [shape: f32[1,256], index: 6, kind: input, shape index: {}]
  %s7 = inlined_call_operand.vmem [shape: bf16[256,128], index: 7, kind: input, shape index: {}]
  %s8 = inlined_call_operand.vmem [shape: f32[1,128], index: 8, kind: input, shape index: {}]
  %s9 = inlined_call_operand.vmem [shape: f32[4], index: 9, kind: input, shape index: {}]
  %s10 = inlined_call_operand.vmem [shape: f32[16,128], index: 10, kind: output, shape index: {}]
  %s11 = sld [smem:[#allocation0]]
  $region77: #{embedding_net_l2.3} parent=0
    _
  %s13 = ssub.s32 1, %s11
  %s14 = scalar_select 0, %s13, %s11
  $region1: #{embedding_net_l2.3} parent=0
    #allocation2 [shape = 'u8[512]{0}', space=smem, size = 0x200, scoped, tag = 'input window, operand 9, single buffered']
    #allocation3 [shape = 's32[2]{0}', space=sflag, size = 0x8, scoped, tag = 'scoped memory for embedding_net_l2.3']
    %15 = vsyncpa [#allocation3], 0
    loop: start=0, step=1, limit=4
    $region2: #{embedding_net_l2.3} parent=1 // loop_pre_header
      _
    $region3: #{embedding_net_l2.3} parent=1 // loop_header
      %s17 = sphi 0, %s21
      %p18 = scmp.ge.s32.totalorder %s17, 4
      %s27 = sphi 0, %s29
      %s30 = sphi 0, %s27
      %s31 = sphi 0, %s30
      %s47 = sphi 0, %s31
      %s51 = sphi 0, %s51
      %s53 = sphi 0, %s51
      %s54 = sphi 0, %s53
      %s68 = sphi 0, %s54
      %s72 = sphi 0, %s72
      %s74 = sphi 0, %s72
      %s75 = sphi 0, %s74
      %s89 = sphi 0, %s75
      %s93 = sphi 0, %s93
      %s95 = sphi 0, %s93
      %s96 = sphi 0, %s95
      %s110 = sphi 0, %s96
      %s114 = sphi 0, %s114
      %s116 = sphi 0, %s114
      %s117 = sphi 0, %s116
      %s131 = sphi 0, %s117
      %s135 = sphi 0, %s135
      %s137 = sphi 0, %s135
      %s138 = sphi 0, %s137
      %s152 = sphi 0, %s138
      %s156 = sphi 0, %s156
      %s158 = sphi 0, %s156
      %s159 = sphi 0, %s158
      %s173 = sphi 0, %s159
      %s177 = sphi 0, %s177
      %s179 = sphi 0, %s177
      %s180 = sphi 0, %s179
      %s194 = sphi 0, %s180
      %s198 = sphi 0, %s198
      %s200 = sphi 0, %s198
      %s201 = sphi 0, %s200
      %s215 = sphi 0, %s201
      %s219 = sphi 0, %s219
      %s221 = sphi 0, %s219
      %s222 = sphi 0, %s221
      %s236 = sphi 0, %s222
      %s242 = sphi 0, %s244
      %s245 = sphi 0, %s242
      %s246 = sphi 0, %s245
      %s262 = sphi 0, %s246
    $region4: #{embedding_net_l2.3} parent=1 // loop_header_branch
      %20 = sbr.rel (%p18) target = $region8
    $region5: #{embedding_net_l2.3} parent=1 // loop_body
      %s22 = ssub.s32 %s17, 1
      %s23 = ssub.s32 %s17, 2
      %s24 = sadd.s32 %s17, 1
      %s25 = ssub.s32 %s17, %s24
      %p26 = scmp.eq.s32.totalorder %s25, 0
      %s28 = sadd.s32 %s27, 1
      %s29 = scalar_select %p26, %s27, %s28
      %p32 = pneg %p26
      %p33 = scmp.eq.s32.totalorder %s17, 1
      %p34 = por %p32, %p33
      %p35 = scmp.ne.s32.totalorder %s27, %s30
      %p36 = scmp.eq.s32.totalorder %s17, 0
      %p37 = por %p35, %p36
      %p38 = scmp.ne.s32.totalorder %s27, %s30
      %p39 = scmp.eq.s32.totalorder %s22, 1
      %p40 = por %p38, %p39
      %p41 = scmp.ne.s32.totalorder %s30, %s31
      %p42 = scmp.eq.s32.totalorder %s22, 0
      %p43 = por %p41, %p42
      %p44 = scmp.ne.s32.totalorder %s30, %s31
      %p45 = scmp.eq.s32.totalorder %s23, 1
      %p46 = por %p44, %p45
      %p48 = scmp.ne.s32.totalorder %s31, %s47
      %p49 = scmp.eq.s32.totalorder %s23, 0
      %p50 = por %p48, %p49
      %s52 = sadd.s32 %s51, 1
      %p55 = scmp.eq.s32.totalorder %s17, 1
      %p56 = scmp.ne.s32.totalorder %s51, %s53
      %p57 = scmp.eq.s32.totalorder %s17, 0
      %p58 = por %p56, %p57
      %p59 = scmp.ne.s32.totalorder %s51, %s53
      %p60 = scmp.eq.s32.totalorder %s22, 1
      %p61 = por %p59, %p60
      %p62 = scmp.ne.s32.totalorder %s53, %s54
      %p63 = scmp.eq.s32.totalorder %s22, 0
      %p64 = por %p62, %p63
      %p65 = scmp.ne.s32.totalorder %s53, %s54
      %p66 = scmp.eq.s32.totalorder %s23, 1
      %p67 = por %p65, %p66
      %p69 = scmp.ne.s32.totalorder %s54, %s68
      %p70 = scmp.eq.s32.totalorder %s23, 0
      %p71 = por %p69, %p70
      %s73 = sadd.s32 %s72, 1
      %p76 = scmp.eq.s32.totalorder %s17, 1
      %p77 = scmp.ne.s32.totalorder %s72, %s74
      %p78 = scmp.eq.s32.totalorder %s17, 0
      %p79 = por %p77, %p78
      %p80 = scmp.ne.s32.totalorder %s72, %s74
      %p81 = scmp.eq.s32.totalorder %s22, 1
      %p82 = por %p80, %p81
      %p83 = scmp.ne.s32.totalorder %s74, %s75
      %p84 = scmp.eq.s32.totalorder %s22, 0
      %p85 = por %p83, %p84
      %p86 = scmp.ne.s32.totalorder %s74, %s75
      %p87 = scmp.eq.s32.totalorder %s23, 1
      %p88 = por %p86, %p87
      %p90 = scmp.ne.s32.totalorder %s75, %s89
      %p91 = scmp.eq.s32.totalorder %s23, 0
      %p92 = por %p90, %p91
      %s94 = sadd.s32 %s93, 1
      %p97 = scmp.eq.s32.totalorder %s17, 1
      %p98 = scmp.ne.s32.totalorder %s93, %s95
      %p99 = scmp.eq.s32.totalorder %s17, 0
      %p100 = por %p98, %p99
      %p101 = scmp.ne.s32.totalorder %s93, %s95
      %p102 = scmp.eq.s32.totalorder %s22, 1
      %p103 = por %p101, %p102
      %p104 = scmp.ne.s32.totalorder %s95, %s96
      %p105 = scmp.eq.s32.totalorder %s22, 0
      %p106 = por %p104, %p105
      %p107 = scmp.ne.s32.totalorder %s95, %s96
      %p108 = scmp.eq.s32.totalorder %s23, 1
      %p109 = por %p107, %p108
      %p111 = scmp.ne.s32.totalorder %s96, %s110
      %p112 = scmp.eq.s32.totalorder %s23, 0
      %p113 = por %p111, %p112
      %s115 = sadd.s32 %s114, 1
      %p118 = scmp.eq.s32.totalorder %s17, 1
      %p119 = scmp.ne.s32.totalorder %s114, %s116
      %p120 = scmp.eq.s32.totalorder %s17, 0
      %p121 = por %p119, %p120
      %p122 = scmp.ne.s32.totalorder %s114, %s116
      %p123 = scmp.eq.s32.totalorder %s22, 1
      %p124 = por %p122, %p123
      %p125 = scmp.ne.s32.totalorder %s116, %s117
      %p126 = scmp.eq.s32.totalorder %s22, 0
      %p127 = por %p125, %p126
      %p128 = scmp.ne.s32.totalorder %s116, %s117
      %p129 = scmp.eq.s32.totalorder %s23, 1
      %p130 = por %p128, %p129
      %p132 = scmp.ne.s32.totalorder %s117, %s131
      %p133 = scmp.eq.s32.totalorder %s23, 0
      %p134 = por %p132, %p133
      %s136 = sadd.s32 %s135, 1
      %p139 = scmp.eq.s32.totalorder %s17, 1
      %p140 = scmp.ne.s32.totalorder %s135, %s137
      %p141 = scmp.eq.s32.totalorder %s17, 0
      %p142 = por %p140, %p141
      %p143 = scmp.ne.s32.totalorder %s135, %s137
      %p144 = scmp.eq.s32.totalorder %s22, 1
      %p145 = por %p143, %p144
      %p146 = scmp.ne.s32.totalorder %s137, %s138
      %p147 = scmp.eq.s32.totalorder %s22, 0
      %p148 = por %p146, %p147
      %p149 = scmp.ne.s32.totalorder %s137, %s138
      %p150 = scmp.eq.s32.totalorder %s23, 1
      %p151 = por %p149, %p150
      %p153 = scmp.ne.s32.totalorder %s138, %s152
      %p154 = scmp.eq.s32.totalorder %s23, 0
      %p155 = por %p153, %p154
      %s157 = sadd.s32 %s156, 1
      %p160 = scmp.eq.s32.totalorder %s17, 1
      %p161 = scmp.ne.s32.totalorder %s156, %s158
      %p162 = scmp.eq.s32.totalorder %s17, 0
      %p163 = por %p161, %p162
      %p164 = scmp.ne.s32.totalorder %s156, %s158
      %p165 = scmp.eq.s32.totalorder %s22, 1
      %p166 = por %p164, %p165
      %p167 = scmp.ne.s32.totalorder %s158, %s159
      %p168 = scmp.eq.s32.totalorder %s22, 0
      %p169 = por %p167, %p168
      %p170 = scmp.ne.s32.totalorder %s158, %s159
      %p171 = scmp.eq.s32.totalorder %s23, 1
      %p172 = por %p170, %p171
      %p174 = scmp.ne.s32.totalorder %s159, %s173
      %p175 = scmp.eq.s32.totalorder %s23, 0
      %p176 = por %p174, %p175
      %s178 = sadd.s32 %s177, 1
      %p181 = scmp.eq.s32.totalorder %s17, 1
      %p182 = scmp.ne.s32.totalorder %s177, %s179
      %p183 = scmp.eq.s32.totalorder %s17, 0
      %p184 = por %p182, %p183
      %p185 = scmp.ne.s32.totalorder %s177, %s179
      %p186 = scmp.eq.s32.totalorder %s22, 1
      %p187 = por %p185, %p186
      %p188 = scmp.ne.s32.totalorder %s179, %s180
      %p189 = scmp.eq.s32.totalorder %s22, 0
      %p190 = por %p188, %p189
      %p191 = scmp.ne.s32.totalorder %s179, %s180
      %p192 = scmp.eq.s32.totalorder %s23, 1
      %p193 = por %p191, %p192
      %p195 = scmp.ne.s32.totalorder %s180, %s194
      %p196 = scmp.eq.s32.totalorder %s23, 0
      %p197 = por %p195, %p196
      %s199 = sadd.s32 %s198, 1
      %p202 = scmp.eq.s32.totalorder %s17, 1
      %p203 = scmp.ne.s32.totalorder %s198, %s200
      %p204 = scmp.eq.s32.totalorder %s17, 0
      %p205 = por %p203, %p204
      %p206 = scmp.ne.s32.totalorder %s198, %s200
      %p207 = scmp.eq.s32.totalorder %s22, 1
      %p208 = por %p206, %p207
      %p209 = scmp.ne.s32.totalorder %s200, %s201
      %p210 = scmp.eq.s32.totalorder %s22, 0
      %p211 = por %p209, %p210
      %p212 = scmp.ne.s32.totalorder %s200, %s201
      %p213 = scmp.eq.s32.totalorder %s23, 1
      %p214 = por %p212, %p213
      %p216 = scmp.ne.s32.totalorder %s201, %s215
      %p217 = scmp.eq.s32.totalorder %s23, 0
      %p218 = por %p216, %p217
      %s220 = sadd.s32 %s219, 1
      %p223 = scmp.eq.s32.totalorder %s17, 1
      %p224 = scmp.ne.s32.totalorder %s219, %s221
      %p225 = scmp.eq.s32.totalorder %s17, 0
      %p226 = por %p224, %p225
      %p227 = scmp.ne.s32.totalorder %s219, %s221
      %p228 = scmp.eq.s32.totalorder %s22, 1
      %p229 = por %p227, %p228
      %p230 = scmp.ne.s32.totalorder %s221, %s222
      %p231 = scmp.eq.s32.totalorder %s22, 0
      %p232 = por %p230, %p231
      %p233 = scmp.ne.s32.totalorder %s221, %s222
      %p234 = scmp.eq.s32.totalorder %s23, 1
      %p235 = por %p233, %p234
      %p237 = scmp.ne.s32.totalorder %s222, %s236
      %p238 = scmp.eq.s32.totalorder %s23, 0
      %p239 = por %p237, %p238
      %s240 = ssub.s32 %s17, %s24
      %p241 = scmp.eq.s32.totalorder %s240, 0
      %s243 = sadd.s32 %s242, 1
      %s244 = scalar_select %p241, %s242, %s243
      %p247 = pneg %p241
      %p248 = scmp.eq.s32.totalorder %s17, 1
      %p249 = por %p247, %p248
      %p250 = scmp.ne.s32.totalorder %s242, %s245
      %p251 = scmp.eq.s32.totalorder %s17, 0
      %p252 = por %p250, %p251
      %p253 = scmp.ne.s32.totalorder %s242, %s245
      %p254 = scmp.eq.s32.totalorder %s22, 1
      %p255 = por %p253, %p254
      %p256 = scmp.ne.s32.totalorder %s245, %s246
      %p257 = scmp.eq.s32.totalorder %s22, 0
      %p258 = por %p256, %p257
      %p259 = scmp.ne.s32.totalorder %s245, %s246
      %p260 = scmp.eq.s32.totalorder %s23, 1
      %p261 = por %p259, %p260
      %p263 = scmp.ne.s32.totalorder %s246, %s262
      %p264 = scmp.eq.s32.totalorder %s23, 0
      %p265 = por %p263, %p264
      %p266 = scmp.le.s32.totalorder 1, %s17
      %p267 = scmp.lt.s32.totalorder %s17, 3
      %p268 = pnand %p266, %p267
      %p269 = pneg %p268
      // Predicated region
      $region9: #{embedding_net_l2.3} parent=5 // pred_check
        _
      $region10: #{embedding_net_l2.3} parent=5 // pred_check_branch
        %271 = sbr.rel (%p268) target = $region12
      $region11: #{embedding_net_l2.3} parent=5 // pred_region
        %s272 = ssub.s32 %s17, 1
        // Predicated region
        $region13: #{embedding_net_l2.3} parent=11 // pred_check
          %p273 = pneg %p64
        $region14: #{embedding_net_l2.3} parent=11 // pred_check_branch
          %275 = sbr.rel (%p273) target = $region16
        $region15: #{embedding_net_l2.3} parent=11 // pred_region
          _
        $region16: #{embedding_net_l2.3} parent=11 // pred_fallthru
          _
        // Predicated region
        $region17: #{embedding_net_l2.3} parent=11 // pred_check
          %p276 = pneg %p85
        $region18: #{embedding_net_l2.3} parent=11 // pred_check_branch
          %278 = sbr.rel (%p276) target = $region20
        $region19: #{embedding_net_l2.3} parent=11 // pred_region
          _
        $region20: #{embedding_net_l2.3} parent=11 // pred_fallthru
          _
        // Predicated region
        $region21: #{embedding_net_l2.3} parent=11 // pred_check
          %p279 = pneg %p106
        $region22: #{embedding_net_l2.3} parent=11 // pred_check_branch
          %281 = sbr.rel (%p279) target = $region24
        $region23: #{embedding_net_l2.3} parent=11 // pred_region
          _
        $region24: #{embedding_net_l2.3} parent=11 // pred_fallthru
          _
        // Predicated region
        $region25: #{embedding_net_l2.3} parent=11 // pred_check
          %p282 = pneg %p127
        $region26: #{embedding_net_l2.3} parent=11 // pred_check_branch
          %284 = sbr.rel (%p282) target = $region28
        $region27: #{embedding_net_l2.3} parent=11 // pred_region
          _
        $region28: #{embedding_net_l2.3} parent=11 // pred_fallthru
          _
        // Predicated region
        $region29: #{embedding_net_l2.3} parent=11 // pred_check
          %p285 = pneg %p148
        $region30: #{embedding_net_l2.3} parent=11 // pred_check_branch
          %287 = sbr.rel (%p285) target = $region32
        $region31: #{embedding_net_l2.3} parent=11 // pred_region
          _
        $region32: #{embedding_net_l2.3} parent=11 // pred_fallthru
          _
        // Predicated region
        $region33: #{embedding_net_l2.3} parent=11 // pred_check
          %p288 = pneg %p169
        $region34: #{embedding_net_l2.3} parent=11 // pred_check_branch
          %290 = sbr.rel (%p288) target = $region36
        $region35: #{embedding_net_l2.3} parent=11 // pred_region
          _
        $region36: #{embedding_net_l2.3} parent=11 // pred_fallthru
          _
        // Predicated region
        $region37: #{embedding_net_l2.3} parent=11 // pred_check
          %p291 = pneg %p190
        $region38: #{embedding_net_l2.3} parent=11 // pred_check_branch
          %293 = sbr.rel (%p291) target = $region40
        $region39: #{embedding_net_l2.3} parent=11 // pred_region
          _
        $region40: #{embedding_net_l2.3} parent=11 // pred_fallthru
          _
        // Predicated region
        $region41: #{embedding_net_l2.3} parent=11 // pred_check
          %p294 = pneg %p211
        $region42: #{embedding_net_l2.3} parent=11 // pred_check_branch
          %296 = sbr.rel (%p294) target = $region44
        $region43: #{embedding_net_l2.3} parent=11 // pred_region
          _
        $region44: #{embedding_net_l2.3} parent=11 // pred_fallthru
          _
        // Predicated region
        $region45: #{embedding_net_l2.3} parent=11 // pred_check
          %p297 = pneg %p232
        $region46: #{embedding_net_l2.3} parent=11 // pred_check_branch
          %299 = sbr.rel (%p297) target = $region48
        $region47: #{embedding_net_l2.3} parent=11 // pred_region
          %s301 = ssub.s32 16, 16
          %302 = vsyncadd [#allocation3], %s301
          %s304 = sshll.u32 %s9, 4
          %s305 = int_to_ptr.vmem [resolvable:$true] %s304
          %307 = dma.vmem_to_smem %s305, 16, [#allocation2], [#allocation3]
        $region48: #{embedding_net_l2.3} parent=11 // pred_fallthru
          _
      $region12: #{embedding_net_l2.3} parent=5 // pred_fallthru
        _
      %p308 = scmp.lt.s32.totalorder %s17, 2
      // Predicated region
      $region49: #{embedding_net_l2.3} parent=5 // pred_check
        %p309 = pneg %p308
      $region50: #{embedding_net_l2.3} parent=5 // pred_check_branch
        %311 = sbr.rel (%p309) target = $region52
      $region51: #{embedding_net_l2.3} parent=5 // pred_region
        // Predicated region
        $region53: #{embedding_net_l2.3} parent=51 // pred_check
          %p312 = pneg %p37
        $region54: #{embedding_net_l2.3} parent=51 // pred_check_branch
          %314 = sbr.rel (%p312) target = $region56
        $region55: #{embedding_net_l2.3} parent=51 // pred_region
          %s315 = smul.u32 8, %s17
          %p316 = scmp.lt.s32.totalorder %s315, 15
          %s317 = scalar_select %p316, %s315, 15
          %s318 = smul.addr %s317, 7
          %s319 = smul.addr %s318, 4
          %s320 = scalar_lea.vmem %s0, %s319
          %s321 = smul.u32 8, %s17
        $region56: #{embedding_net_l2.3} parent=51 // pred_fallthru
          _
      $region52: #{embedding_net_l2.3} parent=5 // pred_fallthru
        _
      %p322 = scmp.le.s32.totalorder 1, %s17
      %p323 = scmp.lt.s32.totalorder %s17, 3
      %p324 = pnand %p322, %p323
      %p325 = pneg %p324
      // Predicated region
      $region57: #{embedding_net_l2.3} parent=5 // pred_check
        _
      $region58: #{embedding_net_l2.3} parent=5 // pred_check_branch
        %327 = sbr.rel (%p324) target = $region60
      $region59: #{embedding_net_l2.3} parent=5 // pred_region
        %s328 = ssub.s32 %s17, 1
        // Predicated region
        $region61: #{embedding_net_l2.3} parent=59 // pred_check
          %p329 = pneg %p232
        $region62: #{embedding_net_l2.3} parent=59 // pred_check_branch
          %331 = sbr.rel (%p329) target = $region64
        $region63: #{embedding_net_l2.3} parent=59 // pred_region
          %332 = dma.done [#allocation3], 16
        $region64: #{embedding_net_l2.3} parent=59 // pred_fallthru
          _
        %333 = sfence
        %s334 = smul.u32 8, %s22
        %p335 = scmp.lt.s32.totalorder %s334, 15
        %s336 = scalar_select %p335, %s334, 15
        %s337 = smul.addr %s336, 7
        %s338 = smul.addr %s337, 4
        %s339 = scalar_lea.vmem %s0, %s338
        %p340 = pneg %p43
        %p341 = pneg %p40
        %p342 = pneg %p64
        %p343 = pneg %p61
        %p344 = pneg %p85
        %p345 = pneg %p82
        %p346 = pneg %p106
        %p347 = pneg %p103
        %p348 = pneg %p127
        %p349 = pneg %p124
        %p350 = pneg %p148
        %p351 = pneg %p145
        %p352 = pneg %p169
        %p353 = pneg %p166
        %p354 = pneg %p190
        %p355 = pneg %p187
        %p356 = pneg %p211
        %p357 = pneg %p208
        %p358 = pneg %p232
        %p359 = pneg %p229
        %p360 = pneg %p258
        %p361 = pneg %p255
        %p362 = scmp.lt.s32.totalorder %s22, 1
        %s363 = scalar_select %p362, %s22, 1
        %s364 = smul.addr %s363, 8
        %s365 = scalar_lea.vmem %s10, %s364
        %s366 = smul.u32 8, %s22
        %p367 = scmp.lt.s32.totalorder %s366, 15
        %s368 = scalar_select %p367, %s366, 15
        %s369 = smul.addr %s368, 7
        %s370 = smul.addr %s369, 4
        %s371 = scalar_lea.vmem %s0, %s370
        %s372 = smul.u32 8, %s22
        %p373 = scmp.lt.s32.totalorder %s22, 1
        %s374 = scalar_select %p373, %s22, 1
        %s375 = smul.addr %s374, 8
        %s376 = scalar_lea.vmem %s10, %s375
        %v378 = vld [vmem:[%s371] sm:$0xff]
        %v379 = vld [vmem:[%s371 + $0x8] sm:$0xff]
        %v380 = vld [vmem:[%s371 + $0x10] sm:$0xff]
        %v381 = vld [vmem:[%s371 + $0x18] sm:$0xf]
        %v382 = vld [vmem:[%s371 + $0x1c] sm:$0xff]
        %v383 = vld [vmem:[%s371 + $0x24] sm:$0xff]
        %v384 = vld [vmem:[%s371 + $0x2c] sm:$0xff]
        %v385 = vld [vmem:[%s371 + $0x34] sm:$0xf]
        %v386 = vld [vmem:[%s371 + $0x38] sm:$0xff]
        %v387 = vld [vmem:[%s371 + $0x40] sm:$0xff]
        %v388 = vld [vmem:[%s371 + $0x48] sm:$0xff]
        %v389 = vld [vmem:[%s371 + $0x50] sm:$0xf]
        %v390 = vld [vmem:[%s371 + $0x54] sm:$0xff]
        %v391 = vld [vmem:[%s371 + $0x5c] sm:$0xff]
        %v392 = vld [vmem:[%s371 + $0x64] sm:$0xff]
        %v393 = vld [vmem:[%s371 + $0x6c] sm:$0xf]
        %v394 = vld [vmem:[%s371 + $0x70] sm:$0xff]
        %v395 = vld [vmem:[%s371 + $0x78] sm:$0xff]
        %v396 = vld [vmem:[%s371 + $0x80] sm:$0xff]
        %v397 = vld [vmem:[%s371 + $0x88] sm:$0xf]
        %v398 = vld [vmem:[%s371 + $0x8c] sm:$0xff]
        %v399 = vld [vmem:[%s371 + $0x94] sm:$0xff]
        %v400 = vld [vmem:[%s371 + $0x9c] sm:$0xff]
        %v401 = vld [vmem:[%s371 + $0xa4] sm:$0xf]
        %v402 = vld [vmem:[%s371 + $0xa8] sm:$0xff]
        %v403 = vld [vmem:[%s371 + $0xb0] sm:$0xff]
        %v404 = vld [vmem:[%s371 + $0xb8] sm:$0xff]
        %v405 = vld [vmem:[%s371 + $0xc0] sm:$0xf]
        %v406 = vld [vmem:[%s371 + $0xc4] sm:$0xff]
        %v407 = vld [vmem:[%s371 + $0xcc] sm:$0xff]
        %v408 = vld [vmem:[%s371 + $0xd4] sm:$0xff]
        %v409 = vld [vmem:[%s371 + $0xdc] sm:$0xf]
        %v410 = vld [vmem:[%s1] sm:$0xf]
        %v411 = vld [vmem:[%s1 + $0x4] sm:$0xf]
        %v412 = vld [vmem:[%s1 + $0x8] sm:$0xf]
        %v413 = vld [vmem:[%s1 + $0xc] sm:$0xf]
        %v414 = vld [vmem:[%s1 + $0x10] sm:$0xf]
        %v415 = vld [vmem:[%s1 + $0x14] sm:$0xf]
        %v416 = vld [vmem:[%s1 + $0x18] sm:$0xf]
        %v417 = vld [vmem:[%s1 + $0x1c] sm:$0xf]
        %v418 = vld [vmem:[%s1 + $0x20] sm:$0xf]
        %v419 = vld [vmem:[%s1 + $0x24] sm:$0xf]
        %v420 = vld [vmem:[%s1 + $0x28] sm:$0xf]
        %v421 = vld [vmem:[%s1 + $0x2c] sm:$0xf]
        %v422 = vld [vmem:[%s1 + $0x30] sm:$0xf]
        %v423 = vld [vmem:[%s1 + $0x34] sm:$0xf]
        %v424 = vld [vmem:[%s1 + $0x38] sm:$0xf]
        %v425 = vld [vmem:[%s1 + $0x3c] sm:$0xf]
        %v426 = vld [vmem:[%s1 + $0x40] sm:$0xf]
        %v427 = vld [vmem:[%s1 + $0x44] sm:$0xf]
        %v428 = vld [vmem:[%s1 + $0x48] sm:$0xf]
        %v429 = vld [vmem:[%s1 + $0x4c] sm:$0xf]
        %v430 = vld [vmem:[%s1 + $0x50] sm:$0xf]
        %v431 = vld [vmem:[%s1 + $0x54] sm:$0xf]
        %v432 = vld [vmem:[%s1 + $0x58] sm:$0xf]
        %v433 = vld [vmem:[%s1 + $0x5c] sm:$0xf]
        %v434 = vld [vmem:[%s1 + $0x60] sm:$0xf]
        %v435 = vld [vmem:[%s1 + $0x64] sm:$0xf]
        %v436 = vld [vmem:[%s1 + $0x68] sm:$0xf]
        %v437 = vld [vmem:[%s1 + $0x6c] sm:$0xf]
        %v438 = vld [vmem:[%s1 + $0x70] sm:$0xf]
        %v439 = vld [vmem:[%s1 + $0x74] sm:$0xf]
        %v440 = vld [vmem:[%s1 + $0x78] sm:$0xf]
        %v441 = vld [vmem:[%s1 + $0x7c] sm:$0xf]
        %v442 = vld [vmem:[%s1 + $0x80] sm:$0xf]
        %v443 = vld [vmem:[%s1 + $0x84] sm:$0xf]
        %v444 = vld [vmem:[%s1 + $0x88] sm:$0xf]
        %v445 = vld [vmem:[%s1 + $0x8c] sm:$0xf]
        %v446 = vld [vmem:[%s1 + $0x90] sm:$0xf]
        %v447 = vld [vmem:[%s1 + $0x94] sm:$0xf]
        %v448 = vld [vmem:[%s1 + $0x98] sm:$0xf]
        %v449 = vld [vmem:[%s1 + $0x9c] sm:$0xf]
        %v450 = vld [vmem:[%s1 + $0xa0] sm:$0xf]
        %v451 = vld [vmem:[%s1 + $0xa4] sm:$0xf]
        %v452 = vld [vmem:[%s1 + $0xa8] sm:$0xf]
        %v453 = vld [vmem:[%s1 + $0xac] sm:$0xf]
        %v454 = vld [vmem:[%s1 + $0xb0] sm:$0xf]
        %v455 = vld [vmem:[%s1 + $0xb4] sm:$0xf]
        %v456 = vld [vmem:[%s1 + $0xb8] sm:$0xf]
        %v457 = vld [vmem:[%s1 + $0xbc] sm:$0xf]
        %v458 = vld [vmem:[%s1 + $0xc0] sm:$0xf]
        %v459 = vld [vmem:[%s1 + $0xc4] sm:$0xf]
        %v460 = vld [vmem:[%s1 + $0xc8] sm:$0xf]
        %v461 = vld [vmem:[%s1 + $0xcc] sm:$0xf]
        %v462 = vld [vmem:[%s1 + $0xd0] sm:$0xf]
        %v463 = vld [vmem:[%s1 + $0xd4] sm:$0xf]
        %v464 = vld [vmem:[%s1 + $0xd8] sm:$0xf]
        %v465 = vld [vmem:[%s1 + $0xdc] sm:$0xf]
        %v466 = vld [vmem:[%s1 + $0xe0] sm:$0xf]
        %v467 = vld [vmem:[%s1 + $0xe4] sm:$0xf]
        %v468 = vld [vmem:[%s1 + $0xe8] sm:$0xf]
        %v469 = vld [vmem:[%s1 + $0xec] sm:$0xf]
        %v470 = vld [vmem:[%s1 + $0xf0] sm:$0xf]
        %v471 = vld [vmem:[%s1 + $0xf4] sm:$0xf]
        %v472 = vld [vmem:[%s1 + $0xf8] sm:$0xf]
        %v473 = vld [vmem:[%s1 + $0xfc] sm:$0xf]
        %v474 = vld [vmem:[%s1 + $0x100] sm:$0xf]
        %v475 = vld [vmem:[%s1 + $0x104] sm:$0xf]
        %v476 = vld [vmem:[%s1 + $0x108] sm:$0xf]
        %v477 = vld [vmem:[%s1 + $0x10c] sm:$0xf]
        %v478 = vld [vmem:[%s1 + $0x110] sm:$0xf]
        %v479 = vld [vmem:[%s1 + $0x114] sm:$0xf]
        %v480 = vld [vmem:[%s1 + $0x118] sm:$0xf]
        %v481 = vld [vmem:[%s1 + $0x11c] sm:$0xf]
        %v482 = vld [vmem:[%s1 + $0x120] sm:$0xf]
        %v483 = vld [vmem:[%s1 + $0x124] sm:$0xf]
        %v484 = vld [vmem:[%s1 + $0x128] sm:$0xf]
        %v485 = vld [vmem:[%s1 + $0x12c] sm:$0xf]
        %v486 = vld [vmem:[%s1 + $0x130] sm:$0xf]
        %v487 = vld [vmem:[%s1 + $0x134] sm:$0xf]
        %v488 = vld [vmem:[%s1 + $0x138] sm:$0xf]
        %v489 = vld [vmem:[%s1 + $0x13c] sm:$0xf]
        %v490 = vld [vmem:[%s1 + $0x140] sm:$0xf]
        %v491 = vld [vmem:[%s1 + $0x144] sm:$0xf]
        %v492 = vld [vmem:[%s1 + $0x148] sm:$0xf]
        %v493 = vld [vmem:[%s1 + $0x14c] sm:$0xf]
        %v494 = vld [vmem:[%s1 + $0x150] sm:$0xf]
        %v495 = vld [vmem:[%s1 + $0x154] sm:$0xf]
        %v496 = vld [vmem:[%s1 + $0x158] sm:$0xf]
        %v497 = vld [vmem:[%s1 + $0x15c] sm:$0xf]
        %v498 = vld [vmem:[%s1 + $0x160] sm:$0xf]
        %v499 = vld [vmem:[%s1 + $0x164] sm:$0xf]
        %v500 = vld [vmem:[%s1 + $0x168] sm:$0xf]
        %v501 = vld [vmem:[%s1 + $0x16c] sm:$0xf]
        %v502 = vld [vmem:[%s1 + $0x170] sm:$0xf]
        %v503 = vld [vmem:[%s1 + $0x174] sm:$0xf]
        %v504 = vld [vmem:[%s1 + $0x178] sm:$0xf]
        %v505 = vld [vmem:[%s1 + $0x17c] sm:$0xf]
        %v506 = vld [vmem:[%s1 + $0x180] sm:$0xf]
        %v507 = vld [vmem:[%s1 + $0x184] sm:$0xf]
        %v508 = vld [vmem:[%s1 + $0x188] sm:$0xf]
        %v509 = vld [vmem:[%s1 + $0x18c] sm:$0xf]
        %v510 = vld [vmem:[%s2] sm:$0x1]
        %v512 = vlaneseq
        %v513 = vshrl.u32 %v512, 7
        %v514 = vsub.s32 0, %v513
        %v515 = vrot.slane %v510, %v514
        %v549 = vunpack.c.l.b16 %v378
        %v550 = vunpack.c.h.b16 %v378
        %v551 = vunpack.c.l.b16 %v379
        %v552 = vunpack.c.h.b16 %v379
        %v553 = vunpack.c.l.b16 %v380
        %v554 = vunpack.c.h.b16 %v380
        %v555 = vunpack.c.l.b16 %v381
        %v556 = vunpack.c.l.b16 %v382
        %v557 = vunpack.c.h.b16 %v382
        %v558 = vunpack.c.l.b16 %v383
        %v559 = vunpack.c.h.b16 %v383
        %v560 = vunpack.c.l.b16 %v384
        %v561 = vunpack.c.h.b16 %v384
        %v562 = vunpack.c.l.b16 %v385
        %v563 = vunpack.c.l.b16 %v386
        %v564 = vunpack.c.h.b16 %v386
        %v565 = vunpack.c.l.b16 %v387
        %v566 = vunpack.c.h.b16 %v387
        %v567 = vunpack.c.l.b16 %v388
        %v568 = vunpack.c.h.b16 %v388
        %v569 = vunpack.c.l.b16 %v389
        %v570 = vunpack.c.l.b16 %v390
        %v571 = vunpack.c.h.b16 %v390
        %v572 = vunpack.c.l.b16 %v391
        %v573 = vunpack.c.h.b16 %v391
        %v574 = vunpack.c.l.b16 %v392
        %v575 = vunpack.c.h.b16 %v392
        %v576 = vunpack.c.l.b16 %v393
        %v577 = vunpack.c.l.b16 %v394
        %v578 = vunpack.c.h.b16 %v394
        %v579 = vunpack.c.l.b16 %v395
        %v580 = vunpack.c.h.b16 %v395
        %v581 = vunpack.c.l.b16 %v396
        %v582 = vunpack.c.h.b16 %v396
        %v583 = vunpack.c.l.b16 %v397
        %v584 = vunpack.c.l.b16 %v398
        %v585 = vunpack.c.h.b16 %v398
        %v586 = vunpack.c.l.b16 %v399
        %v587 = vunpack.c.h.b16 %v399
        %v588 = vunpack.c.l.b16 %v400
        %v589 = vunpack.c.h.b16 %v400
        %v590 = vunpack.c.l.b16 %v401
        %v591 = vunpack.c.l.b16 %v402
        %v592 = vunpack.c.h.b16 %v402
        %v593 = vunpack.c.l.b16 %v403
        %v594 = vunpack.c.h.b16 %v403
        %v595 = vunpack.c.l.b16 %v404
        %v596 = vunpack.c.h.b16 %v404
        %v597 = vunpack.c.l.b16 %v405
        %v598 = vunpack.c.l.b16 %v406
        %v599 = vunpack.c.h.b16 %v406
        %v600 = vunpack.c.l.b16 %v407
        %v601 = vunpack.c.h.b16 %v407
        %v602 = vunpack.c.l.b16 %v408
        %v603 = vunpack.c.h.b16 %v408
        %v604 = vunpack.c.l.b16 %v409
        %v605 = vpack.c.b16 %v556, %v549
        %v606 = vpack.c.b16 %v557, %v550
        %v607 = vpack.c.b16 %v558, %v551
        %v608 = vpack.c.b16 %v559, %v552
        %v609 = vpack.c.b16 %v560, %v553
        %v610 = vpack.c.b16 %v561, %v554
        %v611 = vpack.c.b16 %v562, %v555
        %v612 = vpack.c.b16 %v570, %v563
        %v613 = vpack.c.b16 %v571, %v564
        %v614 = vpack.c.b16 %v572, %v565
        %v615 = vpack.c.b16 %v573, %v566
        %v616 = vpack.c.b16 %v574, %v567
        %v617 = vpack.c.b16 %v575, %v568
        %v618 = vpack.c.b16 %v576, %v569
        %v619 = vpack.c.b16 %v584, %v577
        %v620 = vpack.c.b16 %v585, %v578
        %v621 = vpack.c.b16 %v586, %v579
        %v622 = vpack.c.b16 %v587, %v580
        %v623 = vpack.c.b16 %v588, %v581
        %v624 = vpack.c.b16 %v589, %v582
        %v625 = vpack.c.b16 %v590, %v583
        %v626 = vpack.c.b16 %v598, %v591
        %v627 = vpack.c.b16 %v599, %v592
        %v628 = vpack.c.b16 %v600, %v593
        %v629 = vpack.c.b16 %v601, %v594
        %v630 = vpack.c.b16 %v602, %v595
        %v631 = vpack.c.b16 %v603, %v596
        %v632 = vpack.c.b16 %v604, %v597
        %v757 = vunpack.c.l.b16 %v410
        %v758 = vunpack.c.l.b16 %v411
        %v759 = vunpack.c.l.b16 %v412
        %v760 = vunpack.c.l.b16 %v413
        %v761 = vunpack.c.l.b16 %v414
        %v762 = vunpack.c.l.b16 %v415
        %v763 = vunpack.c.l.b16 %v416
        %v764 = vunpack.c.l.b16 %v417
        %v765 = vunpack.c.l.b16 %v418
        %v766 = vunpack.c.l.b16 %v419
        %v767 = vunpack.c.l.b16 %v420
        %v768 = vunpack.c.l.b16 %v421
        %v769 = vunpack.c.l.b16 %v422
        %v770 = vunpack.c.l.b16 %v423
        %v771 = vunpack.c.l.b16 %v424
        %v772 = vunpack.c.l.b16 %v425
        %v773 = vunpack.c.l.b16 %v426
        %v774 = vunpack.c.l.b16 %v427
        %v775 = vunpack.c.l.b16 %v428
        %v776 = vunpack.c.l.b16 %v429
        %v777 = vunpack.c.l.b16 %v430
        %v778 = vunpack.c.l.b16 %v431
        %v779 = vunpack.c.l.b16 %v432
        %v780 = vunpack.c.l.b16 %v433
        %v781 = vunpack.c.l.b16 %v434
        %v782 = vunpack.c.l.b16 %v435
        %v783 = vunpack.c.l.b16 %v436
        %v784 = vunpack.c.l.b16 %v437
        %v785 = vunpack.c.l.b16 %v438
        %v786 = vunpack.c.l.b16 %v439
        %v787 = vunpack.c.l.b16 %v440
        %v788 = vunpack.c.l.b16 %v441
        %v789 = vunpack.c.l.b16 %v442
        %v790 = vunpack.c.l.b16 %v443
        %v791 = vunpack.c.l.b16 %v444
        %v792 = vunpack.c.l.b16 %v445
        %v793 = vunpack.c.l.b16 %v446
        %v794 = vunpack.c.l.b16 %v447
        %v795 = vunpack.c.l.b16 %v448
        %v796 = vunpack.c.l.b16 %v449
        %v797 = vunpack.c.l.b16 %v450
        %v798 = vunpack.c.l.b16 %v451
        %v799 = vunpack.c.l.b16 %v452
        %v800 = vunpack.c.l.b16 %v453
        %v801 = vunpack.c.l.b16 %v454
        %v802 = vunpack.c.l.b16 %v455
        %v803 = vunpack.c.l.b16 %v456
        %v804 = vunpack.c.l.b16 %v457
        %v805 = vunpack.c.l.b16 %v458
        %v806 = vunpack.c.l.b16 %v459
        %v807 = vunpack.c.l.b16 %v460
        %v808 = vunpack.c.l.b16 %v461
        %v809 = vunpack.c.l.b16 %v462
        %v810 = vunpack.c.l.b16 %v463
        %v811 = vunpack.c.l.b16 %v464
        %v812 = vunpack.c.l.b16 %v465
        %v813 = vunpack.c.l.b16 %v466
        %v814 = vunpack.c.l.b16 %v467
        %v815 = vunpack.c.l.b16 %v468
        %v816 = vunpack.c.l.b16 %v469
        %v817 = vunpack.c.l.b16 %v470
        %v818 = vunpack.c.l.b16 %v471
        %v819 = vunpack.c.l.b16 %v472
        %v820 = vunpack.c.l.b16 %v473
        %v821 = vunpack.c.l.b16 %v474
        %v822 = vunpack.c.l.b16 %v475
        %v823 = vunpack.c.l.b16 %v476
        %v824 = vunpack.c.l.b16 %v477
        %v825 = vunpack.c.l.b16 %v478
        %v826 = vunpack.c.l.b16 %v479
        %v827 = vunpack.c.l.b16 %v480
        %v828 = vunpack.c.l.b16 %v481
        %v829 = vunpack.c.l.b16 %v482
        %v830 = vunpack.c.l.b16 %v483
        %v831 = vunpack.c.l.b16 %v484
        %v832 = vunpack.c.l.b16 %v485
        %v833 = vunpack.c.l.b16 %v486
        %v834 = vunpack.c.l.b16 %v487
        %v835 = vunpack.c.l.b16 %v488
        %v836 = vunpack.c.l.b16 %v489
        %v837 = vunpack.c.l.b16 %v490
        %v838 = vunpack.c.l.b16 %v491
        %v839 = vunpack.c.l.b16 %v492
        %v840 = vunpack.c.l.b16 %v493
        %v841 = vunpack.c.l.b16 %v494
        %v842 = vunpack.c.l.b16 %v495
        %v843 = vunpack.c.l.b16 %v496
        %v844 = vunpack.c.l.b16 %v497
        %v845 = vunpack.c.l.b16 %v498
        %v846 = vunpack.c.l.b16 %v499
        %v847 = vunpack.c.l.b16 %v500
        %v848 = vunpack.c.l.b16 %v501
        %v849 = vunpack.c.l.b16 %v502
        %v850 = vunpack.c.l.b16 %v503
        %v851 = vunpack.c.l.b16 %v504
        %v852 = vunpack.c.l.b16 %v505
        %v853 = vunpack.c.l.b16 %v506
        %v854 = vunpack.c.l.b16 %v507
        %v855 = vunpack.c.l.b16 %v508
        %v856 = vunpack.c.l.b16 %v509
        %v857 = vpack.c.b16 %v758, %v757
        %v858 = vpack.c.b16 %v760, %v759
        %v859 = vpack.c.b16 %v762, %v761
        %v860 = vpack.c.b16 %v764, %v763
        %v861 = vpack.c.b16 %v766, %v765
        %v862 = vpack.c.b16 %v768, %v767
        %v863 = vpack.c.b16 %v770, %v769
        %v864 = vpack.c.b16 %v772, %v771
        %v865 = vpack.c.b16 %v774, %v773
        %v866 = vpack.c.b16 %v776, %v775
        %v867 = vpack.c.b16 %v778, %v777
        %v868 = vpack.c.b16 %v780, %v779
        %v869 = vpack.c.b16 %v782, %v781
        %v870 = vpack.c.b16 %v784, %v783
        %v871 = vpack.c.b16 %v786, %v785
        %v872 = vpack.c.b16 %v788, %v787
        %v873 = vpack.c.b16 %v790, %v789
        %v874 = vpack.c.b16 %v792, %v791
        %v875 = vpack.c.b16 %v794, %v793
        %v876 = vpack.c.b16 %v796, %v795
        %v877 = vpack.c.b16 %v798, %v797
        %v878 = vpack.c.b16 %v800, %v799
        %v879 = vpack.c.b16 %v802, %v801
        %v880 = vpack.c.b16 %v804, %v803
        %v881 = vpack.c.b16 %v806, %v805
        %v882 = vpack.c.b16 %v808, %v807
        %v883 = vpack.c.b16 %v810, %v809
        %v884 = vpack.c.b16 %v812, %v811
        %v885 = vpack.c.b16 %v814, %v813
        %v886 = vpack.c.b16 %v816, %v815
        %v887 = vpack.c.b16 %v818, %v817
        %v888 = vpack.c.b16 %v820, %v819
        %v889 = vpack.c.b16 %v822, %v821
        %v890 = vpack.c.b16 %v824, %v823
        %v891 = vpack.c.b16 %v826, %v825
        %v892 = vpack.c.b16 %v828, %v827
        %v893 = vpack.c.b16 %v830, %v829
        %v894 = vpack.c.b16 %v832, %v831
        %v895 = vpack.c.b16 %v834, %v833
        %v896 = vpack.c.b16 %v836, %v835
        %v897 = vpack.c.b16 %v838, %v837
        %v898 = vpack.c.b16 %v840, %v839
        %v899 = vpack.c.b16 %v842, %v841
        %v900 = vpack.c.b16 %v844, %v843
        %v901 = vpack.c.b16 %v846, %v845
        %v902 = vpack.c.b16 %v848, %v847
        %v903 = vpack.c.b16 %v850, %v849
        %v904 = vpack.c.b16 %v852, %v851
        %v905 = vpack.c.b16 %v854, %v853
        %v906 = vpack.c.b16 %v856, %v855
        %vm957 = vcmask 261120
        %v959 = vsel %vm957, %v611, 0
        %v962 = vsel %vm957, %v618, 0
        %v965 = vsel %vm957, %v625, 0
        %v968 = vsel %vm957, %v632, 0
        %970 = vmatprep.subr.bf16.mxu0 0
        %971 = vmatpush1.bf16.msra.mxu0 %v864
        %972 = vmatprep.subr.bf16.mxu0 0
        %973 = vmatpush1.bf16.msra.mxu0 %v863
        %974 = vmatprep.subr.bf16.mxu0 0
        %975 = vmatpush1.bf16.msra.mxu0 %v862
        %976 = vmatprep.subr.bf16.mxu0 0
        %977 = vmatpush1.bf16.msra.mxu0 %v861
        %978 = vmatprep.subr.bf16.mxu0 0
        %979 = vmatpush1.bf16.msra.mxu0 %v860
        %980 = vmatprep.subr.bf16.mxu0 0
        %981 = vmatpush1.bf16.msra.mxu0 %v859
        %982 = vmatprep.subr.bf16.mxu0 0
        %983 = vmatpush1.bf16.msra.mxu0 %v858
        %984 = vmatprep.subr.bf16.mxu0 0
        %985 = vmatpush1.bf16.msra.mxu0 %v857
        %986 = vmatprep.subr.bf16.mxu0 0
        %987 = vmatpush2.bf16.msra.mxu0 %v872
        %988 = vmatprep.subr.bf16.mxu0 0
        %989 = vmatpush2.bf16.msra.mxu0 %v871
        %990 = vmatprep.subr.bf16.mxu0 0
        %991 = vmatpush2.bf16.msra.mxu0 %v870
        %992 = vmatprep.subr.bf16.mxu0 0
        %993 = vmatpush2.bf16.msra.mxu0 %v869
        %994 = vmatprep.subr.bf16.mxu0 0
        %995 = vmatpush2.bf16.msra.mxu0 %v868
        %996 = vmatprep.subr.bf16.mxu0 0
        %997 = vmatpush2.bf16.msra.mxu0 %v867
        %998 = vmatprep.subr.bf16.mxu0 0
        %999 = vmatpush2.bf16.msra.mxu0 %v866
        %1000 = vmatprep.subr.bf16.mxu0 0
        %1001 = vmatpush2.bf16.msra.mxu0 %v865
        %1002 = vmatprep.mubr.bf16.mxu0 %v606
        %1003 = vmatmul.mubr.bf16.gmra.mxu0 %v605
        %v1004 = vpop.f32.mrf.mxu0
        %v1005 = vadd.f32 %v515, %v1004
        %v1006 = vpop.f32.mrf.mxu0
        %v1007 = vpop.f32.mrf.mxu0
        %v1008 = vadd.f32 %v515, %v1007
        %v1009 = vpop.f32.mrf.mxu0
        %1010 = vmatprep.mubr.bf16.mxu0 %v613
        %1011 = vmatmul.mubr.bf16.gmra.mxu0 %v612
        %v1012 = vpop.f32.mrf.mxu0
        %v1013 = vadd.f32 %v515, %v1012
        %v1014 = vpop.f32.mrf.mxu0
        %v1015 = vpop.f32.mrf.mxu0
        %v1016 = vadd.f32 %v515, %v1015
        %v1017 = vpop.f32.mrf.mxu0
        %1018 = vmatprep.mubr.bf16.mxu0 %v620
        %1019 = vmatmul.mubr.bf16.gmra.mxu0 %v619
        %v1020 = vpop.f32.mrf.mxu0
        %v1021 = vadd.f32 %v515, %v1020
        %v1022 = vpop.f32.mrf.mxu0
        %v1023 = vpop.f32.mrf.mxu0
        %v1024 = vadd.f32 %v515, %v1023
        %v1025 = vpop.f32.mrf.mxu0
        %1026 = vmatprep.mubr.bf16.mxu0 %v627
        %1027 = vmatmul.mubr.bf16.gmra.mxu0 %v626
        %v1028 = vpop.f32.mrf.mxu0
        %v1029 = vadd.f32 %v515, %v1028
        %v1030 = vpop.f32.mrf.mxu0
        %v1031 = vpop.f32.mrf.mxu0
        %v1032 = vadd.f32 %v515, %v1031
        %v1033 = vpop.f32.mrf.mxu0
        %1034 = vdwg.mxu0
        %1035 = vmatprep.subr.bf16.mxu0 0
        %1036 = vmatpush1.bf16.msra.mxu0 %v880
        %1037 = vmatprep.subr.bf16.mxu0 0
        %1038 = vmatpush1.bf16.msra.mxu0 %v879
        %1039 = vmatprep.subr.bf16.mxu0 0
        %1040 = vmatpush1.bf16.msra.mxu0 %v878
        %1041 = vmatprep.subr.bf16.mxu0 0
        %1042 = vmatpush1.bf16.msra.mxu0 %v877
        %1043 = vmatprep.subr.bf16.mxu0 0
        %1044 = vmatpush1.bf16.msra.mxu0 %v876
        %1045 = vmatprep.subr.bf16.mxu0 0
        %1046 = vmatpush1.bf16.msra.mxu0 %v875
        %1047 = vmatprep.subr.bf16.mxu0 0
        %1048 = vmatpush1.bf16.msra.mxu0 %v874
        %1049 = vmatprep.subr.bf16.mxu0 0
        %1050 = vmatpush1.bf16.msra.mxu0 %v873
        %1051 = vmatprep.subr.bf16.mxu0 0
        %1052 = vmatpush2.bf16.msra.mxu0 %v888
        %1053 = vmatprep.subr.bf16.mxu0 0
        %1054 = vmatpush2.bf16.msra.mxu0 %v887
        %1055 = vmatprep.subr.bf16.mxu0 0
        %1056 = vmatpush2.bf16.msra.mxu0 %v886
        %1057 = vmatprep.subr.bf16.mxu0 0
        %1058 = vmatpush2.bf16.msra.mxu0 %v885
        %1059 = vmatprep.subr.bf16.mxu0 0
        %1060 = vmatpush2.bf16.msra.mxu0 %v884
        %1061 = vmatprep.subr.bf16.mxu0 0
        %1062 = vmatpush2.bf16.msra.mxu0 %v883
        %1063 = vmatprep.subr.bf16.mxu0 0
        %1064 = vmatpush2.bf16.msra.mxu0 %v882
        %1065 = vmatprep.subr.bf16.mxu0 0
        %1066 = vmatpush2.bf16.msra.mxu0 %v881
        %1067 = vmatprep.mubr.bf16.mxu0 %v608
        %1068 = vmatmul.mubr.bf16.gmra.mxu0 %v607
        %v1069 = vpop.f32.mrf.mxu0
        %v1070 = vadd.f32 %v1005, %v1069
        %v1071 = vpop.f32.mrf.mxu0
        %v1072 = vpop.f32.mrf.mxu0
        %v1073 = vadd.f32 %v1008, %v1072
        %v1074 = vpop.f32.mrf.mxu0
        %1075 = vmatprep.mubr.bf16.mxu0 %v615
        %1076 = vmatmul.mubr.bf16.gmra.mxu0 %v614
        %v1077 = vpop.f32.mrf.mxu0
        %v1078 = vadd.f32 %v1013, %v1077
        %v1079 = vpop.f32.mrf.mxu0
        %v1080 = vpop.f32.mrf.mxu0
        %v1081 = vadd.f32 %v1016, %v1080
        %v1082 = vpop.f32.mrf.mxu0
        %1083 = vmatprep.mubr.bf16.mxu0 %v622
        %1084 = vmatmul.mubr.bf16.gmra.mxu0 %v621
        %v1085 = vpop.f32.mrf.mxu0
        %v1086 = vadd.f32 %v1021, %v1085
        %v1087 = vpop.f32.mrf.mxu0
        %v1088 = vpop.f32.mrf.mxu0
        %v1089 = vadd.f32 %v1024, %v1088
        %v1090 = vpop.f32.mrf.mxu0
        %1091 = vmatprep.mubr.bf16.mxu0 %v629
        %1092 = vmatmul.mubr.bf16.gmra.mxu0 %v628
        %v1093 = vpop.f32.mrf.mxu0
        %v1094 = vadd.f32 %v1029, %v1093
        %v1095 = vpop.f32.mrf.mxu0
        %v1096 = vpop.f32.mrf.mxu0
        %v1097 = vadd.f32 %v1032, %v1096
        %v1098 = vpop.f32.mrf.mxu0
        %1099 = vdwg.mxu0
        %1100 = vmatprep.subr.bf16.mxu0 0
        %1101 = vmatpush1.bf16.msra.mxu0 %v896
        %1102 = vmatprep.subr.bf16.mxu0 0
        %1103 = vmatpush1.bf16.msra.mxu0 %v895
        %1104 = vmatprep.subr.bf16.mxu0 0
        %1105 = vmatpush1.bf16.msra.mxu0 %v894
        %1106 = vmatprep.subr.bf16.mxu0 0
        %1107 = vmatpush1.bf16.msra.mxu0 %v893
        %1108 = vmatprep.subr.bf16.mxu0 0
        %1109 = vmatpush1.bf16.msra.mxu0 %v892
        %1110 = vmatprep.subr.bf16.mxu0 0
        %1111 = vmatpush1.bf16.msra.mxu0 %v891
        %1112 = vmatprep.subr.bf16.mxu0 0
        %1113 = vmatpush1.bf16.msra.mxu0 %v890
        %1114 = vmatprep.subr.bf16.mxu0 0
        %1115 = vmatpush1.bf16.msra.mxu0 %v889
        %1116 = vmatprep.subr.bf16.mxu0 0
        %1117 = vmatpush2.bf16.msra.mxu0 %v904
        %1118 = vmatprep.subr.bf16.mxu0 0
        %1119 = vmatpush2.bf16.msra.mxu0 %v903
        %1120 = vmatprep.subr.bf16.mxu0 0
        %1121 = vmatpush2.bf16.msra.mxu0 %v902
        %1122 = vmatprep.subr.bf16.mxu0 0
        %1123 = vmatpush2.bf16.msra.mxu0 %v901
        %1124 = vmatprep.subr.bf16.mxu0 0
        %1125 = vmatpush2.bf16.msra.mxu0 %v900
        %1126 = vmatprep.subr.bf16.mxu0 0
        %1127 = vmatpush2.bf16.msra.mxu0 %v899
        %1128 = vmatprep.subr.bf16.mxu0 0
        %1129 = vmatpush2.bf16.msra.mxu0 %v898
        %1130 = vmatprep.subr.bf16.mxu0 0
        %1131 = vmatpush2.bf16.msra.mxu0 %v897
        %1132 = vmatprep.mubr.bf16.mxu0 %v610
        %1133 = vmatmul.mubr.bf16.gmra.mxu0 %v609
        %v1134 = vpop.f32.mrf.mxu0
        %v1135 = vadd.f32 %v1070, %v1134
        %v1136 = vpop.f32.mrf.mxu0
        %v1137 = vpop.f32.mrf.mxu0
        %v1138 = vadd.f32 %v1073, %v1137
        %v1139 = vpop.f32.mrf.mxu0
        %1140 = vmatprep.mubr.bf16.mxu0 %v617
        %1141 = vmatmul.mubr.bf16.gmra.mxu0 %v616
        %v1142 = vpop.f32.mrf.mxu0
        %v1143 = vadd.f32 %v1078, %v1142
        %v1144 = vpop.f32.mrf.mxu0
        %v1145 = vpop.f32.mrf.mxu0
        %v1146 = vadd.f32 %v1081, %v1145
        %v1147 = vpop.f32.mrf.mxu0
        %1148 = vmatprep.mubr.bf16.mxu0 %v624
        %1149 = vmatmul.mubr.bf16.gmra.mxu0 %v623
        %v1150 = vpop.f32.mrf.mxu0
        %v1151 = vadd.f32 %v1086, %v1150
        %v1152 = vpop.f32.mrf.mxu0
        %v1153 = vpop.f32.mrf.mxu0
        %v1154 = vadd.f32 %v1089, %v1153
        %v1155 = vpop.f32.mrf.mxu0
        %1156 = vmatprep.mubr.bf16.mxu0 %v631
        %1157 = vmatmul.mubr.bf16.gmra.mxu0 %v630
        %v1158 = vpop.f32.mrf.mxu0
        %v1159 = vadd.f32 %v1094, %v1158
        %v1160 = vpop.f32.mrf.mxu0
        %v1161 = vpop.f32.mrf.mxu0
        %v1162 = vadd.f32 %v1097, %v1161
        %v1163 = vpop.f32.mrf.mxu0
        %1164 = vdwg.mxu0
        %1165 = vmatprep.subr.bf16.mxu0 0
        %1166 = vmatpush1.bf16.msra.mxu0 0
        %1167 = vmatprep.subr.bf16.mxu0 0
        %1168 = vmatpush1.bf16.msra.mxu0 0
        %1169 = vmatprep.subr.bf16.mxu0 0
        %1170 = vmatpush1.bf16.msra.mxu0 0
        %1171 = vmatprep.subr.bf16.mxu0 0
        %1172 = vmatpush1.bf16.msra.mxu0 0
        %1173 = vmatprep.subr.bf16.mxu0 0
        %1174 = vmatpush1.bf16.msra.mxu0 0
        %1175 = vmatprep.subr.bf16.mxu0 0
        %1176 = vmatpush1.bf16.msra.mxu0 0
        %1177 = vmatprep.subr.bf16.mxu0 0
        %1178 = vmatpush1.bf16.msra.mxu0 %v906
        %1179 = vmatprep.subr.bf16.mxu0 0
        %1180 = vmatpush1.bf16.msra.mxu0 %v905
        %1181 = vmatprep.subr.bf16.mxu0 0
        %1182 = vmatpush2.bf16.msra.mxu0 0
        %1183 = vmatprep.subr.bf16.mxu0 0
        %1184 = vmatpush2.bf16.msra.mxu0 0
        %1185 = vmatprep.subr.bf16.mxu0 0
        %1186 = vmatpush2.bf16.msra.mxu0 0
        %1187 = vmatprep.subr.bf16.mxu0 0
        %1188 = vmatpush2.bf16.msra.mxu0 0
        %1189 = vmatprep.subr.bf16.mxu0 0
        %1190 = vmatpush2.bf16.msra.mxu0 0
        %1191 = vmatprep.subr.bf16.mxu0 0
        %1192 = vmatpush2.bf16.msra.mxu0 0
        %1193 = vmatprep.subr.bf16.mxu0 0
        %1194 = vmatpush2.bf16.msra.mxu0 0
        %1195 = vmatprep.subr.bf16.mxu0 0
        %1196 = vmatpush2.bf16.msra.mxu0 0
        %1197 = vmatprep.mubr.bf16.mxu0 0
        %1198 = vmatmul.mubr.bf16.gmra.mxu0 %v959
        %v1199 = vpop.f32.mrf.mxu0
        %v1200 = vadd.f32 %v1135, %v1199
        %v1201 = vpop.f32.mrf.mxu0
        %v1202 = vpop.f32.mrf.mxu0
        %v1203 = vadd.f32 %v1138, %v1202
        %v1204 = vpop.f32.mrf.mxu0
        %1205 = vmatprep.mubr.bf16.mxu0 0
        %1206 = vmatmul.mubr.bf16.gmra.mxu0 %v962
        %v1207 = vpop.f32.mrf.mxu0
        %v1208 = vadd.f32 %v1143, %v1207
        %v1209 = vpop.f32.mrf.mxu0
        %v1210 = vpop.f32.mrf.mxu0
        %v1211 = vadd.f32 %v1146, %v1210
        %v1212 = vpop.f32.mrf.mxu0
        %1213 = vmatprep.mubr.bf16.mxu0 0
        %1214 = vmatmul.mubr.bf16.gmra.mxu0 %v965
        %v1215 = vpop.f32.mrf.mxu0
        %v1216 = vadd.f32 %v1151, %v1215
        %v1217 = vpop.f32.mrf.mxu0
        %v1218 = vpop.f32.mrf.mxu0
        %v1219 = vadd.f32 %v1154, %v1218
        %v1220 = vpop.f32.mrf.mxu0
        %1221 = vmatprep.mubr.bf16.mxu0 0
        %1222 = vmatmul.mubr.bf16.gmra.mxu0 %v968
        %v1223 = vpop.f32.mrf.mxu0
        %v1224 = vadd.f32 %v1159, %v1223
        %v1225 = vpop.f32.mrf.mxu0
        %v1226 = vpop.f32.mrf.mxu0
        %v1227 = vadd.f32 %v1162, %v1226
        %v1228 = vpop.f32.mrf.mxu0
        %1229 = vdwg.mxu0
        %vm1230 = vcmp.ge.f32.partialorder %v1200, 0.0
        %vm1231 = vcmp.ge.f32.partialorder %v1203, 0.0
        %vm1232 = vcmp.ge.f32.partialorder %v1208, 0.0
        %vm1233 = vcmp.ge.f32.partialorder %v1211, 0.0
        %vm1234 = vcmp.ge.f32.partialorder %v1216, 0.0
        %vm1235 = vcmp.ge.f32.partialorder %v1219, 0.0
        %vm1236 = vcmp.ge.f32.partialorder %v1224, 0.0
        %vm1237 = vcmp.ge.f32.partialorder %v1227, 0.0
        %s1238 = sld [smem:[#allocation2 + $0x1]]
        %v1239 = vstv %s1238
        %v1240 = vmul.f32 %v1239, %v1200
        %v1241 = vmul.f32 %v1239, %v1203
        %v1242 = vmul.f32 %v1239, %v1208
        %v1243 = vmul.f32 %v1239, %v1211
        %v1244 = vmul.f32 %v1239, %v1216
        %v1245 = vmul.f32 %v1239, %v1219
        %v1246 = vmul.f32 %v1239, %v1224
        %v1247 = vmul.f32 %v1239, %v1227
        %v1248 = vsel %vm1230, %v1200, %v1240
        %v1249 = vsel %vm1231, %v1203, %v1241
        %v1250 = vsel %vm1232, %v1208, %v1242
        %v1251 = vsel %vm1233, %v1211, %v1243
        %v1252 = vsel %vm1234, %v1216, %v1244
        %v1253 = vsel %vm1235, %v1219, %v1245
        %v1254 = vsel %vm1236, %v1224, %v1246
        %v1255 = vsel %vm1237, %v1227, %v1247
        %v1256 = vmax.f32 %v1248, %v1250
        %v1257 = vmax.f32 %v1249, %v1251
        %v1258 = vmax.f32 %v1252, %v1254
        %v1259 = vmax.f32 %v1253, %v1255
        %v1260 = vmax.f32 %v1256, %v1258
        %v1261 = vmax.f32 %v1257, %v1259
        %v1262 = vpack.c.bf16 %v1261, %v1260
        %v1263 = vld [vmem:[%s4] sm:$0x3]
        %v1264 = vld [vmem:[%s3] sm:$0xff]
        %v1265 = vld [vmem:[%s3 + $0x8] sm:$0xff]
        %v1266 = vld [vmem:[%s3 + $0x10] sm:$0xff]
        %v1267 = vld [vmem:[%s3 + $0x18] sm:$0xff]
        %v1268 = vld [vmem:[%s3 + $0x20] sm:$0xff]
        %v1269 = vld [vmem:[%s3 + $0x28] sm:$0xff]
        %v1270 = vld [vmem:[%s3 + $0x30] sm:$0xff]
        %v1271 = vld [vmem:[%s3 + $0x38] sm:$0xff]
        %v1280 = vunpack.c.l.b16 %v1264
        %v1281 = vunpack.c.h.b16 %v1264
        %v1282 = vunpack.c.l.b16 %v1265
        %v1283 = vunpack.c.h.b16 %v1265
        %v1284 = vunpack.c.l.b16 %v1266
        %v1285 = vunpack.c.h.b16 %v1266
        %v1286 = vunpack.c.l.b16 %v1267
        %v1287 = vunpack.c.h.b16 %v1267
        %v1288 = vunpack.c.l.b16 %v1268
        %v1289 = vunpack.c.h.b16 %v1268
        %v1290 = vunpack.c.l.b16 %v1269
        %v1291 = vunpack.c.h.b16 %v1269
        %v1292 = vunpack.c.l.b16 %v1270
        %v1293 = vunpack.c.h.b16 %v1270
        %v1294 = vunpack.c.l.b16 %v1271
        %v1295 = vunpack.c.h.b16 %v1271
        %v1296 = vpack.c.b16 %v1282, %v1280
        %v1297 = vpack.c.b16 %v1283, %v1281
        %v1298 = vpack.c.b16 %v1286, %v1284
        %v1299 = vpack.c.b16 %v1287, %v1285
        %v1300 = vpack.c.b16 %v1290, %v1288
        %v1301 = vpack.c.b16 %v1291, %v1289
        %v1302 = vpack.c.b16 %v1294, %v1292
        %v1303 = vpack.c.b16 %v1295, %v1293
        %vm1312 = vcmask 523264
        %v1314 = vsel %vm1312, %v1262, 0
        %1316 = vmatprep.subr.bf16.mxu0 0
        %1317 = vmatpush1.bf16.msra.mxu0 0
        %1318 = vmatprep.subr.bf16.mxu0 0
        %1319 = vmatpush1.bf16.msra.mxu0 0
        %1320 = vmatprep.subr.bf16.mxu0 0
        %1321 = vmatpush1.bf16.msra.mxu0 0
        %1322 = vmatprep.subr.bf16.mxu0 0
        %1323 = vmatpush1.bf16.msra.mxu0 0
        %1324 = vmatprep.subr.bf16.mxu0 %v1303
        %1325 = vmatpush1.bf16.msra.mxu0 %v1302
        %1326 = vmatprep.subr.bf16.mxu0 %v1301
        %1327 = vmatpush1.bf16.msra.mxu0 %v1300
        %1328 = vmatprep.subr.bf16.mxu0 %v1299
        %1329 = vmatpush1.bf16.msra.mxu0 %v1298
        %1330 = vmatprep.subr.bf16.mxu0 %v1297
        %1331 = vmatpush1.bf16.msra.mxu0 %v1296
        %1332 = vmatprep.subr.bf16.mxu0 0
        %1333 = vmatpush2.bf16.msra.mxu0 0
        %1334 = vmatprep.subr.bf16.mxu0 0
        %1335 = vmatpush2.bf16.msra.mxu0 0
        %1336 = vmatprep.subr.bf16.mxu0 0
        %1337 = vmatpush2.bf16.msra.mxu0 0
        %1338 = vmatprep.subr.bf16.mxu0 0
        %1339 = vmatpush2.bf16.msra.mxu0 0
        %1340 = vmatprep.subr.bf16.mxu0 0
        %1341 = vmatpush2.bf16.msra.mxu0 0
        %1342 = vmatprep.subr.bf16.mxu0 0
        %1343 = vmatpush2.bf16.msra.mxu0 0
        %1344 = vmatprep.subr.bf16.mxu0 0
        %1345 = vmatpush2.bf16.msra.mxu0 0
        %1346 = vmatprep.subr.bf16.mxu0 0
        %1347 = vmatpush2.bf16.msra.mxu0 0
        %1348 = vmatprep.mubr.bf16.mxu0 0
        %1349 = vmatmul.mubr.bf16.gmra.mxu0 %v1314
        %v1350 = vpop.f32.mrf.mxu0
        %v1351 = vadd.f32 0.0, %v1350
        %v1352 = vpop.f32.mrf.mxu0
        %v1353 = vadd.f32 0.0, %v1352
        %v1354 = vpop.f32.mrf.mxu0
        %v1355 = vpop.f32.mrf.mxu0
        %1356 = vdwg.mxu0
        %v1359 = vcombine.low %v1351, %v1353
        %v1361 = vunpack.c.l.s4 1966171168
        %v1362 = vunpack.c.0.s8 %v1361
        %v1363 = vlaneseq
        %v1364 = vshrl.u32 %v1363, 7
        %v1365 = vsub.s32 %v1362, %v1364
        %v1366 = vrot.slane %v1359, %v1365
        %v1368 = vunpack.c.l.s4 1966171168
        %v1369 = vunpack.c.0.s8 %v1368
        %v1370 = vlaneseq
        %v1371 = vshrl.u32 %v1370, 7
        %v1372 = vsub.s32 %v1369, %v1371
        %v1373 = vrot.slane %v1366, %v1372
        %v1375 = vadd.f32 %v1263, %v1373
        %v1376 = vld [vmem:[%s3 + $0x40] sm:$0xff]
        %v1377 = vld [vmem:[%s3 + $0x48] sm:$0xff]
        %v1378 = vld [vmem:[%s3 + $0x50] sm:$0xff]
        %v1379 = vld [vmem:[%s3 + $0x58] sm:$0xff]
        %v1380 = vld [vmem:[%s3 + $0x60] sm:$0xff]
        %v1381 = vld [vmem:[%s3 + $0x68] sm:$0xff]
        %v1382 = vld [vmem:[%s3 + $0x70] sm:$0xff]
        %v1383 = vld [vmem:[%s3 + $0x78] sm:$0xff]
        %v1384 = vshrl.u32 %v1262, 16
        %v1394 = vunpack.c.l.b16 %v1376
        %v1395 = vunpack.c.h.b16 %v1376
        %v1396 = vunpack.c.l.b16 %v1377
        %v1397 = vunpack.c.h.b16 %v1377
        %v1398 = vunpack.c.l.b16 %v1378
        %v1399 = vunpack.c.h.b16 %v1378
        %v1400 = vunpack.c.l.b16 %v1379
        %v1401 = vunpack.c.h.b16 %v1379
        %v1402 = vunpack.c.l.b16 %v1380
        %v1403 = vunpack.c.h.b16 %v1380
        %v1404 = vunpack.c.l.b16 %v1381
        %v1405 = vunpack.c.h.b16 %v1381
        %v1406 = vunpack.c.l.b16 %v1382
        %v1407 = vunpack.c.h.b16 %v1382
        %v1408 = vunpack.c.l.b16 %v1383
        %v1409 = vunpack.c.h.b16 %v1383
        %v1410 = vpack.c.b16 %v1396, %v1394
        %v1411 = vpack.c.b16 %v1397, %v1395
        %v1412 = vpack.c.b16 %v1400, %v1398
        %v1413 = vpack.c.b16 %v1401, %v1399
        %v1414 = vpack.c.b16 %v1404, %v1402
        %v1415 = vpack.c.b16 %v1405, %v1403
        %v1416 = vpack.c.b16 %v1408, %v1406
        %v1417 = vpack.c.b16 %v1409, %v1407
        %v1427 = vsel %vm1312, %v1384, 0
        %1429 = vmatprep.subr.bf16.mxu0 0
        %1430 = vmatpush1.bf16.msra.mxu0 0
        %1431 = vmatprep.subr.bf16.mxu0 0
        %1432 = vmatpush1.bf16.msra.mxu0 0
        %1433 = vmatprep.subr.bf16.mxu0 0
        %1434 = vmatpush1.bf16.msra.mxu0 0
        %1435 = vmatprep.subr.bf16.mxu0 0
        %1436 = vmatpush1.bf16.msra.mxu0 0
        %1437 = vmatprep.subr.bf16.mxu0 %v1417
        %1438 = vmatpush1.bf16.msra.mxu0 %v1416
        %1439 = vmatprep.subr.bf16.mxu0 %v1415
        %1440 = vmatpush1.bf16.msra.mxu0 %v1414
        %1441 = vmatprep.subr.bf16.mxu0 %v1413
        %1442 = vmatpush1.bf16.msra.mxu0 %v1412
        %1443 = vmatprep.subr.bf16.mxu0 %v1411
        %1444 = vmatpush1.bf16.msra.mxu0 %v1410
        %1445 = vmatprep.subr.bf16.mxu0 0
        %1446 = vmatpush2.bf16.msra.mxu0 0
        %1447 = vmatprep.subr.bf16.mxu0 0
        %1448 = vmatpush2.bf16.msra.mxu0 0
        %1449 = vmatprep.subr.bf16.mxu0 0
        %1450 = vmatpush2.bf16.msra.mxu0 0
        %1451 = vmatprep.subr.bf16.mxu0 0
        %1452 = vmatpush2.bf16.msra.mxu0 0
        %1453 = vmatprep.subr.bf16.mxu0 0
        %1454 = vmatpush2.bf16.msra.mxu0 0
        %1455 = vmatprep.subr.bf16.mxu0 0
        %1456 = vmatpush2.bf16.msra.mxu0 0
        %1457 = vmatprep.subr.bf16.mxu0 0
        %1458 = vmatpush2.bf16.msra.mxu0 0
        %1459 = vmatprep.subr.bf16.mxu0 0
        %1460 = vmatpush2.bf16.msra.mxu0 0
        %1461 = vmatprep.mubr.bf16.mxu0 0
        %1462 = vmatmul.mubr.bf16.gmra.mxu0 %v1427
        %v1463 = vpop.f32.mrf.mxu0
        %v1464 = vadd.f32 0.0, %v1463
        %v1465 = vpop.f32.mrf.mxu0
        %v1466 = vadd.f32 0.0, %v1465
        %v1467 = vpop.f32.mrf.mxu0
        %v1468 = vpop.f32.mrf.mxu0
        %1469 = vdwg.mxu0
        %v1472 = vcombine.low %v1464, %v1466
        %v1474 = vunpack.c.l.s4 1966171168
        %v1475 = vunpack.c.0.s8 %v1474
        %v1476 = vlaneseq
        %v1477 = vshrl.u32 %v1476, 7
        %v1478 = vsub.s32 %v1475, %v1477
        %v1479 = vrot.slane %v1472, %v1478
        %v1481 = vunpack.c.l.s4 1966171168
        %v1482 = vunpack.c.0.s8 %v1481
        %v1483 = vlaneseq
        %v1484 = vshrl.u32 %v1483, 7
        %v1485 = vsub.s32 %v1482, %v1484
        %v1486 = vrot.slane %v1479, %v1485
        %v1488 = vadd.f32 %v1375, %v1486
        %v1489 = vld [vmem:[%s3 + $0x80] sm:$0xff]
        %v1490 = vld [vmem:[%s3 + $0x88] sm:$0xff]
        %v1491 = vld [vmem:[%s3 + $0x90] sm:$0xff]
        %v1492 = vld [vmem:[%s3 + $0x98] sm:$0xff]
        %v1493 = vld [vmem:[%s3 + $0xa0] sm:$0xff]
        %v1494 = vld [vmem:[%s3 + $0xa8] sm:$0xff]
        %v1495 = vld [vmem:[%s3 + $0xb0] sm:$0xff]
        %v1496 = vld [vmem:[%s3 + $0xb8] sm:$0xff]
        %v1498 = vrot.slane %v1262, 1
        %v1507 = vunpack.c.l.b16 %v1489
        %v1508 = vunpack.c.h.b16 %v1489
        %v1509 = vunpack.c.l.b16 %v1490
        %v1510 = vunpack.c.h.b16 %v1490
        %v1511 = vunpack.c.l.b16 %v1491
        %v1512 = vunpack.c.h.b16 %v1491
        %v1513 = vunpack.c.l.b16 %v1492
        %v1514 = vunpack.c.h.b16 %v1492
        %v1515 = vunpack.c.l.b16 %v1493
        %v1516 = vunpack.c.h.b16 %v1493
        %v1517 = vunpack.c.l.b16 %v1494
        %v1518 = vunpack.c.h.b16 %v1494
        %v1519 = vunpack.c.l.b16 %v1495
        %v1520 = vunpack.c.h.b16 %v1495
        %v1521 = vunpack.c.l.b16 %v1496
        %v1522 = vunpack.c.h.b16 %v1496
        %v1523 = vpack.c.b16 %v1509, %v1507
        %v1524 = vpack.c.b16 %v1510, %v1508
        %v1525 = vpack.c.b16 %v1513, %v1511
        %v1526 = vpack.c.b16 %v1514, %v1512
        %v1527 = vpack.c.b16 %v1517, %v1515
        %v1528 = vpack.c.b16 %v1518, %v1516
        %v1529 = vpack.c.b16 %v1521, %v1519
        %v1530 = vpack.c.b16 %v1522, %v1520
        %v1540 = vsel %vm1312, %v1498, 0
        %1542 = vmatprep.subr.bf16.mxu0 0
        %1543 = vmatpush1.bf16.msra.mxu0 0
        %1544 = vmatprep.subr.bf16.mxu0 0
        %1545 = vmatpush1.bf16.msra.mxu0 0
        %1546 = vmatprep.subr.bf16.mxu0 0
        %1547 = vmatpush1.bf16.msra.mxu0 0
        %1548 = vmatprep.subr.bf16.mxu0 0
        %1549 = vmatpush1.bf16.msra.mxu0 0
        %1550 = vmatprep.subr.bf16.mxu0 %v1530
        %1551 = vmatpush1.bf16.msra.mxu0 %v1529
        %1552 = vmatprep.subr.bf16.mxu0 %v1528
        %1553 = vmatpush1.bf16.msra.mxu0 %v1527
        %1554 = vmatprep.subr.bf16.mxu0 %v1526
        %1555 = vmatpush1.bf16.msra.mxu0 %v1525
        %1556 = vmatprep.subr.bf16.mxu0 %v1524
        %1557 = vmatpush1.bf16.msra.mxu0 %v1523
        %1558 = vmatprep.subr.bf16.mxu0 0
        %1559 = vmatpush2.bf16.msra.mxu0 0
        %1560 = vmatprep.subr.bf16.mxu0 0
        %1561 = vmatpush2.bf16.msra.mxu0 0
        %1562 = vmatprep.subr.bf16.mxu0 0
        %1563 = vmatpush2.bf16.msra.mxu0 0
        %1564 = vmatprep.subr.bf16.mxu0 0
        %1565 = vmatpush2.bf16.msra.mxu0 0
        %1566 = vmatprep.subr.bf16.mxu0 0
        %1567 = vmatpush2.bf16.msra.mxu0 0
        %1568 = vmatprep.subr.bf16.mxu0 0
        %1569 = vmatpush2.bf16.msra.mxu0 0
        %1570 = vmatprep.subr.bf16.mxu0 0
        %1571 = vmatpush2.bf16.msra.mxu0 0
        %1572 = vmatprep.subr.bf16.mxu0 0
        %1573 = vmatpush2.bf16.msra.mxu0 0
        %1574 = vmatprep.mubr.bf16.mxu0 0
        %1575 = vmatmul.mubr.bf16.gmra.mxu0 %v1540
        %v1576 = vpop.f32.mrf.mxu0
        %v1577 = vadd.f32 0.0, %v1576
        %v1578 = vpop.f32.mrf.mxu0
        %v1579 = vadd.f32 0.0, %v1578
        %v1580 = vpop.f32.mrf.mxu0
        %v1581 = vpop.f32.mrf.mxu0
        %1582 = vdwg.mxu0
        %v1585 = vcombine.low %v1577, %v1579
        %v1587 = vunpack.c.l.s4 1966171168
        %v1588 = vunpack.c.0.s8 %v1587
        %v1589 = vlaneseq
        %v1590 = vshrl.u32 %v1589, 7
        %v1591 = vsub.s32 %v1588, %v1590
        %v1592 = vrot.slane %v1585, %v1591
        %v1594 = vunpack.c.l.s4 1966171168
        %v1595 = vunpack.c.0.s8 %v1594
        %v1596 = vlaneseq
        %v1597 = vshrl.u32 %v1596, 7
        %v1598 = vsub.s32 %v1595, %v1597
        %v1599 = vrot.slane %v1592, %v1598
        %v1601 = vadd.f32 %v1488, %v1599
        %v1602 = vld [vmem:[%s3 + $0xc0] sm:$0xff]
        %v1603 = vld [vmem:[%s3 + $0xc8] sm:$0xff]
        %v1604 = vld [vmem:[%s3 + $0xd0] sm:$0xff]
        %v1605 = vld [vmem:[%s3 + $0xd8] sm:$0xff]
        %v1606 = vld [vmem:[%s3 + $0xe0] sm:$0xff]
        %v1607 = vld [vmem:[%s3 + $0xe8] sm:$0xff]
        %v1608 = vld [vmem:[%s3 + $0xf0] sm:$0xff]
        %v1609 = vld [vmem:[%s3 + $0xf8] sm:$0xff]
        %v1610 = vrot.slane %v1384, 1
        %v1619 = vunpack.c.l.b16 %v1602
        %v1620 = vunpack.c.h.b16 %v1602
        %v1621 = vunpack.c.l.b16 %v1603
        %v1622 = vunpack.c.h.b16 %v1603
        %v1623 = vunpack.c.l.b16 %v1604
        %v1624 = vunpack.c.h.b16 %v1604
        %v1625 = vunpack.c.l.b16 %v1605
        %v1626 = vunpack.c.h.b16 %v1605
        %v1627 = vunpack.c.l.b16 %v1606
        %v1628 = vunpack.c.h.b16 %v1606
        %v1629 = vunpack.c.l.b16 %v1607
        %v1630 = vunpack.c.h.b16 %v1607
        %v1631 = vunpack.c.l.b16 %v1608
        %v1632 = vunpack.c.h.b16 %v1608
        %v1633 = vunpack.c.l.b16 %v1609
        %v1634 = vunpack.c.h.b16 %v1609
        %v1635 = vpack.c.b16 %v1621, %v1619
        %v1636 = vpack.c.b16 %v1622, %v1620
        %v1637 = vpack.c.b16 %v1625, %v1623
        %v1638 = vpack.c.b16 %v1626, %v1624
        %v1639 = vpack.c.b16 %v1629, %v1627
        %v1640 = vpack.c.b16 %v1630, %v1628
        %v1641 = vpack.c.b16 %v1633, %v1631
        %v1642 = vpack.c.b16 %v1634, %v1632
        %v1652 = vsel %vm1312, %v1610, 0
        %1654 = vmatprep.subr.bf16.mxu0 0
        %1655 = vmatpush1.bf16.msra.mxu0 0
        %1656 = vmatprep.subr.bf16.mxu0 0
        %1657 = vmatpush1.bf16.msra.mxu0 0
        %1658 = vmatprep.subr.bf16.mxu0 0
        %1659 = vmatpush1.bf16.msra.mxu0 0
        %1660 = vmatprep.subr.bf16.mxu0 0
        %1661 = vmatpush1.bf16.msra.mxu0 0
        %1662 = vmatprep.subr.bf16.mxu0 %v1642
        %1663 = vmatpush1.bf16.msra.mxu0 %v1641
        %1664 = vmatprep.subr.bf16.mxu0 %v1640
        %1665 = vmatpush1.bf16.msra.mxu0 %v1639
        %1666 = vmatprep.subr.bf16.mxu0 %v1638
        %1667 = vmatpush1.bf16.msra.mxu0 %v1637
        %1668 = vmatprep.subr.bf16.mxu0 %v1636
        %1669 = vmatpush1.bf16.msra.mxu0 %v1635
        %1670 = vmatprep.subr.bf16.mxu0 0
        %1671 = vmatpush2.bf16.msra.mxu0 0
        %1672 = vmatprep.subr.bf16.mxu0 0
        %1673 = vmatpush2.bf16.msra.mxu0 0
        %1674 = vmatprep.subr.bf16.mxu0 0
        %1675 = vmatpush2.bf16.msra.mxu0 0
        %1676 = vmatprep.subr.bf16.mxu0 0
        %1677 = vmatpush2.bf16.msra.mxu0 0
        %1678 = vmatprep.subr.bf16.mxu0 0
        %1679 = vmatpush2.bf16.msra.mxu0 0
        %1680 = vmatprep.subr.bf16.mxu0 0
        %1681 = vmatpush2.bf16.msra.mxu0 0
        %1682 = vmatprep.subr.bf16.mxu0 0
        %1683 = vmatpush2.bf16.msra.mxu0 0
        %1684 = vmatprep.subr.bf16.mxu0 0
        %1685 = vmatpush2.bf16.msra.mxu0 0
        %1686 = vmatprep.mubr.bf16.mxu0 0
        %1687 = vmatmul.mubr.bf16.gmra.mxu0 %v1652
        %v1688 = vpop.f32.mrf.mxu0
        %v1689 = vadd.f32 0.0, %v1688
        %v1690 = vpop.f32.mrf.mxu0
        %v1691 = vadd.f32 0.0, %v1690
        %v1692 = vpop.f32.mrf.mxu0
        %v1693 = vpop.f32.mrf.mxu0
        %1694 = vdwg.mxu0
        %v1697 = vcombine.low %v1689, %v1691
        %v1699 = vunpack.c.l.s4 1966171168
        %v1700 = vunpack.c.0.s8 %v1699
        %v1701 = vlaneseq
        %v1702 = vshrl.u32 %v1701, 7
        %v1703 = vsub.s32 %v1700, %v1702
        %v1704 = vrot.slane %v1697, %v1703
        %v1706 = vunpack.c.l.s4 1966171168
        %v1707 = vunpack.c.0.s8 %v1706
        %v1708 = vlaneseq
        %v1709 = vshrl.u32 %v1708, 7
        %v1710 = vsub.s32 %v1707, %v1709
        %v1711 = vrot.slane %v1704, %v1710
        %v1713 = vadd.f32 %v1601, %v1711
        %v1714 = vld [vmem:[%s3 + $0x100] sm:$0xff]
        %v1715 = vld [vmem:[%s3 + $0x108] sm:$0xff]
        %v1716 = vld [vmem:[%s3 + $0x110] sm:$0xff]
        %v1717 = vld [vmem:[%s3 + $0x118] sm:$0xff]
        %v1718 = vld [vmem:[%s3 + $0x120] sm:$0xff]
        %v1719 = vld [vmem:[%s3 + $0x128] sm:$0xff]
        %v1720 = vld [vmem:[%s3 + $0x130] sm:$0xff]
        %v1721 = vld [vmem:[%s3 + $0x138] sm:$0xff]
        %v1722 = vrot.slane %v1262, 2
        %v1731 = vunpack.c.l.b16 %v1714
        %v1732 = vunpack.c.h.b16 %v1714
        %v1733 = vunpack.c.l.b16 %v1715
        %v1734 = vunpack.c.h.b16 %v1715
        %v1735 = vunpack.c.l.b16 %v1716
        %v1736 = vunpack.c.h.b16 %v1716
        %v1737 = vunpack.c.l.b16 %v1717
        %v1738 = vunpack.c.h.b16 %v1717
        %v1739 = vunpack.c.l.b16 %v1718
        %v1740 = vunpack.c.h.b16 %v1718
        %v1741 = vunpack.c.l.b16 %v1719
        %v1742 = vunpack.c.h.b16 %v1719
        %v1743 = vunpack.c.l.b16 %v1720
        %v1744 = vunpack.c.h.b16 %v1720
        %v1745 = vunpack.c.l.b16 %v1721
        %v1746 = vunpack.c.h.b16 %v1721
        %v1747 = vpack.c.b16 %v1733, %v1731
        %v1748 = vpack.c.b16 %v1734, %v1732
        %v1749 = vpack.c.b16 %v1737, %v1735
        %v1750 = vpack.c.b16 %v1738, %v1736
        %v1751 = vpack.c.b16 %v1741, %v1739
        %v1752 = vpack.c.b16 %v1742, %v1740
        %v1753 = vpack.c.b16 %v1745, %v1743
        %v1754 = vpack.c.b16 %v1746, %v1744
        %v1764 = vsel %vm1312, %v1722, 0
        %1766 = vmatprep.subr.bf16.mxu0 0
        %1767 = vmatpush1.bf16.msra.mxu0 0
        %1768 = vmatprep.subr.bf16.mxu0 0
        %1769 = vmatpush1.bf16.msra.mxu0 0
        %1770 = vmatprep.subr.bf16.mxu0 0
        %1771 = vmatpush1.bf16.msra.mxu0 0
        %1772 = vmatprep.subr.bf16.mxu0 0
        %1773 = vmatpush1.bf16.msra.mxu0 0
        %1774 = vmatprep.subr.bf16.mxu0 %v1754
        %1775 = vmatpush1.bf16.msra.mxu0 %v1753
        %1776 = vmatprep.subr.bf16.mxu0 %v1752
        %1777 = vmatpush1.bf16.msra.mxu0 %v1751
        %1778 = vmatprep.subr.bf16.mxu0 %v1750
        %1779 = vmatpush1.bf16.msra.mxu0 %v1749
        %1780 = vmatprep.subr.bf16.mxu0 %v1748
        %1781 = vmatpush1.bf16.msra.mxu0 %v1747
        %1782 = vmatprep.subr.bf16.mxu0 0
        %1783 = vmatpush2.bf16.msra.mxu0 0
        %1784 = vmatprep.subr.bf16.mxu0 0
        %1785 = vmatpush2.bf16.msra.mxu0 0
        %1786 = vmatprep.subr.bf16.mxu0 0
        %1787 = vmatpush2.bf16.msra.mxu0 0
        %1788 = vmatprep.subr.bf16.mxu0 0
        %1789 = vmatpush2.bf16.msra.mxu0 0
        %1790 = vmatprep.subr.bf16.mxu0 0
        %1791 = vmatpush2.bf16.msra.mxu0 0
        %1792 = vmatprep.subr.bf16.mxu0 0
        %1793 = vmatpush2.bf16.msra.mxu0 0
        %1794 = vmatprep.subr.bf16.mxu0 0
        %1795 = vmatpush2.bf16.msra.mxu0 0
        %1796 = vmatprep.subr.bf16.mxu0 0
        %1797 = vmatpush2.bf16.msra.mxu0 0
        %1798 = vmatprep.mubr.bf16.mxu0 0
        %1799 = vmatmul.mubr.bf16.gmra.mxu0 %v1764
        %v1800 = vpop.f32.mrf.mxu0
        %v1801 = vadd.f32 0.0, %v1800
        %v1802 = vpop.f32.mrf.mxu0
        %v1803 = vadd.f32 0.0, %v1802
        %v1804 = vpop.f32.mrf.mxu0
        %v1805 = vpop.f32.mrf.mxu0
        %1806 = vdwg.mxu0
        %v1809 = vcombine.low %v1801, %v1803
        %v1811 = vunpack.c.l.s4 1966171168
        %v1812 = vunpack.c.0.s8 %v1811
        %v1813 = vlaneseq
        %v1814 = vshrl.u32 %v1813, 7
        %v1815 = vsub.s32 %v1812, %v1814
        %v1816 = vrot.slane %v1809, %v1815
        %v1818 = vunpack.c.l.s4 1966171168
        %v1819 = vunpack.c.0.s8 %v1818
        %v1820 = vlaneseq
        %v1821 = vshrl.u32 %v1820, 7
        %v1822 = vsub.s32 %v1819, %v1821
        %v1823 = vrot.slane %v1816, %v1822
        %v1825 = vadd.f32 %v1713, %v1823
        %v1826 = vld [vmem:[%s3 + $0x140] sm:$0xff]
        %v1827 = vld [vmem:[%s3 + $0x148] sm:$0xff]
        %v1828 = vld [vmem:[%s3 + $0x150] sm:$0xff]
        %v1829 = vld [vmem:[%s3 + $0x158] sm:$0xff]
        %v1830 = vld [vmem:[%s3 + $0x160] sm:$0xff]
        %v1831 = vld [vmem:[%s3 + $0x168] sm:$0xff]
        %v1832 = vld [vmem:[%s3 + $0x170] sm:$0xff]
        %v1833 = vld [vmem:[%s3 + $0x178] sm:$0xff]
        %v1834 = vrot.slane %v1384, 2
        %v1843 = vunpack.c.l.b16 %v1826
        %v1844 = vunpack.c.h.b16 %v1826
        %v1845 = vunpack.c.l.b16 %v1827
        %v1846 = vunpack.c.h.b16 %v1827
        %v1847 = vunpack.c.l.b16 %v1828
        %v1848 = vunpack.c.h.b16 %v1828
        %v1849 = vunpack.c.l.b16 %v1829
        %v1850 = vunpack.c.h.b16 %v1829
        %v1851 = vunpack.c.l.b16 %v1830
        %v1852 = vunpack.c.h.b16 %v1830
        %v1853 = vunpack.c.l.b16 %v1831
        %v1854 = vunpack.c.h.b16 %v1831
        %v1855 = vunpack.c.l.b16 %v1832
        %v1856 = vunpack.c.h.b16 %v1832
        %v1857 = vunpack.c.l.b16 %v1833
        %v1858 = vunpack.c.h.b16 %v1833
        %v1859 = vpack.c.b16 %v1845, %v1843
        %v1860 = vpack.c.b16 %v1846, %v1844
        %v1861 = vpack.c.b16 %v1849, %v1847
        %v1862 = vpack.c.b16 %v1850, %v1848
        %v1863 = vpack.c.b16 %v1853, %v1851
        %v1864 = vpack.c.b16 %v1854, %v1852
        %v1865 = vpack.c.b16 %v1857, %v1855
        %v1866 = vpack.c.b16 %v1858, %v1856
        %v1876 = vsel %vm1312, %v1834, 0
        %1878 = vmatprep.subr.bf16.mxu0 0
        %1879 = vmatpush1.bf16.msra.mxu0 0
        %1880 = vmatprep.subr.bf16.mxu0 0
        %1881 = vmatpush1.bf16.msra.mxu0 0
        %1882 = vmatprep.subr.bf16.mxu0 0
        %1883 = vmatpush1.bf16.msra.mxu0 0
        %1884 = vmatprep.subr.bf16.mxu0 0
        %1885 = vmatpush1.bf16.msra.mxu0 0
        %1886 = vmatprep.subr.bf16.mxu0 %v1866
        %1887 = vmatpush1.bf16.msra.mxu0 %v1865
        %1888 = vmatprep.subr.bf16.mxu0 %v1864
        %1889 = vmatpush1.bf16.msra.mxu0 %v1863
        %1890 = vmatprep.subr.bf16.mxu0 %v1862
        %1891 = vmatpush1.bf16.msra.mxu0 %v1861
        %1892 = vmatprep.subr.bf16.mxu0 %v1860
        %1893 = vmatpush1.bf16.msra.mxu0 %v1859
        %1894 = vmatprep.subr.bf16.mxu0 0
        %1895 = vmatpush2.bf16.msra.mxu0 0
        %1896 = vmatprep.subr.bf16.mxu0 0
        %1897 = vmatpush2.bf16.msra.mxu0 0
        %1898 = vmatprep.subr.bf16.mxu0 0
        %1899 = vmatpush2.bf16.msra.mxu0 0
        %1900 = vmatprep.subr.bf16.mxu0 0
        %1901 = vmatpush2.bf16.msra.mxu0 0
        %1902 = vmatprep.subr.bf16.mxu0 0
        %1903 = vmatpush2.bf16.msra.mxu0 0
        %1904 = vmatprep.subr.bf16.mxu0 0
        %1905 = vmatpush2.bf16.msra.mxu0 0
        %1906 = vmatprep.subr.bf16.mxu0 0
        %1907 = vmatpush2.bf16.msra.mxu0 0
        %1908 = vmatprep.subr.bf16.mxu0 0
        %1909 = vmatpush2.bf16.msra.mxu0 0
        %1910 = vmatprep.mubr.bf16.mxu0 0
        %1911 = vmatmul.mubr.bf16.gmra.mxu0 %v1876
        %v1912 = vpop.f32.mrf.mxu0
        %v1913 = vadd.f32 0.0, %v1912
        %v1914 = vpop.f32.mrf.mxu0
        %v1915 = vadd.f32 0.0, %v1914
        %v1916 = vpop.f32.mrf.mxu0
        %v1917 = vpop.f32.mrf.mxu0
        %1918 = vdwg.mxu0
        %v1921 = vcombine.low %v1913, %v1915
        %v1923 = vunpack.c.l.s4 1966171168
        %v1924 = vunpack.c.0.s8 %v1923
        %v1925 = vlaneseq
        %v1926 = vshrl.u32 %v1925, 7
        %v1927 = vsub.s32 %v1924, %v1926
        %v1928 = vrot.slane %v1921, %v1927
        %v1930 = vunpack.c.l.s4 1966171168
        %v1931 = vunpack.c.0.s8 %v1930
        %v1932 = vlaneseq
        %v1933 = vshrl.u32 %v1932, 7
        %v1934 = vsub.s32 %v1931, %v1933
        %v1935 = vrot.slane %v1928, %v1934
        %v1937 = vadd.f32 %v1825, %v1935
        %v1938 = vld [vmem:[%s3 + $0x180] sm:$0xff]
        %v1939 = vld [vmem:[%s3 + $0x188] sm:$0xff]
        %v1940 = vld [vmem:[%s3 + $0x190] sm:$0xff]
        %v1941 = vld [vmem:[%s3 + $0x198] sm:$0xff]
        %v1942 = vld [vmem:[%s3 + $0x1a0] sm:$0xff]
        %v1943 = vld [vmem:[%s3 + $0x1a8] sm:$0xff]
        %v1944 = vld [vmem:[%s3 + $0x1b0] sm:$0xff]
        %v1945 = vld [vmem:[%s3 + $0x1b8] sm:$0xff]
        %v1946 = vrot.slane %v1262, 3
        %v1955 = vunpack.c.l.b16 %v1938
        %v1956 = vunpack.c.h.b16 %v1938
        %v1957 = vunpack.c.l.b16 %v1939
        %v1958 = vunpack.c.h.b16 %v1939
        %v1959 = vunpack.c.l.b16 %v1940
        %v1960 = vunpack.c.h.b16 %v1940
        %v1961 = vunpack.c.l.b16 %v1941
        %v1962 = vunpack.c.h.b16 %v1941
        %v1963 = vunpack.c.l.b16 %v1942
        %v1964 = vunpack.c.h.b16 %v1942
        %v1965 = vunpack.c.l.b16 %v1943
        %v1966 = vunpack.c.h.b16 %v1943
        %v1967 = vunpack.c.l.b16 %v1944
        %v1968 = vunpack.c.h.b16 %v1944
        %v1969 = vunpack.c.l.b16 %v1945
        %v1970 = vunpack.c.h.b16 %v1945
        %v1971 = vpack.c.b16 %v1957, %v1955
        %v1972 = vpack.c.b16 %v1958, %v1956
        %v1973 = vpack.c.b16 %v1961, %v1959
        %v1974 = vpack.c.b16 %v1962, %v1960
        %v1975 = vpack.c.b16 %v1965, %v1963
        %v1976 = vpack.c.b16 %v1966, %v1964
        %v1977 = vpack.c.b16 %v1969, %v1967
        %v1978 = vpack.c.b16 %v1970, %v1968
        %v1988 = vsel %vm1312, %v1946, 0
        %1990 = vmatprep.subr.bf16.mxu0 0
        %1991 = vmatpush1.bf16.msra.mxu0 0
        %1992 = vmatprep.subr.bf16.mxu0 0
        %1993 = vmatpush1.bf16.msra.mxu0 0
        %1994 = vmatprep.subr.bf16.mxu0 0
        %1995 = vmatpush1.bf16.msra.mxu0 0
        %1996 = vmatprep.subr.bf16.mxu0 0
        %1997 = vmatpush1.bf16.msra.mxu0 0
        %1998 = vmatprep.subr.bf16.mxu0 %v1978
        %1999 = vmatpush1.bf16.msra.mxu0 %v1977
        %2000 = vmatprep.subr.bf16.mxu0 %v1976
        %2001 = vmatpush1.bf16.msra.mxu0 %v1975
        %2002 = vmatprep.subr.bf16.mxu0 %v1974
        %2003 = vmatpush1.bf16.msra.mxu0 %v1973
        %2004 = vmatprep.subr.bf16.mxu0 %v1972
        %2005 = vmatpush1.bf16.msra.mxu0 %v1971
        %2006 = vmatprep.subr.bf16.mxu0 0
        %2007 = vmatpush2.bf16.msra.mxu0 0
        %2008 = vmatprep.subr.bf16.mxu0 0
        %2009 = vmatpush2.bf16.msra.mxu0 0
        %2010 = vmatprep.subr.bf16.mxu0 0
        %2011 = vmatpush2.bf16.msra.mxu0 0
        %2012 = vmatprep.subr.bf16.mxu0 0
        %2013 = vmatpush2.bf16.msra.mxu0 0
        %2014 = vmatprep.subr.bf16.mxu0 0
        %2015 = vmatpush2.bf16.msra.mxu0 0
        %2016 = vmatprep.subr.bf16.mxu0 0
        %2017 = vmatpush2.bf16.msra.mxu0 0
        %2018 = vmatprep.subr.bf16.mxu0 0
        %2019 = vmatpush2.bf16.msra.mxu0 0
        %2020 = vmatprep.subr.bf16.mxu0 0
        %2021 = vmatpush2.bf16.msra.mxu0 0
        %2022 = vmatprep.mubr.bf16.mxu0 0
        %2023 = vmatmul.mubr.bf16.gmra.mxu0 %v1988
        %v2024 = vpop.f32.mrf.mxu0
        %v2025 = vadd.f32 0.0, %v2024
        %v2026 = vpop.f32.mrf.mxu0
        %v2027 = vadd.f32 0.0, %v2026
        %v2028 = vpop.f32.mrf.mxu0
        %v2029 = vpop.f32.mrf.mxu0
        %2030 = vdwg.mxu0
        %v2033 = vcombine.low %v2025, %v2027
        %v2035 = vunpack.c.l.s4 1966171168
        %v2036 = vunpack.c.0.s8 %v2035
        %v2037 = vlaneseq
        %v2038 = vshrl.u32 %v2037, 7
        %v2039 = vsub.s32 %v2036, %v2038
        %v2040 = vrot.slane %v2033, %v2039
        %v2042 = vunpack.c.l.s4 1966171168
        %v2043 = vunpack.c.0.s8 %v2042
        %v2044 = vlaneseq
        %v2045 = vshrl.u32 %v2044, 7
        %v2046 = vsub.s32 %v2043, %v2045
        %v2047 = vrot.slane %v2040, %v2046
        %v2049 = vadd.f32 %v1937, %v2047
        %v2050 = vld [vmem:[%s3 + $0x1c0] sm:$0xff]
        %v2051 = vld [vmem:[%s3 + $0x1c8] sm:$0xff]
        %v2052 = vld [vmem:[%s3 + $0x1d0] sm:$0xff]
        %v2053 = vld [vmem:[%s3 + $0x1d8] sm:$0xff]
        %v2054 = vld [vmem:[%s3 + $0x1e0] sm:$0xff]
        %v2055 = vld [vmem:[%s3 + $0x1e8] sm:$0xff]
        %v2056 = vld [vmem:[%s3 + $0x1f0] sm:$0xff]
        %v2057 = vld [vmem:[%s3 + $0x1f8] sm:$0xff]
        %v2058 = vrot.slane %v1384, 3
        %v2067 = vunpack.c.l.b16 %v2050
        %v2068 = vunpack.c.h.b16 %v2050
        %v2069 = vunpack.c.l.b16 %v2051
        %v2070 = vunpack.c.h.b16 %v2051
        %v2071 = vunpack.c.l.b16 %v2052
        %v2072 = vunpack.c.h.b16 %v2052
        %v2073 = vunpack.c.l.b16 %v2053
        %v2074 = vunpack.c.h.b16 %v2053
        %v2075 = vunpack.c.l.b16 %v2054
        %v2076 = vunpack.c.h.b16 %v2054
        %v2077 = vunpack.c.l.b16 %v2055
        %v2078 = vunpack.c.h.b16 %v2055
        %v2079 = vunpack.c.l.b16 %v2056
        %v2080 = vunpack.c.h.b16 %v2056
        %v2081 = vunpack.c.l.b16 %v2057
        %v2082 = vunpack.c.h.b16 %v2057
        %v2083 = vpack.c.b16 %v2069, %v2067
        %v2084 = vpack.c.b16 %v2070, %v2068
        %v2085 = vpack.c.b16 %v2073, %v2071
        %v2086 = vpack.c.b16 %v2074, %v2072
        %v2087 = vpack.c.b16 %v2077, %v2075
        %v2088 = vpack.c.b16 %v2078, %v2076
        %v2089 = vpack.c.b16 %v2081, %v2079
        %v2090 = vpack.c.b16 %v2082, %v2080
        %v2100 = vsel %vm1312, %v2058, 0
        %2102 = vmatprep.subr.bf16.mxu0 0
        %2103 = vmatpush1.bf16.msra.mxu0 0
        %2104 = vmatprep.subr.bf16.mxu0 0
        %2105 = vmatpush1.bf16.msra.mxu0 0
        %2106 = vmatprep.subr.bf16.mxu0 0
        %2107 = vmatpush1.bf16.msra.mxu0 0
        %2108 = vmatprep.subr.bf16.mxu0 0
        %2109 = vmatpush1.bf16.msra.mxu0 0
        %2110 = vmatprep.subr.bf16.mxu0 %v2090
        %2111 = vmatpush1.bf16.msra.mxu0 %v2089
        %2112 = vmatprep.subr.bf16.mxu0 %v2088
        %2113 = vmatpush1.bf16.msra.mxu0 %v2087
        %2114 = vmatprep.subr.bf16.mxu0 %v2086
        %2115 = vmatpush1.bf16.msra.mxu0 %v2085
        %2116 = vmatprep.subr.bf16.mxu0 %v2084
        %2117 = vmatpush1.bf16.msra.mxu0 %v2083
        %2118 = vmatprep.subr.bf16.mxu0 0
        %2119 = vmatpush2.bf16.msra.mxu0 0
        %2120 = vmatprep.subr.bf16.mxu0 0
        %2121 = vmatpush2.bf16.msra.mxu0 0
        %2122 = vmatprep.subr.bf16.mxu0 0
        %2123 = vmatpush2.bf16.msra.mxu0 0
        %2124 = vmatprep.subr.bf16.mxu0 0
        %2125 = vmatpush2.bf16.msra.mxu0 0
        %2126 = vmatprep.subr.bf16.mxu0 0
        %2127 = vmatpush2.bf16.msra.mxu0 0
        %2128 = vmatprep.subr.bf16.mxu0 0
        %2129 = vmatpush2.bf16.msra.mxu0 0
        %2130 = vmatprep.subr.bf16.mxu0 0
        %2131 = vmatpush2.bf16.msra.mxu0 0
        %2132 = vmatprep.subr.bf16.mxu0 0
        %2133 = vmatpush2.bf16.msra.mxu0 0
        %2134 = vmatprep.mubr.bf16.mxu0 0
        %2135 = vmatmul.mubr.bf16.gmra.mxu0 %v2100
        %v2136 = vpop.f32.mrf.mxu0
        %v2137 = vadd.f32 0.0, %v2136
        %v2138 = vpop.f32.mrf.mxu0
        %v2139 = vadd.f32 0.0, %v2138
        %v2140 = vpop.f32.mrf.mxu0
        %v2141 = vpop.f32.mrf.mxu0
        %2142 = vdwg.mxu0
        %v2145 = vcombine.low %v2137, %v2139
        %v2147 = vunpack.c.l.s4 1966171168
        %v2148 = vunpack.c.0.s8 %v2147
        %v2149 = vlaneseq
        %v2150 = vshrl.u32 %v2149, 7
        %v2151 = vsub.s32 %v2148, %v2150
        %v2152 = vrot.slane %v2145, %v2151
        %v2154 = vunpack.c.l.s4 1966171168
        %v2155 = vunpack.c.0.s8 %v2154
        %v2156 = vlaneseq
        %v2157 = vshrl.u32 %v2156, 7
        %v2158 = vsub.s32 %v2155, %v2157
        %v2159 = vrot.slane %v2152, %v2158
        %v2161 = vadd.f32 %v2049, %v2159
        %v2162 = vld [vmem:[%s3 + $0x200] sm:$0xff]
        %v2163 = vld [vmem:[%s3 + $0x208] sm:$0xff]
        %v2164 = vld [vmem:[%s3 + $0x210] sm:$0xff]
        %v2165 = vld [vmem:[%s3 + $0x218] sm:$0xff]
        %v2166 = vld [vmem:[%s3 + $0x220] sm:$0xff]
        %v2167 = vld [vmem:[%s3 + $0x228] sm:$0xff]
        %v2168 = vld [vmem:[%s3 + $0x230] sm:$0xff]
        %v2169 = vld [vmem:[%s3 + $0x238] sm:$0xff]
        %v2170 = vrot.slane %v1262, 4
        %v2179 = vunpack.c.l.b16 %v2162
        %v2180 = vunpack.c.h.b16 %v2162
        %v2181 = vunpack.c.l.b16 %v2163
        %v2182 = vunpack.c.h.b16 %v2163
        %v2183 = vunpack.c.l.b16 %v2164
        %v2184 = vunpack.c.h.b16 %v2164
        %v2185 = vunpack.c.l.b16 %v2165
        %v2186 = vunpack.c.h.b16 %v2165
        %v2187 = vunpack.c.l.b16 %v2166
        %v2188 = vunpack.c.h.b16 %v2166
        %v2189 = vunpack.c.l.b16 %v2167
        %v2190 = vunpack.c.h.b16 %v2167
        %v2191 = vunpack.c.l.b16 %v2168
        %v2192 = vunpack.c.h.b16 %v2168
        %v2193 = vunpack.c.l.b16 %v2169
        %v2194 = vunpack.c.h.b16 %v2169
        %v2195 = vpack.c.b16 %v2181, %v2179
        %v2196 = vpack.c.b16 %v2182, %v2180
        %v2197 = vpack.c.b16 %v2185, %v2183
        %v2198 = vpack.c.b16 %v2186, %v2184
        %v2199 = vpack.c.b16 %v2189, %v2187
        %v2200 = vpack.c.b16 %v2190, %v2188
        %v2201 = vpack.c.b16 %v2193, %v2191
        %v2202 = vpack.c.b16 %v2194, %v2192
        %v2212 = vsel %vm1312, %v2170, 0
        %2214 = vmatprep.subr.bf16.mxu0 0
        %2215 = vmatpush1.bf16.msra.mxu0 0
        %2216 = vmatprep.subr.bf16.mxu0 0
        %2217 = vmatpush1.bf16.msra.mxu0 0
        %2218 = vmatprep.subr.bf16.mxu0 0
        %2219 = vmatpush1.bf16.msra.mxu0 0
        %2220 = vmatprep.subr.bf16.mxu0 0
        %2221 = vmatpush1.bf16.msra.mxu0 0
        %2222 = vmatprep.subr.bf16.mxu0 %v2202
        %2223 = vmatpush1.bf16.msra.mxu0 %v2201
        %2224 = vmatprep.subr.bf16.mxu0 %v2200
        %2225 = vmatpush1.bf16.msra.mxu0 %v2199
        %2226 = vmatprep.subr.bf16.mxu0 %v2198
        %2227 = vmatpush1.bf16.msra.mxu0 %v2197
        %2228 = vmatprep.subr.bf16.mxu0 %v2196
        %2229 = vmatpush1.bf16.msra.mxu0 %v2195
        %2230 = vmatprep.subr.bf16.mxu0 0
        %2231 = vmatpush2.bf16.msra.mxu0 0
        %2232 = vmatprep.subr.bf16.mxu0 0
        %2233 = vmatpush2.bf16.msra.mxu0 0
        %2234 = vmatprep.subr.bf16.mxu0 0
        %2235 = vmatpush2.bf16.msra.mxu0 0
        %2236 = vmatprep.subr.bf16.mxu0 0
        %2237 = vmatpush2.bf16.msra.mxu0 0
        %2238 = vmatprep.subr.bf16.mxu0 0
        %2239 = vmatpush2.bf16.msra.mxu0 0
        %2240 = vmatprep.subr.bf16.mxu0 0
        %2241 = vmatpush2.bf16.msra.mxu0 0
        %2242 = vmatprep.subr.bf16.mxu0 0
        %2243 = vmatpush2.bf16.msra.mxu0 0
        %2244 = vmatprep.subr.bf16.mxu0 0
        %2245 = vmatpush2.bf16.msra.mxu0 0
        %2246 = vmatprep.mubr.bf16.mxu0 0
        %2247 = vmatmul.mubr.bf16.gmra.mxu0 %v2212
        %v2248 = vpop.f32.mrf.mxu0
        %v2249 = vadd.f32 0.0, %v2248
        %v2250 = vpop.f32.mrf.mxu0
        %v2251 = vadd.f32 0.0, %v2250
        %v2252 = vpop.f32.mrf.mxu0
        %v2253 = vpop.f32.mrf.mxu0
        %2254 = vdwg.mxu0
        %v2257 = vcombine.low %v2249, %v2251
        %v2259 = vunpack.c.l.s4 1966171168
        %v2260 = vunpack.c.0.s8 %v2259
        %v2261 = vlaneseq
        %v2262 = vshrl.u32 %v2261, 7
        %v2263 = vsub.s32 %v2260, %v2262
        %v2264 = vrot.slane %v2257, %v2263
        %v2266 = vunpack.c.l.s4 1966171168
        %v2267 = vunpack.c.0.s8 %v2266
        %v2268 = vlaneseq
        %v2269 = vshrl.u32 %v2268, 7
        %v2270 = vsub.s32 %v2267, %v2269
        %v2271 = vrot.slane %v2264, %v2270
        %v2273 = vadd.f32 %v2161, %v2271
        %v2274 = vld [vmem:[%s3 + $0x240] sm:$0xff]
        %v2275 = vld [vmem:[%s3 + $0x248] sm:$0xff]
        %v2276 = vld [vmem:[%s3 + $0x250] sm:$0xff]
        %v2277 = vld [vmem:[%s3 + $0x258] sm:$0xff]
        %v2278 = vld [vmem:[%s3 + $0x260] sm:$0xff]
        %v2279 = vld [vmem:[%s3 + $0x268] sm:$0xff]
        %v2280 = vld [vmem:[%s3 + $0x270] sm:$0xff]
        %v2281 = vld [vmem:[%s3 + $0x278] sm:$0xff]
        %v2282 = vrot.slane %v1384, 4
        %v2291 = vunpack.c.l.b16 %v2274
        %v2292 = vunpack.c.h.b16 %v2274
        %v2293 = vunpack.c.l.b16 %v2275
        %v2294 = vunpack.c.h.b16 %v2275
        %v2295 = vunpack.c.l.b16 %v2276
        %v2296 = vunpack.c.h.b16 %v2276
        %v2297 = vunpack.c.l.b16 %v2277
        %v2298 = vunpack.c.h.b16 %v2277
        %v2299 = vunpack.c.l.b16 %v2278
        %v2300 = vunpack.c.h.b16 %v2278
        %v2301 = vunpack.c.l.b16 %v2279
        %v2302 = vunpack.c.h.b16 %v2279
        %v2303 = vunpack.c.l.b16 %v2280
        %v2304 = vunpack.c.h.b16 %v2280
        %v2305 = vunpack.c.l.b16 %v2281
        %v2306 = vunpack.c.h.b16 %v2281
        %v2307 = vpack.c.b16 %v2293, %v2291
        %v2308 = vpack.c.b16 %v2294, %v2292
        %v2309 = vpack.c.b16 %v2297, %v2295
        %v2310 = vpack.c.b16 %v2298, %v2296
        %v2311 = vpack.c.b16 %v2301, %v2299
        %v2312 = vpack.c.b16 %v2302, %v2300
        %v2313 = vpack.c.b16 %v2305, %v2303
        %v2314 = vpack.c.b16 %v2306, %v2304
        %v2324 = vsel %vm1312, %v2282, 0
        %2326 = vmatprep.subr.bf16.mxu0 0
        %2327 = vmatpush1.bf16.msra.mxu0 0
        %2328 = vmatprep.subr.bf16.mxu0 0
        %2329 = vmatpush1.bf16.msra.mxu0 0
        %2330 = vmatprep.subr.bf16.mxu0 0
        %2331 = vmatpush1.bf16.msra.mxu0 0
        %2332 = vmatprep.subr.bf16.mxu0 0
        %2333 = vmatpush1.bf16.msra.mxu0 0
        %2334 = vmatprep.subr.bf16.mxu0 %v2314
        %2335 = vmatpush1.bf16.msra.mxu0 %v2313
        %2336 = vmatprep.subr.bf16.mxu0 %v2312
        %2337 = vmatpush1.bf16.msra.mxu0 %v2311
        %2338 = vmatprep.subr.bf16.mxu0 %v2310
        %2339 = vmatpush1.bf16.msra.mxu0 %v2309
        %2340 = vmatprep.subr.bf16.mxu0 %v2308
        %2341 = vmatpush1.bf16.msra.mxu0 %v2307
        %2342 = vmatprep.subr.bf16.mxu0 0
        %2343 = vmatpush2.bf16.msra.mxu0 0
        %2344 = vmatprep.subr.bf16.mxu0 0
        %2345 = vmatpush2.bf16.msra.mxu0 0
        %2346 = vmatprep.subr.bf16.mxu0 0
        %2347 = vmatpush2.bf16.msra.mxu0 0
        %2348 = vmatprep.subr.bf16.mxu0 0
        %2349 = vmatpush2.bf16.msra.mxu0 0
        %2350 = vmatprep.subr.bf16.mxu0 0
        %2351 = vmatpush2.bf16.msra.mxu0 0
        %2352 = vmatprep.subr.bf16.mxu0 0
        %2353 = vmatpush2.bf16.msra.mxu0 0
        %2354 = vmatprep.subr.bf16.mxu0 0
        %2355 = vmatpush2.bf16.msra.mxu0 0
        %2356 = vmatprep.subr.bf16.mxu0 0
        %2357 = vmatpush2.bf16.msra.mxu0 0
        %2358 = vmatprep.mubr.bf16.mxu0 0
        %2359 = vmatmul.mubr.bf16.gmra.mxu0 %v2324
        %v2360 = vpop.f32.mrf.mxu0
        %v2361 = vadd.f32 0.0, %v2360
        %v2362 = vpop.f32.mrf.mxu0
        %v2363 = vadd.f32 0.0, %v2362
        %v2364 = vpop.f32.mrf.mxu0
        %v2365 = vpop.f32.mrf.mxu0
        %2366 = vdwg.mxu0
        %v2369 = vcombine.low %v2361, %v2363
        %v2371 = vunpack.c.l.s4 1966171168
        %v2372 = vunpack.c.0.s8 %v2371
        %v2373 = vlaneseq
        %v2374 = vshrl.u32 %v2373, 7
        %v2375 = vsub.s32 %v2372, %v2374
        %v2376 = vrot.slane %v2369, %v2375
        %v2378 = vunpack.c.l.s4 1966171168
        %v2379 = vunpack.c.0.s8 %v2378
        %v2380 = vlaneseq
        %v2381 = vshrl.u32 %v2380, 7
        %v2382 = vsub.s32 %v2379, %v2381
        %v2383 = vrot.slane %v2376, %v2382
        %v2385 = vadd.f32 %v2273, %v2383
        %v2386 = vld [vmem:[%s3 + $0x280] sm:$0xff]
        %v2387 = vld [vmem:[%s3 + $0x288] sm:$0xff]
        %v2388 = vld [vmem:[%s3 + $0x290] sm:$0xff]
        %v2389 = vld [vmem:[%s3 + $0x298] sm:$0xff]
        %v2390 = vld [vmem:[%s3 + $0x2a0] sm:$0xff]
        %v2391 = vld [vmem:[%s3 + $0x2a8] sm:$0xff]
        %v2392 = vld [vmem:[%s3 + $0x2b0] sm:$0xff]
        %v2393 = vld [vmem:[%s3 + $0x2b8] sm:$0xff]
        %v2394 = vrot.slane %v1262, 5
        %v2403 = vunpack.c.l.b16 %v2386
        %v2404 = vunpack.c.h.b16 %v2386
        %v2405 = vunpack.c.l.b16 %v2387
        %v2406 = vunpack.c.h.b16 %v2387
        %v2407 = vunpack.c.l.b16 %v2388
        %v2408 = vunpack.c.h.b16 %v2388
        %v2409 = vunpack.c.l.b16 %v2389
        %v2410 = vunpack.c.h.b16 %v2389
        %v2411 = vunpack.c.l.b16 %v2390
        %v2412 = vunpack.c.h.b16 %v2390
        %v2413 = vunpack.c.l.b16 %v2391
        %v2414 = vunpack.c.h.b16 %v2391
        %v2415 = vunpack.c.l.b16 %v2392
        %v2416 = vunpack.c.h.b16 %v2392
        %v2417 = vunpack.c.l.b16 %v2393
        %v2418 = vunpack.c.h.b16 %v2393
        %v2419 = vpack.c.b16 %v2405, %v2403
        %v2420 = vpack.c.b16 %v2406, %v2404
        %v2421 = vpack.c.b16 %v2409, %v2407
        %v2422 = vpack.c.b16 %v2410, %v2408
        %v2423 = vpack.c.b16 %v2413, %v2411
        %v2424 = vpack.c.b16 %v2414, %v2412
        %v2425 = vpack.c.b16 %v2417, %v2415
        %v2426 = vpack.c.b16 %v2418, %v2416
        %v2436 = vsel %vm1312, %v2394, 0
        %2438 = vmatprep.subr.bf16.mxu0 0
        %2439 = vmatpush1.bf16.msra.mxu0 0
        %2440 = vmatprep.subr.bf16.mxu0 0
        %2441 = vmatpush1.bf16.msra.mxu0 0
        %2442 = vmatprep.subr.bf16.mxu0 0
        %2443 = vmatpush1.bf16.msra.mxu0 0
        %2444 = vmatprep.subr.bf16.mxu0 0
        %2445 = vmatpush1.bf16.msra.mxu0 0
        %2446 = vmatprep.subr.bf16.mxu0 %v2426
        %2447 = vmatpush1.bf16.msra.mxu0 %v2425
        %2448 = vmatprep.subr.bf16.mxu0 %v2424
        %2449 = vmatpush1.bf16.msra.mxu0 %v2423
        %2450 = vmatprep.subr.bf16.mxu0 %v2422
        %2451 = vmatpush1.bf16.msra.mxu0 %v2421
        %2452 = vmatprep.subr.bf16.mxu0 %v2420
        %2453 = vmatpush1.bf16.msra.mxu0 %v2419
        %2454 = vmatprep.subr.bf16.mxu0 0
        %2455 = vmatpush2.bf16.msra.mxu0 0
        %2456 = vmatprep.subr.bf16.mxu0 0
        %2457 = vmatpush2.bf16.msra.mxu0 0
        %2458 = vmatprep.subr.bf16.mxu0 0
        %2459 = vmatpush2.bf16.msra.mxu0 0
        %2460 = vmatprep.subr.bf16.mxu0 0
        %2461 = vmatpush2.bf16.msra.mxu0 0
        %2462 = vmatprep.subr.bf16.mxu0 0
        %2463 = vmatpush2.bf16.msra.mxu0 0
        %2464 = vmatprep.subr.bf16.mxu0 0
        %2465 = vmatpush2.bf16.msra.mxu0 0
        %2466 = vmatprep.subr.bf16.mxu0 0
        %2467 = vmatpush2.bf16.msra.mxu0 0
        %2468 = vmatprep.subr.bf16.mxu0 0
        %2469 = vmatpush2.bf16.msra.mxu0 0
        %2470 = vmatprep.mubr.bf16.mxu0 0
        %2471 = vmatmul.mubr.bf16.gmra.mxu0 %v2436
        %v2472 = vpop.f32.mrf.mxu0
        %v2473 = vadd.f32 0.0, %v2472
        %v2474 = vpop.f32.mrf.mxu0
        %v2475 = vadd.f32 0.0, %v2474
        %v2476 = vpop.f32.mrf.mxu0
        %v2477 = vpop.f32.mrf.mxu0
        %2478 = vdwg.mxu0
        %v2481 = vcombine.low %v2473, %v2475
        %v2483 = vunpack.c.l.s4 1966171168
        %v2484 = vunpack.c.0.s8 %v2483
        %v2485 = vlaneseq
        %v2486 = vshrl.u32 %v2485, 7
        %v2487 = vsub.s32 %v2484, %v2486
        %v2488 = vrot.slane %v2481, %v2487
        %v2490 = vunpack.c.l.s4 1966171168
        %v2491 = vunpack.c.0.s8 %v2490
        %v2492 = vlaneseq
        %v2493 = vshrl.u32 %v2492, 7
        %v2494 = vsub.s32 %v2491, %v2493
        %v2495 = vrot.slane %v2488, %v2494
        %v2497 = vadd.f32 %v2385, %v2495
        %v2498 = vld [vmem:[%s3 + $0x2c0] sm:$0xff]
        %v2499 = vld [vmem:[%s3 + $0x2c8] sm:$0xff]
        %v2500 = vld [vmem:[%s3 + $0x2d0] sm:$0xff]
        %v2501 = vld [vmem:[%s3 + $0x2d8] sm:$0xff]
        %v2502 = vld [vmem:[%s3 + $0x2e0] sm:$0xff]
        %v2503 = vld [vmem:[%s3 + $0x2e8] sm:$0xff]
        %v2504 = vld [vmem:[%s3 + $0x2f0] sm:$0xff]
        %v2505 = vld [vmem:[%s3 + $0x2f8] sm:$0xff]
        %v2506 = vrot.slane %v1384, 5
        %v2515 = vunpack.c.l.b16 %v2498
        %v2516 = vunpack.c.h.b16 %v2498
        %v2517 = vunpack.c.l.b16 %v2499
        %v2518 = vunpack.c.h.b16 %v2499
        %v2519 = vunpack.c.l.b16 %v2500
        %v2520 = vunpack.c.h.b16 %v2500
        %v2521 = vunpack.c.l.b16 %v2501
        %v2522 = vunpack.c.h.b16 %v2501
        %v2523 = vunpack.c.l.b16 %v2502
        %v2524 = vunpack.c.h.b16 %v2502
        %v2525 = vunpack.c.l.b16 %v2503
        %v2526 = vunpack.c.h.b16 %v2503
        %v2527 = vunpack.c.l.b16 %v2504
        %v2528 = vunpack.c.h.b16 %v2504
        %v2529 = vunpack.c.l.b16 %v2505
        %v2530 = vunpack.c.h.b16 %v2505
        %v2531 = vpack.c.b16 %v2517, %v2515
        %v2532 = vpack.c.b16 %v2518, %v2516
        %v2533 = vpack.c.b16 %v2521, %v2519
        %v2534 = vpack.c.b16 %v2522, %v2520
        %v2535 = vpack.c.b16 %v2525, %v2523
        %v2536 = vpack.c.b16 %v2526, %v2524
        %v2537 = vpack.c.b16 %v2529, %v2527
        %v2538 = vpack.c.b16 %v2530, %v2528
        %v2548 = vsel %vm1312, %v2506, 0
        %2550 = vmatprep.subr.bf16.mxu0 0
        %2551 = vmatpush1.bf16.msra.mxu0 0
        %2552 = vmatprep.subr.bf16.mxu0 0
        %2553 = vmatpush1.bf16.msra.mxu0 0
        %2554 = vmatprep.subr.bf16.mxu0 0
        %2555 = vmatpush1.bf16.msra.mxu0 0
        %2556 = vmatprep.subr.bf16.mxu0 0
        %2557 = vmatpush1.bf16.msra.mxu0 0
        %2558 = vmatprep.subr.bf16.mxu0 %v2538
        %2559 = vmatpush1.bf16.msra.mxu0 %v2537
        %2560 = vmatprep.subr.bf16.mxu0 %v2536
        %2561 = vmatpush1.bf16.msra.mxu0 %v2535
        %2562 = vmatprep.subr.bf16.mxu0 %v2534
        %2563 = vmatpush1.bf16.msra.mxu0 %v2533
        %2564 = vmatprep.subr.bf16.mxu0 %v2532
        %2565 = vmatpush1.bf16.msra.mxu0 %v2531
        %2566 = vmatprep.subr.bf16.mxu0 0
        %2567 = vmatpush2.bf16.msra.mxu0 0
        %2568 = vmatprep.subr.bf16.mxu0 0
        %2569 = vmatpush2.bf16.msra.mxu0 0
        %2570 = vmatprep.subr.bf16.mxu0 0
        %2571 = vmatpush2.bf16.msra.mxu0 0
        %2572 = vmatprep.subr.bf16.mxu0 0
        %2573 = vmatpush2.bf16.msra.mxu0 0
        %2574 = vmatprep.subr.bf16.mxu0 0
        %2575 = vmatpush2.bf16.msra.mxu0 0
        %2576 = vmatprep.subr.bf16.mxu0 0
        %2577 = vmatpush2.bf16.msra.mxu0 0
        %2578 = vmatprep.subr.bf16.mxu0 0
        %2579 = vmatpush2.bf16.msra.mxu0 0
        %2580 = vmatprep.subr.bf16.mxu0 0
        %2581 = vmatpush2.bf16.msra.mxu0 0
        %2582 = vmatprep.mubr.bf16.mxu0 0
        %2583 = vmatmul.mubr.bf16.gmra.mxu0 %v2548
        %v2584 = vpop.f32.mrf.mxu0
        %v2585 = vadd.f32 0.0, %v2584
        %v2586 = vpop.f32.mrf.mxu0
        %v2587 = vadd.f32 0.0, %v2586
        %v2588 = vpop.f32.mrf.mxu0
        %v2589 = vpop.f32.mrf.mxu0
        %2590 = vdwg.mxu0
        %v2593 = vcombine.low %v2585, %v2587
        %v2595 = vunpack.c.l.s4 1966171168
        %v2596 = vunpack.c.0.s8 %v2595
        %v2597 = vlaneseq
        %v2598 = vshrl.u32 %v2597, 7
        %v2599 = vsub.s32 %v2596, %v2598
        %v2600 = vrot.slane %v2593, %v2599
        %v2602 = vunpack.c.l.s4 1966171168
        %v2603 = vunpack.c.0.s8 %v2602
        %v2604 = vlaneseq
        %v2605 = vshrl.u32 %v2604, 7
        %v2606 = vsub.s32 %v2603, %v2605
        %v2607 = vrot.slane %v2600, %v2606
        %v2609 = vadd.f32 %v2497, %v2607
        %v2610 = vld [vmem:[%s3 + $0x300] sm:$0xff]
        %v2611 = vld [vmem:[%s3 + $0x308] sm:$0xff]
        %v2612 = vld [vmem:[%s3 + $0x310] sm:$0xff]
        %v2613 = vld [vmem:[%s3 + $0x318] sm:$0xff]
        %v2614 = vld [vmem:[%s3 + $0x320] sm:$0xff]
        %v2615 = vld [vmem:[%s3 + $0x328] sm:$0xff]
        %v2616 = vld [vmem:[%s3 + $0x330] sm:$0xff]
        %v2617 = vld [vmem:[%s3 + $0x338] sm:$0xff]
        %v2618 = vrot.slane %v1262, 6
        %v2627 = vunpack.c.l.b16 %v2610
        %v2628 = vunpack.c.h.b16 %v2610
        %v2629 = vunpack.c.l.b16 %v2611
        %v2630 = vunpack.c.h.b16 %v2611
        %v2631 = vunpack.c.l.b16 %v2612
        %v2632 = vunpack.c.h.b16 %v2612
        %v2633 = vunpack.c.l.b16 %v2613
        %v2634 = vunpack.c.h.b16 %v2613
        %v2635 = vunpack.c.l.b16 %v2614
        %v2636 = vunpack.c.h.b16 %v2614
        %v2637 = vunpack.c.l.b16 %v2615
        %v2638 = vunpack.c.h.b16 %v2615
        %v2639 = vunpack.c.l.b16 %v2616
        %v2640 = vunpack.c.h.b16 %v2616
        %v2641 = vunpack.c.l.b16 %v2617
        %v2642 = vunpack.c.h.b16 %v2617
        %v2643 = vpack.c.b16 %v2629, %v2627
        %v2644 = vpack.c.b16 %v2630, %v2628
        %v2645 = vpack.c.b16 %v2633, %v2631
        %v2646 = vpack.c.b16 %v2634, %v2632
        %v2647 = vpack.c.b16 %v2637, %v2635
        %v2648 = vpack.c.b16 %v2638, %v2636
        %v2649 = vpack.c.b16 %v2641, %v2639
        %v2650 = vpack.c.b16 %v2642, %v2640
        %v2660 = vsel %vm1312, %v2618, 0
        %2662 = vmatprep.subr.bf16.mxu0 0
        %2663 = vmatpush1.bf16.msra.mxu0 0
        %2664 = vmatprep.subr.bf16.mxu0 0
        %2665 = vmatpush1.bf16.msra.mxu0 0
        %2666 = vmatprep.subr.bf16.mxu0 0
        %2667 = vmatpush1.bf16.msra.mxu0 0
        %2668 = vmatprep.subr.bf16.mxu0 0
        %2669 = vmatpush1.bf16.msra.mxu0 0
        %2670 = vmatprep.subr.bf16.mxu0 %v2650
        %2671 = vmatpush1.bf16.msra.mxu0 %v2649
        %2672 = vmatprep.subr.bf16.mxu0 %v2648
        %2673 = vmatpush1.bf16.msra.mxu0 %v2647
        %2674 = vmatprep.subr.bf16.mxu0 %v2646
        %2675 = vmatpush1.bf16.msra.mxu0 %v2645
        %2676 = vmatprep.subr.bf16.mxu0 %v2644
        %2677 = vmatpush1.bf16.msra.mxu0 %v2643
        %2678 = vmatprep.subr.bf16.mxu0 0
        %2679 = vmatpush2.bf16.msra.mxu0 0
        %2680 = vmatprep.subr.bf16.mxu0 0
        %2681 = vmatpush2.bf16.msra.mxu0 0
        %2682 = vmatprep.subr.bf16.mxu0 0
        %2683 = vmatpush2.bf16.msra.mxu0 0
        %2684 = vmatprep.subr.bf16.mxu0 0
        %2685 = vmatpush2.bf16.msra.mxu0 0
        %2686 = vmatprep.subr.bf16.mxu0 0
        %2687 = vmatpush2.bf16.msra.mxu0 0
        %2688 = vmatprep.subr.bf16.mxu0 0
        %2689 = vmatpush2.bf16.msra.mxu0 0
        %2690 = vmatprep.subr.bf16.mxu0 0
        %2691 = vmatpush2.bf16.msra.mxu0 0
        %2692 = vmatprep.subr.bf16.mxu0 0
        %2693 = vmatpush2.bf16.msra.mxu0 0
        %2694 = vmatprep.mubr.bf16.mxu0 0
        %2695 = vmatmul.mubr.bf16.gmra.mxu0 %v2660
        %v2696 = vpop.f32.mrf.mxu0
        %v2697 = vadd.f32 0.0, %v2696
        %v2698 = vpop.f32.mrf.mxu0
        %v2699 = vadd.f32 0.0, %v2698
        %v2700 = vpop.f32.mrf.mxu0
        %v2701 = vpop.f32.mrf.mxu0
        %2702 = vdwg.mxu0
        %v2705 = vcombine.low %v2697, %v2699
        %v2707 = vunpack.c.l.s4 1966171168
        %v2708 = vunpack.c.0.s8 %v2707
        %v2709 = vlaneseq
        %v2710 = vshrl.u32 %v2709, 7
        %v2711 = vsub.s32 %v2708, %v2710
        %v2712 = vrot.slane %v2705, %v2711
        %v2714 = vunpack.c.l.s4 1966171168
        %v2715 = vunpack.c.0.s8 %v2714
        %v2716 = vlaneseq
        %v2717 = vshrl.u32 %v2716, 7
        %v2718 = vsub.s32 %v2715, %v2717
        %v2719 = vrot.slane %v2712, %v2718
        %v2721 = vadd.f32 %v2609, %v2719
        %v2722 = vld [vmem:[%s3 + $0x340] sm:$0xff]
        %v2723 = vld [vmem:[%s3 + $0x348] sm:$0xff]
        %v2724 = vld [vmem:[%s3 + $0x350] sm:$0xff]
        %v2725 = vld [vmem:[%s3 + $0x358] sm:$0xff]
        %v2726 = vld [vmem:[%s3 + $0x360] sm:$0xff]
        %v2727 = vld [vmem:[%s3 + $0x368] sm:$0xff]
        %v2728 = vld [vmem:[%s3 + $0x370] sm:$0xff]
        %v2729 = vld [vmem:[%s3 + $0x378] sm:$0xff]
        %v2730 = vrot.slane %v1384, 6
        %v2739 = vunpack.c.l.b16 %v2722
        %v2740 = vunpack.c.h.b16 %v2722
        %v2741 = vunpack.c.l.b16 %v2723
        %v2742 = vunpack.c.h.b16 %v2723
        %v2743 = vunpack.c.l.b16 %v2724
        %v2744 = vunpack.c.h.b16 %v2724
        %v2745 = vunpack.c.l.b16 %v2725
        %v2746 = vunpack.c.h.b16 %v2725
        %v2747 = vunpack.c.l.b16 %v2726
        %v2748 = vunpack.c.h.b16 %v2726
        %v2749 = vunpack.c.l.b16 %v2727
        %v2750 = vunpack.c.h.b16 %v2727
        %v2751 = vunpack.c.l.b16 %v2728
        %v2752 = vunpack.c.h.b16 %v2728
        %v2753 = vunpack.c.l.b16 %v2729
        %v2754 = vunpack.c.h.b16 %v2729
        %v2755 = vpack.c.b16 %v2741, %v2739
        %v2756 = vpack.c.b16 %v2742, %v2740
        %v2757 = vpack.c.b16 %v2745, %v2743
        %v2758 = vpack.c.b16 %v2746, %v2744
        %v2759 = vpack.c.b16 %v2749, %v2747
        %v2760 = vpack.c.b16 %v2750, %v2748
        %v2761 = vpack.c.b16 %v2753, %v2751
        %v2762 = vpack.c.b16 %v2754, %v2752
        %v2772 = vsel %vm1312, %v2730, 0
        %2774 = vmatprep.subr.bf16.mxu0 0
        %2775 = vmatpush1.bf16.msra.mxu0 0
        %2776 = vmatprep.subr.bf16.mxu0 0
        %2777 = vmatpush1.bf16.msra.mxu0 0
        %2778 = vmatprep.subr.bf16.mxu0 0
        %2779 = vmatpush1.bf16.msra.mxu0 0
        %2780 = vmatprep.subr.bf16.mxu0 0
        %2781 = vmatpush1.bf16.msra.mxu0 0
        %2782 = vmatprep.subr.bf16.mxu0 %v2762
        %2783 = vmatpush1.bf16.msra.mxu0 %v2761
        %2784 = vmatprep.subr.bf16.mxu0 %v2760
        %2785 = vmatpush1.bf16.msra.mxu0 %v2759
        %2786 = vmatprep.subr.bf16.mxu0 %v2758
        %2787 = vmatpush1.bf16.msra.mxu0 %v2757
        %2788 = vmatprep.subr.bf16.mxu0 %v2756
        %2789 = vmatpush1.bf16.msra.mxu0 %v2755
        %2790 = vmatprep.subr.bf16.mxu0 0
        %2791 = vmatpush2.bf16.msra.mxu0 0
        %2792 = vmatprep.subr.bf16.mxu0 0
        %2793 = vmatpush2.bf16.msra.mxu0 0
        %2794 = vmatprep.subr.bf16.mxu0 0
        %2795 = vmatpush2.bf16.msra.mxu0 0
        %2796 = vmatprep.subr.bf16.mxu0 0
        %2797 = vmatpush2.bf16.msra.mxu0 0
        %2798 = vmatprep.subr.bf16.mxu0 0
        %2799 = vmatpush2.bf16.msra.mxu0 0
        %2800 = vmatprep.subr.bf16.mxu0 0
        %2801 = vmatpush2.bf16.msra.mxu0 0
        %2802 = vmatprep.subr.bf16.mxu0 0
        %2803 = vmatpush2.bf16.msra.mxu0 0
        %2804 = vmatprep.subr.bf16.mxu0 0
        %2805 = vmatpush2.bf16.msra.mxu0 0
        %2806 = vmatprep.mubr.bf16.mxu0 0
        %2807 = vmatmul.mubr.bf16.gmra.mxu0 %v2772
        %v2808 = vpop.f32.mrf.mxu0
        %v2809 = vadd.f32 0.0, %v2808
        %v2810 = vpop.f32.mrf.mxu0
        %v2811 = vadd.f32 0.0, %v2810
        %v2812 = vpop.f32.mrf.mxu0
        %v2813 = vpop.f32.mrf.mxu0
        %2814 = vdwg.mxu0
        %v2817 = vcombine.low %v2809, %v2811
        %v2819 = vunpack.c.l.s4 1966171168
        %v2820 = vunpack.c.0.s8 %v2819
        %v2821 = vlaneseq
        %v2822 = vshrl.u32 %v2821, 7
        %v2823 = vsub.s32 %v2820, %v2822
        %v2824 = vrot.slane %v2817, %v2823
        %v2826 = vunpack.c.l.s4 1966171168
        %v2827 = vunpack.c.0.s8 %v2826
        %v2828 = vlaneseq
        %v2829 = vshrl.u32 %v2828, 7
        %v2830 = vsub.s32 %v2827, %v2829
        %v2831 = vrot.slane %v2824, %v2830
        %v2833 = vadd.f32 %v2721, %v2831
        %v2834 = vld [vmem:[%s3 + $0x380] sm:$0xff]
        %v2835 = vld [vmem:[%s3 + $0x388] sm:$0xff]
        %v2836 = vld [vmem:[%s3 + $0x390] sm:$0xff]
        %v2837 = vld [vmem:[%s3 + $0x398] sm:$0xff]
        %v2838 = vld [vmem:[%s3 + $0x3a0] sm:$0xff]
        %v2839 = vld [vmem:[%s3 + $0x3a8] sm:$0xff]
        %v2840 = vld [vmem:[%s3 + $0x3b0] sm:$0xff]
        %v2841 = vld [vmem:[%s3 + $0x3b8] sm:$0xff]
        %v2842 = vrot.slane %v1262, 7
        %v2851 = vunpack.c.l.b16 %v2834
        %v2852 = vunpack.c.h.b16 %v2834
        %v2853 = vunpack.c.l.b16 %v2835
        %v2854 = vunpack.c.h.b16 %v2835
        %v2855 = vunpack.c.l.b16 %v2836
        %v2856 = vunpack.c.h.b16 %v2836
        %v2857 = vunpack.c.l.b16 %v2837
        %v2858 = vunpack.c.h.b16 %v2837
        %v2859 = vunpack.c.l.b16 %v2838
        %v2860 = vunpack.c.h.b16 %v2838
        %v2861 = vunpack.c.l.b16 %v2839
        %v2862 = vunpack.c.h.b16 %v2839
        %v2863 = vunpack.c.l.b16 %v2840
        %v2864 = vunpack.c.h.b16 %v2840
        %v2865 = vunpack.c.l.b16 %v2841
        %v2866 = vunpack.c.h.b16 %v2841
        %v2867 = vpack.c.b16 %v2853, %v2851
        %v2868 = vpack.c.b16 %v2854, %v2852
        %v2869 = vpack.c.b16 %v2857, %v2855
        %v2870 = vpack.c.b16 %v2858, %v2856
        %v2871 = vpack.c.b16 %v2861, %v2859
        %v2872 = vpack.c.b16 %v2862, %v2860
        %v2873 = vpack.c.b16 %v2865, %v2863
        %v2874 = vpack.c.b16 %v2866, %v2864
        %v2884 = vsel %vm1312, %v2842, 0
        %2886 = vmatprep.subr.bf16.mxu0 0
        %2887 = vmatpush1.bf16.msra.mxu0 0
        %2888 = vmatprep.subr.bf16.mxu0 0
        %2889 = vmatpush1.bf16.msra.mxu0 0
        %2890 = vmatprep.subr.bf16.mxu0 0
        %2891 = vmatpush1.bf16.msra.mxu0 0
        %2892 = vmatprep.subr.bf16.mxu0 0
        %2893 = vmatpush1.bf16.msra.mxu0 0
        %2894 = vmatprep.subr.bf16.mxu0 %v2874
        %2895 = vmatpush1.bf16.msra.mxu0 %v2873
        %2896 = vmatprep.subr.bf16.mxu0 %v2872
        %2897 = vmatpush1.bf16.msra.mxu0 %v2871
        %2898 = vmatprep.subr.bf16.mxu0 %v2870
        %2899 = vmatpush1.bf16.msra.mxu0 %v2869
        %2900 = vmatprep.subr.bf16.mxu0 %v2868
        %2901 = vmatpush1.bf16.msra.mxu0 %v2867
        %2902 = vmatprep.subr.bf16.mxu0 0
        %2903 = vmatpush2.bf16.msra.mxu0 0
        %2904 = vmatprep.subr.bf16.mxu0 0
        %2905 = vmatpush2.bf16.msra.mxu0 0
        %2906 = vmatprep.subr.bf16.mxu0 0
        %2907 = vmatpush2.bf16.msra.mxu0 0
        %2908 = vmatprep.subr.bf16.mxu0 0
        %2909 = vmatpush2.bf16.msra.mxu0 0
        %2910 = vmatprep.subr.bf16.mxu0 0
        %2911 = vmatpush2.bf16.msra.mxu0 0
        %2912 = vmatprep.subr.bf16.mxu0 0
        %2913 = vmatpush2.bf16.msra.mxu0 0
        %2914 = vmatprep.subr.bf16.mxu0 0
        %2915 = vmatpush2.bf16.msra.mxu0 0
        %2916 = vmatprep.subr.bf16.mxu0 0
        %2917 = vmatpush2.bf16.msra.mxu0 0
        %2918 = vmatprep.mubr.bf16.mxu0 0
        %2919 = vmatmul.mubr.bf16.gmra.mxu0 %v2884
        %v2920 = vpop.f32.mrf.mxu0
        %v2921 = vadd.f32 0.0, %v2920
        %v2922 = vpop.f32.mrf.mxu0
        %v2923 = vadd.f32 0.0, %v2922
        %v2924 = vpop.f32.mrf.mxu0
        %v2925 = vpop.f32.mrf.mxu0
        %2926 = vdwg.mxu0
        %v2929 = vcombine.low %v2921, %v2923
        %v2931 = vunpack.c.l.s4 1966171168
        %v2932 = vunpack.c.0.s8 %v2931
        %v2933 = vlaneseq
        %v2934 = vshrl.u32 %v2933, 7
        %v2935 = vsub.s32 %v2932, %v2934
        %v2936 = vrot.slane %v2929, %v2935
        %v2938 = vunpack.c.l.s4 1966171168
        %v2939 = vunpack.c.0.s8 %v2938
        %v2940 = vlaneseq
        %v2941 = vshrl.u32 %v2940, 7
        %v2942 = vsub.s32 %v2939, %v2941
        %v2943 = vrot.slane %v2936, %v2942
        %v2945 = vadd.f32 %v2833, %v2943
        %v2946 = vld [vmem:[%s3 + $0x3c0] sm:$0xff]
        %v2947 = vld [vmem:[%s3 + $0x3c8] sm:$0xff]
        %v2948 = vld [vmem:[%s3 + $0x3d0] sm:$0xff]
        %v2949 = vld [vmem:[%s3 + $0x3d8] sm:$0xff]
        %v2950 = vld [vmem:[%s3 + $0x3e0] sm:$0xff]
        %v2951 = vld [vmem:[%s3 + $0x3e8] sm:$0xff]
        %v2952 = vld [vmem:[%s3 + $0x3f0] sm:$0xff]
        %v2953 = vld [vmem:[%s3 + $0x3f8] sm:$0xff]
        %v2954 = vrot.slane %v1384, 7
        %v2963 = vunpack.c.l.b16 %v2946
        %v2964 = vunpack.c.h.b16 %v2946
        %v2965 = vunpack.c.l.b16 %v2947
        %v2966 = vunpack.c.h.b16 %v2947
        %v2967 = vunpack.c.l.b16 %v2948
        %v2968 = vunpack.c.h.b16 %v2948
        %v2969 = vunpack.c.l.b16 %v2949
        %v2970 = vunpack.c.h.b16 %v2949
        %v2971 = vunpack.c.l.b16 %v2950
        %v2972 = vunpack.c.h.b16 %v2950
        %v2973 = vunpack.c.l.b16 %v2951
        %v2974 = vunpack.c.h.b16 %v2951
        %v2975 = vunpack.c.l.b16 %v2952
        %v2976 = vunpack.c.h.b16 %v2952
        %v2977 = vunpack.c.l.b16 %v2953
        %v2978 = vunpack.c.h.b16 %v2953
        %v2979 = vpack.c.b16 %v2965, %v2963
        %v2980 = vpack.c.b16 %v2966, %v2964
        %v2981 = vpack.c.b16 %v2969, %v2967
        %v2982 = vpack.c.b16 %v2970, %v2968
        %v2983 = vpack.c.b16 %v2973, %v2971
        %v2984 = vpack.c.b16 %v2974, %v2972
        %v2985 = vpack.c.b16 %v2977, %v2975
        %v2986 = vpack.c.b16 %v2978, %v2976
        %v2996 = vsel %vm1312, %v2954, 0
        %2998 = vmatprep.subr.bf16.mxu0 0
        %2999 = vmatpush1.bf16.msra.mxu0 0
        %3000 = vmatprep.subr.bf16.mxu0 0
        %3001 = vmatpush1.bf16.msra.mxu0 0
        %3002 = vmatprep.subr.bf16.mxu0 0
        %3003 = vmatpush1.bf16.msra.mxu0 0
        %3004 = vmatprep.subr.bf16.mxu0 0
        %3005 = vmatpush1.bf16.msra.mxu0 0
        %3006 = vmatprep.subr.bf16.mxu0 %v2986
        %3007 = vmatpush1.bf16.msra.mxu0 %v2985
        %3008 = vmatprep.subr.bf16.mxu0 %v2984
        %3009 = vmatpush1.bf16.msra.mxu0 %v2983
        %3010 = vmatprep.subr.bf16.mxu0 %v2982
        %3011 = vmatpush1.bf16.msra.mxu0 %v2981
        %3012 = vmatprep.subr.bf16.mxu0 %v2980
        %3013 = vmatpush1.bf16.msra.mxu0 %v2979
        %3014 = vmatprep.subr.bf16.mxu0 0
        %3015 = vmatpush2.bf16.msra.mxu0 0
        %3016 = vmatprep.subr.bf16.mxu0 0
        %3017 = vmatpush2.bf16.msra.mxu0 0
        %3018 = vmatprep.subr.bf16.mxu0 0
        %3019 = vmatpush2.bf16.msra.mxu0 0
        %3020 = vmatprep.subr.bf16.mxu0 0
        %3021 = vmatpush2.bf16.msra.mxu0 0
        %3022 = vmatprep.subr.bf16.mxu0 0
        %3023 = vmatpush2.bf16.msra.mxu0 0
        %3024 = vmatprep.subr.bf16.mxu0 0
        %3025 = vmatpush2.bf16.msra.mxu0 0
        %3026 = vmatprep.subr.bf16.mxu0 0
        %3027 = vmatpush2.bf16.msra.mxu0 0
        %3028 = vmatprep.subr.bf16.mxu0 0
        %3029 = vmatpush2.bf16.msra.mxu0 0
        %3030 = vmatprep.mubr.bf16.mxu0 0
        %3031 = vmatmul.mubr.bf16.gmra.mxu0 %v2996
        %v3032 = vpop.f32.mrf.mxu0
        %v3033 = vadd.f32 0.0, %v3032
        %v3034 = vpop.f32.mrf.mxu0
        %v3035 = vadd.f32 0.0, %v3034
        %v3036 = vpop.f32.mrf.mxu0
        %v3037 = vpop.f32.mrf.mxu0
        %3038 = vdwg.mxu0
        %v3041 = vcombine.low %v3033, %v3035
        %v3043 = vunpack.c.l.s4 1966171168
        %v3044 = vunpack.c.0.s8 %v3043
        %v3045 = vlaneseq
        %v3046 = vshrl.u32 %v3045, 7
        %v3047 = vsub.s32 %v3044, %v3046
        %v3048 = vrot.slane %v3041, %v3047
        %v3050 = vunpack.c.l.s4 1966171168
        %v3051 = vunpack.c.0.s8 %v3050
        %v3052 = vlaneseq
        %v3053 = vshrl.u32 %v3052, 7
        %v3054 = vsub.s32 %v3051, %v3053
        %v3055 = vrot.slane %v3048, %v3054
        %v3057 = vadd.f32 %v2945, %v3055
        %vm3058 = vcmp.ge.f32.partialorder %v3057, 0.0
        %s3059 = sld [smem:[#allocation2 + $0x2]]
        %v3060 = vstv %s3059
        %v3061 = vmul.f32 %v3060, %v3057
        %v3062 = vsel %vm3058, %v3057, %v3061
        %v3064 = vlaneseq
        %v3065 = vshrl.u32 %v3064, 7
        %v3066 = vsub.s32 0, %v3065
        %v3067 = vrot.slane %v3062, %v3066
        %v3068 = vlaneseq
        %v3069 = vshrl.u32 %v3068, 7
        %v3070 = vsub.s32 1, %v3069
        %v3071 = vrot.slane %v3062, %v3070
        %v3074 = vpack.c.bf16 %v3067, %v3067
        %v3075 = vpack.c.bf16 %v3071, %v3071
        %v3076 = vld [vmem:[%s5] sm:$0xff]
        %v3077 = vld [vmem:[%s5 + $0x8] sm:$0xff]
        %v3078 = vld [vmem:[%s5 + $0x10] sm:$0xff]
        %v3079 = vld [vmem:[%s5 + $0x18] sm:$0xff]
        %v3080 = vld [vmem:[%s5 + $0x20] sm:$0xff]
        %v3081 = vld [vmem:[%s5 + $0x28] sm:$0xff]
        %v3082 = vld [vmem:[%s5 + $0x30] sm:$0xff]
        %v3083 = vld [vmem:[%s5 + $0x38] sm:$0xff]
        %v3084 = vld [vmem:[%s5 + $0x40] sm:$0xff]
        %v3085 = vld [vmem:[%s5 + $0x48] sm:$0xff]
        %v3086 = vld [vmem:[%s5 + $0x50] sm:$0xff]
        %v3087 = vld [vmem:[%s5 + $0x58] sm:$0xff]
        %v3088 = vld [vmem:[%s5 + $0x60] sm:$0xff]
        %v3089 = vld [vmem:[%s5 + $0x68] sm:$0xff]
        %v3090 = vld [vmem:[%s5 + $0x70] sm:$0xff]
        %v3091 = vld [vmem:[%s5 + $0x78] sm:$0xff]
        %v3092 = vld [vmem:[%s5 + $0x80] sm:$0xff]
        %v3093 = vld [vmem:[%s5 + $0x88] sm:$0xff]
        %v3094 = vld [vmem:[%s5 + $0x90] sm:$0xff]
        %v3095 = vld [vmem:[%s5 + $0x98] sm:$0xff]
        %v3096 = vld [vmem:[%s5 + $0xa0] sm:$0xff]
        %v3097 = vld [vmem:[%s5 + $0xa8] sm:$0xff]
        %v3098 = vld [vmem:[%s5 + $0xb0] sm:$0xff]
        %v3099 = vld [vmem:[%s5 + $0xb8] sm:$0xff]
        %v3100 = vld [vmem:[%s5 + $0xc0] sm:$0xff]
        %v3101 = vld [vmem:[%s5 + $0xc8] sm:$0xff]
        %v3102 = vld [vmem:[%s5 + $0xd0] sm:$0xff]
        %v3103 = vld [vmem:[%s5 + $0xd8] sm:$0xff]
        %v3104 = vld [vmem:[%s5 + $0xe0] sm:$0xff]
        %v3105 = vld [vmem:[%s5 + $0xe8] sm:$0xff]
        %v3106 = vld [vmem:[%s5 + $0xf0] sm:$0xff]
        %v3107 = vld [vmem:[%s5 + $0xf8] sm:$0xff]
        %v3108 = vld [vmem:[%s6] sm:$0x3]
        %v3141 = vunpack.c.l.b16 %v3076
        %v3142 = vunpack.c.h.b16 %v3076
        %v3143 = vunpack.c.l.b16 %v3077
        %v3144 = vunpack.c.h.b16 %v3077
        %v3145 = vunpack.c.l.b16 %v3078
        %v3146 = vunpack.c.h.b16 %v3078
        %v3147 = vunpack.c.l.b16 %v3079
        %v3148 = vunpack.c.h.b16 %v3079
        %v3149 = vunpack.c.l.b16 %v3080
        %v3150 = vunpack.c.h.b16 %v3080
        %v3151 = vunpack.c.l.b16 %v3081
        %v3152 = vunpack.c.h.b16 %v3081
        %v3153 = vunpack.c.l.b16 %v3082
        %v3154 = vunpack.c.h.b16 %v3082
        %v3155 = vunpack.c.l.b16 %v3083
        %v3156 = vunpack.c.h.b16 %v3083
        %v3157 = vunpack.c.l.b16 %v3084
        %v3158 = vunpack.c.h.b16 %v3084
        %v3159 = vunpack.c.l.b16 %v3085
        %v3160 = vunpack.c.h.b16 %v3085
        %v3161 = vunpack.c.l.b16 %v3086
        %v3162 = vunpack.c.h.b16 %v3086
        %v3163 = vunpack.c.l.b16 %v3087
        %v3164 = vunpack.c.h.b16 %v3087
        %v3165 = vunpack.c.l.b16 %v3088
        %v3166 = vunpack.c.h.b16 %v3088
        %v3167 = vunpack.c.l.b16 %v3089
        %v3168 = vunpack.c.h.b16 %v3089
        %v3169 = vunpack.c.l.b16 %v3090
        %v3170 = vunpack.c.h.b16 %v3090
        %v3171 = vunpack.c.l.b16 %v3091
        %v3172 = vunpack.c.h.b16 %v3091
        %v3173 = vunpack.c.l.b16 %v3092
        %v3174 = vunpack.c.h.b16 %v3092
        %v3175 = vunpack.c.l.b16 %v3093
        %v3176 = vunpack.c.h.b16 %v3093
        %v3177 = vunpack.c.l.b16 %v3094
        %v3178 = vunpack.c.h.b16 %v3094
        %v3179 = vunpack.c.l.b16 %v3095
        %v3180 = vunpack.c.h.b16 %v3095
        %v3181 = vunpack.c.l.b16 %v3096
        %v3182 = vunpack.c.h.b16 %v3096
        %v3183 = vunpack.c.l.b16 %v3097
        %v3184 = vunpack.c.h.b16 %v3097
        %v3185 = vunpack.c.l.b16 %v3098
        %v3186 = vunpack.c.h.b16 %v3098
        %v3187 = vunpack.c.l.b16 %v3099
        %v3188 = vunpack.c.h.b16 %v3099
        %v3189 = vunpack.c.l.b16 %v3100
        %v3190 = vunpack.c.h.b16 %v3100
        %v3191 = vunpack.c.l.b16 %v3101
        %v3192 = vunpack.c.h.b16 %v3101
        %v3193 = vunpack.c.l.b16 %v3102
        %v3194 = vunpack.c.h.b16 %v3102
        %v3195 = vunpack.c.l.b16 %v3103
        %v3196 = vunpack.c.h.b16 %v3103
        %v3197 = vunpack.c.l.b16 %v3104
        %v3198 = vunpack.c.h.b16 %v3104
        %v3199 = vunpack.c.l.b16 %v3105
        %v3200 = vunpack.c.h.b16 %v3105
        %v3201 = vunpack.c.l.b16 %v3106
        %v3202 = vunpack.c.h.b16 %v3106
        %v3203 = vunpack.c.l.b16 %v3107
        %v3204 = vunpack.c.h.b16 %v3107
        %v3205 = vpack.c.b16 %v3143, %v3141
        %v3206 = vpack.c.b16 %v3144, %v3142
        %v3207 = vpack.c.b16 %v3147, %v3145
        %v3208 = vpack.c.b16 %v3148, %v3146
        %v3209 = vpack.c.b16 %v3151, %v3149
        %v3210 = vpack.c.b16 %v3152, %v3150
        %v3211 = vpack.c.b16 %v3155, %v3153
        %v3212 = vpack.c.b16 %v3156, %v3154
        %v3213 = vpack.c.b16 %v3159, %v3157
        %v3214 = vpack.c.b16 %v3160, %v3158
        %v3215 = vpack.c.b16 %v3163, %v3161
        %v3216 = vpack.c.b16 %v3164, %v3162
        %v3217 = vpack.c.b16 %v3167, %v3165
        %v3218 = vpack.c.b16 %v3168, %v3166
        %v3219 = vpack.c.b16 %v3171, %v3169
        %v3220 = vpack.c.b16 %v3172, %v3170
        %v3221 = vpack.c.b16 %v3175, %v3173
        %v3222 = vpack.c.b16 %v3176, %v3174
        %v3223 = vpack.c.b16 %v3179, %v3177
        %v3224 = vpack.c.b16 %v3180, %v3178
        %v3225 = vpack.c.b16 %v3183, %v3181
        %v3226 = vpack.c.b16 %v3184, %v3182
        %v3227 = vpack.c.b16 %v3187, %v3185
        %v3228 = vpack.c.b16 %v3188, %v3186
        %v3229 = vpack.c.b16 %v3191, %v3189
        %v3230 = vpack.c.b16 %v3192, %v3190
        %v3231 = vpack.c.b16 %v3195, %v3193
        %v3232 = vpack.c.b16 %v3196, %v3194
        %v3233 = vpack.c.b16 %v3199, %v3197
        %v3234 = vpack.c.b16 %v3200, %v3198
        %v3235 = vpack.c.b16 %v3203, %v3201
        %v3236 = vpack.c.b16 %v3204, %v3202
        %v3270 = vlaneseq
        %v3271 = vshrl.u32 %v3270, 7
        %v3272 = vsub.s32 0, %v3271
        %v3273 = vrot.slane %v3108, %v3272
        %v3274 = vlaneseq
        %v3275 = vshrl.u32 %v3274, 7
        %v3276 = vsub.s32 1, %v3275
        %v3277 = vrot.slane %v3108, %v3276
        %3280 = vmatprep.subr.bf16.mxu0 %v3220
        %3281 = vmatpush1.bf16.msra.mxu0 %v3219
        %3282 = vmatprep.subr.bf16.mxu0 %v3218
        %3283 = vmatpush1.bf16.msra.mxu0 %v3217
        %3284 = vmatprep.subr.bf16.mxu0 %v3216
        %3285 = vmatpush1.bf16.msra.mxu0 %v3215
        %3286 = vmatprep.subr.bf16.mxu0 %v3214
        %3287 = vmatpush1.bf16.msra.mxu0 %v3213
        %3288 = vmatprep.subr.bf16.mxu0 %v3212
        %3289 = vmatpush1.bf16.msra.mxu0 %v3211
        %3290 = vmatprep.subr.bf16.mxu0 %v3210
        %3291 = vmatpush1.bf16.msra.mxu0 %v3209
        %3292 = vmatprep.subr.bf16.mxu0 %v3208
        %3293 = vmatpush1.bf16.msra.mxu0 %v3207
        %3294 = vmatprep.subr.bf16.mxu0 %v3206
        %3295 = vmatpush1.bf16.msra.mxu0 %v3205
        %3296 = vmatprep.subr.bf16.mxu0 %v3236
        %3297 = vmatpush2.bf16.msra.mxu0 %v3235
        %3298 = vmatprep.subr.bf16.mxu0 %v3234
        %3299 = vmatpush2.bf16.msra.mxu0 %v3233
        %3300 = vmatprep.subr.bf16.mxu0 %v3232
        %3301 = vmatpush2.bf16.msra.mxu0 %v3231
        %3302 = vmatprep.subr.bf16.mxu0 %v3230
        %3303 = vmatpush2.bf16.msra.mxu0 %v3229
        %3304 = vmatprep.subr.bf16.mxu0 %v3228
        %3305 = vmatpush2.bf16.msra.mxu0 %v3227
        %3306 = vmatprep.subr.bf16.mxu0 %v3226
        %3307 = vmatpush2.bf16.msra.mxu0 %v3225
        %3308 = vmatprep.subr.bf16.mxu0 %v3224
        %3309 = vmatpush2.bf16.msra.mxu0 %v3223
        %3310 = vmatprep.subr.bf16.mxu0 %v3222
        %3311 = vmatpush2.bf16.msra.mxu0 %v3221
        %3312 = vmatprep.mubr.bf16.mxu0 %v3075
        %3313 = vmatmul.mubr.bf16.gmra.mxu0 %v3074
        %v3314 = vpop.f32.mrf.mxu0
        %v3315 = vadd.f32 %v3273, %v3314
        %v3316 = vpop.f32.mrf.mxu0
        %v3317 = vadd.f32 %v3277, %v3316
        %v3318 = vpop.f32.mrf.mxu0
        %v3319 = vpop.f32.mrf.mxu0
        %3320 = vdwg.mxu0
        %vm3321 = vcmp.ge.f32.partialorder %v3315, 0.0
        %vm3322 = vcmp.ge.f32.partialorder %v3317, 0.0
        %s3323 = sld [smem:[#allocation2 + $0x3]]
        %v3324 = vstv %s3323
        %v3325 = vmul.f32 %v3324, %v3315
        %v3326 = vmul.f32 %v3324, %v3317
        %v3327 = vsel %vm3321, %v3315, %v3325
        %v3328 = vsel %vm3322, %v3317, %v3326
        %v3329 = vpack.c.bf16 %v3327, %v3327
        %v3330 = vpack.c.bf16 %v3328, %v3328
        %v3331 = vld [vmem:[%s7] sm:$0xf]
        %v3332 = vld [vmem:[%s7 + $0x4] sm:$0xf]
        %v3333 = vld [vmem:[%s7 + $0x8] sm:$0xf]
        %v3334 = vld [vmem:[%s7 + $0xc] sm:$0xf]
        %v3335 = vld [vmem:[%s7 + $0x10] sm:$0xf]
        %v3336 = vld [vmem:[%s7 + $0x14] sm:$0xf]
        %v3337 = vld [vmem:[%s7 + $0x18] sm:$0xf]
        %v3338 = vld [vmem:[%s7 + $0x1c] sm:$0xf]
        %v3339 = vld [vmem:[%s7 + $0x20] sm:$0xf]
        %v3340 = vld [vmem:[%s7 + $0x24] sm:$0xf]
        %v3341 = vld [vmem:[%s7 + $0x28] sm:$0xf]
        %v3342 = vld [vmem:[%s7 + $0x2c] sm:$0xf]
        %v3343 = vld [vmem:[%s7 + $0x30] sm:$0xf]
        %v3344 = vld [vmem:[%s7 + $0x34] sm:$0xf]
        %v3345 = vld [vmem:[%s7 + $0x38] sm:$0xf]
        %v3346 = vld [vmem:[%s7 + $0x3c] sm:$0xf]
        %v3347 = vld [vmem:[%s7 + $0x40] sm:$0xf]
        %v3348 = vld [vmem:[%s7 + $0x44] sm:$0xf]
        %v3349 = vld [vmem:[%s7 + $0x48] sm:$0xf]
        %v3350 = vld [vmem:[%s7 + $0x4c] sm:$0xf]
        %v3351 = vld [vmem:[%s7 + $0x50] sm:$0xf]
        %v3352 = vld [vmem:[%s7 + $0x54] sm:$0xf]
        %v3353 = vld [vmem:[%s7 + $0x58] sm:$0xf]
        %v3354 = vld [vmem:[%s7 + $0x5c] sm:$0xf]
        %v3355 = vld [vmem:[%s7 + $0x60] sm:$0xf]
        %v3356 = vld [vmem:[%s7 + $0x64] sm:$0xf]
        %v3357 = vld [vmem:[%s7 + $0x68] sm:$0xf]
        %v3358 = vld [vmem:[%s7 + $0x6c] sm:$0xf]
        %v3359 = vld [vmem:[%s7 + $0x70] sm:$0xf]
        %v3360 = vld [vmem:[%s7 + $0x74] sm:$0xf]
        %v3361 = vld [vmem:[%s7 + $0x78] sm:$0xf]
        %v3362 = vld [vmem:[%s7 + $0x7c] sm:$0xf]
        %v3363 = vld [vmem:[%s8] sm:$0x1]
        %v3396 = vunpack.c.l.b16 %v3331
        %v3397 = vunpack.c.l.b16 %v3332
        %v3398 = vunpack.c.l.b16 %v3333
        %v3399 = vunpack.c.l.b16 %v3334
        %v3400 = vunpack.c.l.b16 %v3335
        %v3401 = vunpack.c.l.b16 %v3336
        %v3402 = vunpack.c.l.b16 %v3337
        %v3403 = vunpack.c.l.b16 %v3338
        %v3404 = vunpack.c.l.b16 %v3339
        %v3405 = vunpack.c.l.b16 %v3340
        %v3406 = vunpack.c.l.b16 %v3341
        %v3407 = vunpack.c.l.b16 %v3342
        %v3408 = vunpack.c.l.b16 %v3343
        %v3409 = vunpack.c.l.b16 %v3344
        %v3410 = vunpack.c.l.b16 %v3345
        %v3411 = vunpack.c.l.b16 %v3346
        %v3412 = vunpack.c.l.b16 %v3347
        %v3413 = vunpack.c.l.b16 %v3348
        %v3414 = vunpack.c.l.b16 %v3349
        %v3415 = vunpack.c.l.b16 %v3350
        %v3416 = vunpack.c.l.b16 %v3351
        %v3417 = vunpack.c.l.b16 %v3352
        %v3418 = vunpack.c.l.b16 %v3353
        %v3419 = vunpack.c.l.b16 %v3354
        %v3420 = vunpack.c.l.b16 %v3355
        %v3421 = vunpack.c.l.b16 %v3356
        %v3422 = vunpack.c.l.b16 %v3357
        %v3423 = vunpack.c.l.b16 %v3358
        %v3424 = vunpack.c.l.b16 %v3359
        %v3425 = vunpack.c.l.b16 %v3360
        %v3426 = vunpack.c.l.b16 %v3361
        %v3427 = vunpack.c.l.b16 %v3362
        %v3428 = vpack.c.b16 %v3397, %v3396
        %v3429 = vpack.c.b16 %v3399, %v3398
        %v3430 = vpack.c.b16 %v3401, %v3400
        %v3431 = vpack.c.b16 %v3403, %v3402
        %v3432 = vpack.c.b16 %v3405, %v3404
        %v3433 = vpack.c.b16 %v3407, %v3406
        %v3434 = vpack.c.b16 %v3409, %v3408
        %v3435 = vpack.c.b16 %v3411, %v3410
        %v3436 = vpack.c.b16 %v3413, %v3412
        %v3437 = vpack.c.b16 %v3415, %v3414
        %v3438 = vpack.c.b16 %v3417, %v3416
        %v3439 = vpack.c.b16 %v3419, %v3418
        %v3440 = vpack.c.b16 %v3421, %v3420
        %v3441 = vpack.c.b16 %v3423, %v3422
        %v3442 = vpack.c.b16 %v3425, %v3424
        %v3443 = vpack.c.b16 %v3427, %v3426
        %3460 = vmatprep.subr.bf16.mxu0 0
        %3461 = vmatpush1.bf16.msra.mxu0 %v3435
        %3462 = vmatprep.subr.bf16.mxu0 0
        %3463 = vmatpush1.bf16.msra.mxu0 %v3434
        %3464 = vmatprep.subr.bf16.mxu0 0
        %3465 = vmatpush1.bf16.msra.mxu0 %v3433
        %3466 = vmatprep.subr.bf16.mxu0 0
        %3467 = vmatpush1.bf16.msra.mxu0 %v3432
        %3468 = vmatprep.subr.bf16.mxu0 0
        %3469 = vmatpush1.bf16.msra.mxu0 %v3431
        %3470 = vmatprep.subr.bf16.mxu0 0
        %3471 = vmatpush1.bf16.msra.mxu0 %v3430
        %3472 = vmatprep.subr.bf16.mxu0 0
        %3473 = vmatpush1.bf16.msra.mxu0 %v3429
        %3474 = vmatprep.subr.bf16.mxu0 0
        %3475 = vmatpush1.bf16.msra.mxu0 %v3428
        %3476 = vmatprep.subr.bf16.mxu0 0
        %3477 = vmatpush2.bf16.msra.mxu0 %v3443
        %3478 = vmatprep.subr.bf16.mxu0 0
        %3479 = vmatpush2.bf16.msra.mxu0 %v3442
        %3480 = vmatprep.subr.bf16.mxu0 0
        %3481 = vmatpush2.bf16.msra.mxu0 %v3441
        %3482 = vmatprep.subr.bf16.mxu0 0
        %3483 = vmatpush2.bf16.msra.mxu0 %v3440
        %3484 = vmatprep.subr.bf16.mxu0 0
        %3485 = vmatpush2.bf16.msra.mxu0 %v3439
        %3486 = vmatprep.subr.bf16.mxu0 0
        %3487 = vmatpush2.bf16.msra.mxu0 %v3438
        %3488 = vmatprep.subr.bf16.mxu0 0
        %3489 = vmatpush2.bf16.msra.mxu0 %v3437
        %3490 = vmatprep.subr.bf16.mxu0 0
        %3491 = vmatpush2.bf16.msra.mxu0 %v3436
        %3492 = vmatprep.mubr.bf16.mxu0 %v3330
        %3493 = vmatmul.mubr.bf16.gmra.mxu0 %v3329
        %v3494 = vpop.f32.mrf.mxu0
        %v3495 = vadd.f32 %v3363, %v3494
        %v3496 = vpop.f32.mrf.mxu0
        %v3497 = vpop.f32.mrf.mxu0
        %v3498 = vpop.f32.mrf.mxu0
        %3499 = vdwg.mxu0
        %v3500 = vmul.f32 %v3495, %v3495
        %vm3501 = vcmask 1040384
        %v3502 = vsel %vm3501, %v3500, 0.0
        %3503 = vadd.xlane.f32.xlu0 %v3502
        %v3504 = vpop.xlane.xlu0 %3503
        %v3505 = vadd.f32 %v3504, 1e-12
        %v3506 = vrsqrt.pop %v3505
        %v3507 = vmul.f32 %v3495, %v3506
        %v3508 = vlaneseq
        %v3509 = vshrl.u32 %v3508, 7
        %v3510 = vsub.s32 0, %v3509
        %v3511 = vrot.slane %v3507, %v3510
        %3512 = vst [vmem:[%s376] sm:$0xff] %v3511
        %p3513 = scmp.lt.s32.totalorder %s22, 1
        %s3514 = scalar_select %p3513, %s22, 1
        %s3515 = smul.addr %s3514, 8
        %s3516 = scalar_lea.vmem %s10, %s3515
        // Predicated region
        $region65: #{embedding_net_l2.3} parent=59 // pred_check
          %p3517 = pneg %p255
        $region66: #{embedding_net_l2.3} parent=59 // pred_check_branch
          %3519 = sbr.rel (%p3517) target = $region68
        $region67: #{embedding_net_l2.3} parent=59 // pred_region
          _
        $region68: #{embedding_net_l2.3} parent=59 // pred_fallthru
          _
      $region60: #{embedding_net_l2.3} parent=5 // pred_fallthru
        _
      %p3520 = scmp.le.s32.totalorder 2, %s17
      // Predicated region
      $region69: #{embedding_net_l2.3} parent=5 // pred_check
        %p3521 = pneg %p3520
      $region70: #{embedding_net_l2.3} parent=5 // pred_check_branch
        %3523 = sbr.rel (%p3521) target = $region72
      $region71: #{embedding_net_l2.3} parent=5 // pred_region
        %s3524 = ssub.s32 %s17, 2
        // Predicated region
        $region73: #{embedding_net_l2.3} parent=71 // pred_check
          %p3525 = pneg %p261
        $region74: #{embedding_net_l2.3} parent=71 // pred_check_branch
          %3527 = sbr.rel (%p3525) target = $region76
        $region75: #{embedding_net_l2.3} parent=71 // pred_region
          %p3528 = scmp.lt.s32.totalorder %s23, 1
          %s3529 = scalar_select %p3528, %s23, 1
          %s3530 = smul.addr %s3529, 8
          %s3531 = scalar_lea.vmem %s10, %s3530
        $region76: #{embedding_net_l2.3} parent=71 // pred_fallthru
          _
      $region72: #{embedding_net_l2.3} parent=5 // pred_fallthru
        _
    $region6: #{embedding_net_l2.3} parent=1 // loop_footer
      %s21 = sadd.s32 1, %s17
    $region7: #{embedding_net_l2.3} parent=1 // loop_footer_branch
      %16 = sbr.rel target = $region3
    $region8: #{embedding_net_l2.3} parent=1 // loop_exit
      _
    %3532 = vsyncpa [#allocation3], 1
    %s3533 = scalar_lea.sflag [#allocation3], 1
    %3534 = vsyncpa %s3533, 1

</llo_original>
